<compile_context>
chip_gen: v7x
topology: tpu7x:2x2x1
jax: 0.10.0
libtpu: 0.0.40
codegen_flags: <defaults>
</compile_context>

<pallas_src>
import jax
import jax.numpy as jnp
from jax.experimental import pallas as pl
from jax.experimental.pallas import tpu as pltpu

HIDDEN = 512  # conv1/conv2 output channels per the module definition


def _disc_kernel(x_ref, w1t_ref, b1_ref, w2t_ref, b2_ref, w3t_ref, b3_ref, o_ref):
    # x_ref:   (B_blk, C, T)  f32   batch-packed spatial tile
    # w1t_ref: (512, C)       bf16  conv1 weight as (out, in)
    # b1_ref:  (512, 1)       f32
    # w2t_ref: (512, 512)     bf16  conv2 weight as (out, in)
    # b2_ref:  (512, 1)       f32
    # w3t_ref: (1, 512)       bf16  conv3 weight as (out, in)
    # b3_ref:  (1, 1)         f32
    # o_ref:   (B_blk, 1, T)  f32   lane-dense output tile
    w1t = w1t_ref[...]
    b1 = b1_ref[...]
    w2t = w2t_ref[...]
    b2 = b2_ref[...]
    w3t = w3t_ref[...]
    b3 = b3_ref[...]

    b_blk = x_ref.shape[0]
    for b in range(b_blk):  # static, unrolled; independent chains per image
        x = x_ref[b].astype(jnp.bfloat16)                          # (C, T)
        # layer 1: C -> 512 on the MXU (K=C padded is cheaper than VPU FMAs)
        h1 = jnp.dot(w1t, x, preferred_element_type=jnp.float32)
        h1 = jnp.maximum(h1 + b1, 0.0).astype(jnp.bfloat16)
        # layer 2: 512 -> 512 on the MXU
        h2 = jnp.dot(w2t, h1, preferred_element_type=jnp.float32)
        h2 = jnp.maximum(h2 + b2, 0.0).astype(jnp.bfloat16)
        # layer 3: 512 -> 1 as a skinny-M MXU dot (keeps epilogue off the VPU)
        h3 = jnp.dot(w3t, h2, preferred_element_type=jnp.float32)  # (1, T)
        o_ref[b] = (h3 + b3).astype(o_ref.dtype)


def _pick_batch_block(n, max_pack):
    """Largest divisor of n that is <= max_pack, preferring to keep >=2 grid steps."""
    divisors = [d for d in range(1, n + 1) if n % d == 0]
    keep_two = [d for d in divisors if d <= max_pack and n // d >= 2]
    if keep_two:
        return max(keep_two)
    fits = [d for d in divisors if d <= max_pack]
    return max(fits) if fits else 1


def local_discriminator(x_nchw, params, *, t_hw=2048):
    """x_nchw: (N, C, H, W) float32. Returns (N, 1, H, W) float32."""
    w1, b1, w2, b2, w3, b3 = params
    N, C, H, W = x_nchw.shape
    HW = H * W

    # (N, C, H, W) -> (N, C, H*W): contiguous reshape, no transpose / HBM pass.
    x3d = x_nchw.reshape(N, C, HW)

    # Spatial tile: multiple of 128 lanes. If the whole (padded) image fits in
    # the target tile, pack several batch images into one grid step instead.
    t_target = max(128, pl.cdiv(t_hw, 128) * 128)
    hw128 = pl.cdiv(HW, 128) * 128
    if hw128 >= t_target:
        t, b_blk = t_target, 1
    else:
        t = hw128
        b_blk = _pick_batch_block(N, max(1, t_target // t))

    HW_pad = pl.cdiv(HW, t) * t
    if HW_pad != HW:
        x3d = jnp.pad(x3d, ((0, 0), (0, 0), (0, HW_pad - HW)))

    # Weight layout: (out, in), bf16 MXU operands; biases stay f32.
    w1t = w1.T.astype(jnp.bfloat16)                   # (512, C)
    b1c = b1.reshape(HIDDEN, 1).astype(jnp.float32)
    w2t = w2.T.astype(jnp.bfloat16)                   # (512, 512)
    b2c = b2.reshape(HIDDEN, 1).astype(jnp.float32)
    w3t = w3.T.astype(jnp.bfloat16)                   # (1, 512)
    b3c = b3.reshape(1, 1).astype(jnp.float32)

    grid = (N // b_blk, HW_pad // t)

    m_eff = N * HW_pad
    cost = pl.CostEstimate(
        flops=2 * m_eff * (C * HIDDEN + HIDDEN * HIDDEN + HIDDEN),
        transcendentals=0,
        bytes_accessed=(x3d.size * 4 + N * HW_pad * 4
                        + (w1t.size + w2t.size + w3t.size) * 2
                        + (2 * HIDDEN + 1) * 4),
    )

    out3d = pl.pallas_call(
        _disc_kernel,
        out_shape=jax.ShapeDtypeStruct((N, 1, HW_pad), jnp.float32),
        grid_spec=pltpu.PrefetchScalarGridSpec(
            num_scalar_prefetch=0,
            grid=grid,
            in_specs=[
                pl.BlockSpec((b_blk, C, t), lambda n, i: (n, 0, i)),     # x tile
                pl.BlockSpec((HIDDEN, C), lambda n, i: (0, 0)),          # w1^T (resident)
                pl.BlockSpec((HIDDEN, 1), lambda n, i: (0, 0)),          # b1
                pl.BlockSpec((HIDDEN, HIDDEN), lambda n, i: (0, 0)),     # w2^T (resident)
                pl.BlockSpec((HIDDEN, 1), lambda n, i: (0, 0)),          # b2
                pl.BlockSpec((1, HIDDEN), lambda n, i: (0, 0)),          # w3^T
                pl.BlockSpec((1, 1), lambda n, i: (0, 0)),               # b3
            ],
            out_specs=pl.BlockSpec((b_blk, 1, t), lambda n, i: (n, 0, i)),
        ),
        compiler_params=pltpu.CompilerParams(
            dimension_semantics=("parallel", "parallel"),
            vmem_limit_bytes=48 * 1024 * 1024,
        ),
        cost_estimate=cost,
    )(x3d, w1t, b1c, w2t, b2c, w3t, b3c)

    # (N, 1, HW_pad) -> (N, 1, H, W): slice padding, free reshape.
    return out3d[:, :, :HW].reshape(N, 1, H, W)


def init_params(input_dim, key):
    """Deterministic parameter init matching nn.Conv2d shapes (1x1 kernels)."""
    k1, k2, k3, k4, k5, k6 = jax.random.split(key, 6)

    def uniform(k, shape, fan_in):
        bound = 1.0 / jnp.sqrt(fan_in)
        return jax.random.uniform(k, shape, jnp.float32, -bound, bound)

    # Stored as (in, out); the wrapper transposes to the kernel layout.
    w1 = uniform(k1, (input_dim, HIDDEN), input_dim)
    b1 = uniform(k2, (HIDDEN,), input_dim)
    w2 = uniform(k3, (HIDDEN, HIDDEN), HIDDEN)
    b2 = uniform(k4, (HIDDEN,), HIDDEN)
    w3 = uniform(k5, (HIDDEN, 1), HIDDEN)
    b3 = uniform(k6, (1,), HIDDEN)
    return (w1, b1, w2, b2, w3, b3)


def _reference(x_nchw, params):
    """Pure-JAX f32 reference of the PyTorch forward (1x1 convs as matmuls)."""
    w1, b1, w2, b2, w3, b3 = params
    N, C, H, W = x_nchw.shape
    x2d = jnp.transpose(x_nchw, (0, 2, 3, 1)).reshape(-1, C)
    h1 = jnp.maximum(x2d @ w1 + b1, 0.0)
    h2 = jnp.maximum(h1 @ w2 + b2, 0.0)
    out = h2 @ w3 + b3
    return jnp.transpose(out.reshape(N, H, W, 1), (0, 3, 1, 2))


if __name__ == "__main__":
    key = jax.random.PRNGKey(0)
    kx, kp = jax.random.split(key)

    N, C, H, W = 2, 4, 16, 16   # input_dim = 4
    x = jax.random.normal(kx, (N, C, H, W), jnp.float32)
    params = init_params(C, kp)

    out = jax.block_until_ready(local_discriminator(x, params))
    ref = jax.block_until_ready(_reference(x, params))

    assert out.shape == (N, 1, H, W), out.shape
    # All three matmuls use bf16 operands (f32 accumulation), so allow
    # bf16-level deviation vs. the all-f32 reference.
    max_err = float(jnp.max(jnp.abs(out - ref)))
    assert max_err < 5e-2, max_err
    print("KERNEL_OK")
</pallas_src>

<mosaic_0001>
module attributes {stable_mosaic.version = 11 : i64} {
  func.func @_disc_kernel(%arg0: i32, %arg1: i32, %arg2: memref<1x4x256xf32, #tpu.memory_space<vmem>>, %arg3: memref<512x4xbf16, #tpu.memory_space<vmem>>, %arg4: memref<512x1xf32, #tpu.memory_space<vmem>>, %arg5: memref<512x512xbf16, #tpu.memory_space<vmem>>, %arg6: memref<512x1xf32, #tpu.memory_space<vmem>>, %arg7: memref<1x512xbf16, #tpu.memory_space<vmem>>, %arg8: memref<1x1xf32, #tpu.memory_space<vmem>>, %arg9: memref<1x1x256xf32, #tpu.memory_space<vmem>>) attributes {dimension_semantics = [#tpu.dimension_semantics<parallel>, #tpu.dimension_semantics<parallel>], iteration_bounds = array<i64: 2, 1>, scalar_prefetch = 0 : i64, scratch_operands = 0 : i64, tpu.core_type = #tpu.core_type<tc>, window_params = [{transform_indices = @transform_0, window_bounds = array<i64: 1, 4, 256>}, {pipeline_mode = #tpu.pipeline_mode<synchronous>, transform_indices = @transform_1, window_bounds = array<i64: 512, 4>}, {pipeline_mode = #tpu.pipeline_mode<synchronous>, transform_indices = @transform_2, window_bounds = array<i64: 512, 1>}, {pipeline_mode = #tpu.pipeline_mode<synchronous>, transform_indices = @transform_3, window_bounds = array<i64: 512, 512>}, {pipeline_mode = #tpu.pipeline_mode<synchronous>, transform_indices = @transform_4, window_bounds = array<i64: 512, 1>}, {pipeline_mode = #tpu.pipeline_mode<synchronous>, transform_indices = @transform_5, window_bounds = array<i64: 1, 512>}, {pipeline_mode = #tpu.pipeline_mode<synchronous>, transform_indices = @transform_6, window_bounds = array<i64: 1, 1>}, {transform_indices = @transform_7, window_bounds = array<i64: 1, 1, 256>}]} {
    %c0 = arith.constant 0 : index
    %c0_0 = arith.constant 0 : index
    %0 = vector.load %arg3[%c0, %c0_0] : memref<512x4xbf16, #tpu.memory_space<vmem>>, vector<512x4xbf16>
    %c0_1 = arith.constant 0 : index
    %c0_2 = arith.constant 0 : index
    %1 = vector.load %arg4[%c0_1, %c0_2] : memref<512x1xf32, #tpu.memory_space<vmem>>, vector<512x1xf32>
    %c0_3 = arith.constant 0 : index
    %c0_4 = arith.constant 0 : index
    %2 = vector.load %arg5[%c0_3, %c0_4] : memref<512x512xbf16, #tpu.memory_space<vmem>>, vector<512x512xbf16>
    %c0_5 = arith.constant 0 : index
    %c0_6 = arith.constant 0 : index
    %3 = vector.load %arg6[%c0_5, %c0_6] : memref<512x1xf32, #tpu.memory_space<vmem>>, vector<512x1xf32>
    %c0_7 = arith.constant 0 : index
    %c0_8 = arith.constant 0 : index
    %4 = vector.load %arg7[%c0_7, %c0_8] : memref<1x512xbf16, #tpu.memory_space<vmem>>, vector<1x512xbf16>
    %c0_9 = arith.constant 0 : index
    %c0_10 = arith.constant 0 : index
    %5 = vector.load %arg8[%c0_9, %c0_10] : memref<1x1xf32, #tpu.memory_space<vmem>>, vector<1x1xf32>
    %c0_11 = arith.constant 0 : index
    %c0_12 = arith.constant 0 : index
    %c0_13 = arith.constant 0 : index
    %6 = vector.load %arg2[%c0_11, %c0_12, %c0_13] : memref<1x4x256xf32, #tpu.memory_space<vmem>>, vector<1x4x256xf32>
    %7 = vector.shape_cast %6 : vector<1x4x256xf32> to vector<4x256xf32>
    %8 = arith.truncf %7 : vector<4x256xf32> to vector<4x256xbf16>
    %cst = arith.constant dense<0.000000e+00> : vector<512x256xf32>
    %9 = tpu.matmul %0, %8, %cst {dimension_numbers = #tpu.dot_dimension_numbers<[1], [0], [0], [1], [0, 0, 1, 1], [], []>} : vector<512x4xbf16>, vector<4x256xbf16>, vector<512x256xf32> -> vector<512x256xf32>
    %10 = vector.broadcast %1 : vector<512x1xf32> to vector<512x256xf32>
    %11 = arith.addf %9, %10 : vector<512x256xf32>
    %cst_14 = arith.constant 0.000000e+00 : f32
    %12 = vector.broadcast %cst_14 : f32 to vector<512x256xf32>
    %13 = arith.maximumf %11, %12 : vector<512x256xf32>
    %14 = arith.truncf %13 : vector<512x256xf32> to vector<512x256xbf16>
    %cst_15 = arith.constant dense<0.000000e+00> : vector<512x256xf32>
    %15 = tpu.matmul %2, %14, %cst_15 {dimension_numbers = #tpu.dot_dimension_numbers<[1], [0], [0], [1], [0, 0, 1, 1], [], []>} : vector<512x512xbf16>, vector<512x256xbf16>, vector<512x256xf32> -> vector<512x256xf32>
    %16 = vector.broadcast %3 : vector<512x1xf32> to vector<512x256xf32>
    %17 = arith.addf %15, %16 : vector<512x256xf32>
    %cst_16 = arith.constant 0.000000e+00 : f32
    %18 = vector.broadcast %cst_16 : f32 to vector<512x256xf32>
    %19 = arith.maximumf %17, %18 : vector<512x256xf32>
    %20 = arith.truncf %19 : vector<512x256xf32> to vector<512x256xbf16>
    %cst_17 = arith.constant dense<0.000000e+00> : vector<1x256xf32>
    %21 = tpu.matmul %4, %20, %cst_17 {dimension_numbers = #tpu.dot_dimension_numbers<[1], [0], [0], [1], [0, 0, 1, 1], [], []>} : vector<1x512xbf16>, vector<512x256xbf16>, vector<1x256xf32> -> vector<1x256xf32>
    %22 = vector.broadcast %5 : vector<1x1xf32> to vector<1x256xf32>
    %23 = arith.addf %21, %22 : vector<1x256xf32>
    %c0_18 = arith.constant 0 : index
    %c0_19 = arith.constant 0 : index
    %c0_20 = arith.constant 0 : index
    %24 = vector.load %arg9[%c0_18, %c0_19, %c0_20] : memref<1x1x256xf32, #tpu.memory_space<vmem>>, vector<1x1x256xf32>
    %25 = vector.shape_cast %24 : vector<1x1x256xf32> to vector<1x256xf32>
    %26 = vector.shape_cast %23 : vector<1x256xf32> to vector<1x1x256xf32>
    tpu.vector_store %arg9[%c0_18, %c0_19, %c0_20], %26 {strides = array<i32>} : memref<1x1x256xf32, #tpu.memory_space<vmem>>, vector<1x1x256xf32>,
    return
  }
  func.func @transform_0(%arg0: i32, %arg1: i32) -> (i32, i32, i32) {
    %c0_i32 = arith.constant 0 : i32
    %c0_i32_0 = arith.constant 0 : i32
    return %arg0, %c0_i32, %arg1 : i32, i32, i32
  }
  func.func @transform_1(%arg0: i32, %arg1: i32) -> (i32, i32) {
    %c0_i32 = arith.constant 0 : i32
    %c0_i32_0 = arith.constant 0 : i32
    %c0_i32_1 = arith.constant 0 : i32
    return %c0_i32, %c0_i32_0 : i32, i32
  }
  func.func @transform_2(%arg0: i32, %arg1: i32) -> (i32, i32) {
    %c0_i32 = arith.constant 0 : i32
    %c0_i32_0 = arith.constant 0 : i32
    %c0_i32_1 = arith.constant 0 : i32
    return %c0_i32, %c0_i32_0 : i32, i32
  }
  func.func @transform_3(%arg0: i32, %arg1: i32) -> (i32, i32) {
    %c0_i32 = arith.constant 0 : i32
    %c0_i32_0 = arith.constant 0 : i32
    %c0_i32_1 = arith.constant 0 : i32
    return %c0_i32, %c0_i32_0 : i32, i32
  }
  func.func @transform_4(%arg0: i32, %arg1: i32) -> (i32, i32) {
    %c0_i32 = arith.constant 0 : i32
    %c0_i32_0 = arith.constant 0 : i32
    %c0_i32_1 = arith.constant 0 : i32
    return %c0_i32, %c0_i32_0 : i32, i32
  }
  func.func @transform_5(%arg0: i32, %arg1: i32) -> (i32, i32) {
    %c0_i32 = arith.constant 0 : i32
    %c0_i32_0 = arith.constant 0 : i32
    %c0_i32_1 = arith.constant 0 : i32
    return %c0_i32, %c0_i32_0 : i32, i32
  }
  func.func @transform_6(%arg0: i32, %arg1: i32) -> (i32, i32) {
    %c0_i32 = arith.constant 0 : i32
    %c0_i32_0 = arith.constant 0 : i32
    %c0_i32_1 = arith.constant 0 : i32
    return %c0_i32, %c0_i32_0 : i32, i32
  }
  func.func @transform_7(%arg0: i32, %arg1: i32) -> (i32, i32, i32) {
    %c0_i32 = arith.constant 0 : i32
    %c0_i32_0 = arith.constant 0 : i32
    return %arg0, %c0_i32, %arg1 : i32, i32, i32
  }
}

</mosaic_0001>

<llo_original>
// kernel: tpu_custom_call.1
$region0: #{tpu_custom_call.1}
  #allocation0 [shape = 'u32[]', space=smem, size = 0x4, offset = 0x4, fixed_abs, tag = 'smem constant byte address 0x4 - core index']
  #allocation1 [shape = 'u32[144,128]{1,0:T(1,128)}', space=vmem, size = 0x12000, scoped, tag = 'internal scratch']
  #allocation2 [shape = 'f32[1,1]{1,0:T(1,128)S(1)}', space=vmem, size = 0x200, scoped, tag = 'scoped memory for tpu_custom_call.1']
  %s0 = inlined_call_operand.vmem [shape: f32[2,4,256], index: 0, kind: input, shape index: {}]
  %s1 = inlined_call_operand.vmem [shape: bf16[512,4], index: 1, kind: input, shape index: {}]
  %s2 = inlined_call_operand.vmem [shape: f32[512,1], index: 2, kind: input, shape index: {}]
  %s3 = inlined_call_operand.vmem [shape: bf16[512,512], index: 3, kind: input, shape index: {}]
  %s4 = inlined_call_operand.vmem [shape: f32[512,1], index: 4, kind: input, shape index: {}]
  %s5 = inlined_call_operand.vmem [shape: bf16[1,512], index: 5, kind: input, shape index: {}]
  %s6 = inlined_call_operand.<no memory space> [shape: f32[1,1], index: 6, kind: input, shape index: {}]
  %s7 = inlined_call_operand.hbm [shape: f32[2,1,256], index: 7, kind: output, shape index: {}]
  %s8 = sld [smem:[#allocation0]]
  $region61: #{tpu_custom_call.1} parent=0
    _
  %s10 = ssub.s32 1, %s8
  %s11 = scalar_select 0, %s10, %s8
  %v12 = vstv %s6
  %13 = vst [vmem:[#allocation2] sm:$0x1] %v12
  $region1: #{tpu_custom_call.1} parent=0
    #allocation3 [shape = 'u8[2048]{0}', space=vmem, size = 0x800, scoped, tag = 'output window, operand 0']
    #allocation4 [shape = 's32[2]{0}', space=sflag, size = 0x8, scoped, tag = 'scoped memory for tpu_custom_call.1']
    %14 = vsyncpa [#allocation4], 0
    %s15 = scalar_lea.sflag [#allocation4], 1
    %16 = vsyncpa %s15, 0
    loop: start=0, step=1, limit=4
    $region2: #{tpu_custom_call.1} parent=1 // loop_pre_header
      _
    $region3: #{tpu_custom_call.1} parent=1 // loop_header
      %s18 = sphi 0, %s22
      %p19 = scmp.ge.s32.totalorder %s18, 4
      %s25 = sphi 0, %s37
      %s26 = sphi 0, %s33
      %s27 = sphi 0, %s25
      %s28 = sphi 0, %s26
      %s29 = sphi 0, %s27
      %s30 = sphi 0, %s28
      %s42 = sphi 0, %s44
      %s45 = sphi 0, %s42
      %s46 = sphi 0, %s45
      %s62 = sphi 0, %s46
      %s66 = sphi 0, %s66
      %s68 = sphi 0, %s66
      %s69 = sphi 0, %s68
      %s83 = sphi 0, %s69
      %s87 = sphi 0, %s87
      %s89 = sphi 0, %s87
      %s90 = sphi 0, %s89
      %s104 = sphi 0, %s90
      %s108 = sphi 0, %s108
      %s110 = sphi 0, %s108
      %s111 = sphi 0, %s110
      %s125 = sphi 0, %s111
      %s129 = sphi 0, %s129
      %s131 = sphi 0, %s129
      %s132 = sphi 0, %s131
      %s146 = sphi 0, %s132
      %s150 = sphi 0, %s150
      %s152 = sphi 0, %s150
      %s153 = sphi 0, %s152
      %s167 = sphi 0, %s153
      %s171 = sphi 0, %s171
      %s173 = sphi 0, %s171
      %s174 = sphi 0, %s173
      %s188 = sphi 0, %s174
      %s196 = sphi 0, %s198
      %s199 = sphi 0, %s196
      %s200 = sphi 0, %s199
      %s216 = sphi 0, %s200
    $region4: #{tpu_custom_call.1} parent=1 // loop_header_branch
      %21 = sbr.rel (%p19) target = $region8
    $region5: #{tpu_custom_call.1} parent=1 // loop_body
      %s23 = ssub.s32 %s18, 1
      %s24 = ssub.s32 %s18, 2
      %s31 = sadd.s32 1, %s26
      %p32 = scmp.ge.s32.totalorder %s31, 1
      %s33 = scalar_select %p32, 0, %s31
      %s34 = sadd.s32 1, %s25
      %s35 = scalar_select %p32, %s34, %s25
      %p36 = scmp.ge.s32.totalorder %s35, 2
      %s37 = scalar_select %p36, 0, %s35
      %s38 = ssub.s32 %s25, %s37
      %s39 = ssub.s32 %s26, %s33
      %s40 = sor.u32 %s38, %s39
      %p41 = scmp.eq.s32.totalorder %s40, 0
      %s43 = sadd.s32 %s42, 1
      %s44 = scalar_select %p41, %s42, %s43
      %p47 = pneg %p41
      %p48 = scmp.eq.s32.totalorder %s18, 1
      %p49 = por %p47, %p48
      %p50 = scmp.ne.s32.totalorder %s42, %s45
      %p51 = scmp.eq.s32.totalorder %s18, 0
      %p52 = por %p50, %p51
      %p53 = scmp.ne.s32.totalorder %s42, %s45
      %p54 = scmp.eq.s32.totalorder %s23, 1
      %p55 = por %p53, %p54
      %p56 = scmp.ne.s32.totalorder %s45, %s46
      %p57 = scmp.eq.s32.totalorder %s23, 0
      %p58 = por %p56, %p57
      %p59 = scmp.ne.s32.totalorder %s45, %s46
      %p60 = scmp.eq.s32.totalorder %s24, 1
      %p61 = por %p59, %p60
      %p63 = scmp.ne.s32.totalorder %s46, %s62
      %p64 = scmp.eq.s32.totalorder %s24, 0
      %p65 = por %p63, %p64
      %s67 = sadd.s32 %s66, 1
      %p70 = scmp.eq.s32.totalorder %s18, 1
      %p71 = scmp.ne.s32.totalorder %s66, %s68
      %p72 = scmp.eq.s32.totalorder %s18, 0
      %p73 = por %p71, %p72
      %p74 = scmp.ne.s32.totalorder %s66, %s68
      %p75 = scmp.eq.s32.totalorder %s23, 1
      %p76 = por %p74, %p75
      %p77 = scmp.ne.s32.totalorder %s68, %s69
      %p78 = scmp.eq.s32.totalorder %s23, 0
      %p79 = por %p77, %p78
      %p80 = scmp.ne.s32.totalorder %s68, %s69
      %p81 = scmp.eq.s32.totalorder %s24, 1
      %p82 = por %p80, %p81
      %p84 = scmp.ne.s32.totalorder %s69, %s83
      %p85 = scmp.eq.s32.totalorder %s24, 0
      %p86 = por %p84, %p85
      %s88 = sadd.s32 %s87, 1
      %p91 = scmp.eq.s32.totalorder %s18, 1
      %p92 = scmp.ne.s32.totalorder %s87, %s89
      %p93 = scmp.eq.s32.totalorder %s18, 0
      %p94 = por %p92, %p93
      %p95 = scmp.ne.s32.totalorder %s87, %s89
      %p96 = scmp.eq.s32.totalorder %s23, 1
      %p97 = por %p95, %p96
      %p98 = scmp.ne.s32.totalorder %s89, %s90
      %p99 = scmp.eq.s32.totalorder %s23, 0
      %p100 = por %p98, %p99
      %p101 = scmp.ne.s32.totalorder %s89, %s90
      %p102 = scmp.eq.s32.totalorder %s24, 1
      %p103 = por %p101, %p102
      %p105 = scmp.ne.s32.totalorder %s90, %s104
      %p106 = scmp.eq.s32.totalorder %s24, 0
      %p107 = por %p105, %p106
      %s109 = sadd.s32 %s108, 1
      %p112 = scmp.eq.s32.totalorder %s18, 1
      %p113 = scmp.ne.s32.totalorder %s108, %s110
      %p114 = scmp.eq.s32.totalorder %s18, 0
      %p115 = por %p113, %p114
      %p116 = scmp.ne.s32.totalorder %s108, %s110
      %p117 = scmp.eq.s32.totalorder %s23, 1
      %p118 = por %p116, %p117
      %p119 = scmp.ne.s32.totalorder %s110, %s111
      %p120 = scmp.eq.s32.totalorder %s23, 0
      %p121 = por %p119, %p120
      %p122 = scmp.ne.s32.totalorder %s110, %s111
      %p123 = scmp.eq.s32.totalorder %s24, 1
      %p124 = por %p122, %p123
      %p126 = scmp.ne.s32.totalorder %s111, %s125
      %p127 = scmp.eq.s32.totalorder %s24, 0
      %p128 = por %p126, %p127
      %s130 = sadd.s32 %s129, 1
      %p133 = scmp.eq.s32.totalorder %s18, 1
      %p134 = scmp.ne.s32.totalorder %s129, %s131
      %p135 = scmp.eq.s32.totalorder %s18, 0
      %p136 = por %p134, %p135
      %p137 = scmp.ne.s32.totalorder %s129, %s131
      %p138 = scmp.eq.s32.totalorder %s23, 1
      %p139 = por %p137, %p138
      %p140 = scmp.ne.s32.totalorder %s131, %s132
      %p141 = scmp.eq.s32.totalorder %s23, 0
      %p142 = por %p140, %p141
      %p143 = scmp.ne.s32.totalorder %s131, %s132
      %p144 = scmp.eq.s32.totalorder %s24, 1
      %p145 = por %p143, %p144
      %p147 = scmp.ne.s32.totalorder %s132, %s146
      %p148 = scmp.eq.s32.totalorder %s24, 0
      %p149 = por %p147, %p148
      %s151 = sadd.s32 %s150, 1
      %p154 = scmp.eq.s32.totalorder %s18, 1
      %p155 = scmp.ne.s32.totalorder %s150, %s152
      %p156 = scmp.eq.s32.totalorder %s18, 0
      %p157 = por %p155, %p156
      %p158 = scmp.ne.s32.totalorder %s150, %s152
      %p159 = scmp.eq.s32.totalorder %s23, 1
      %p160 = por %p158, %p159
      %p161 = scmp.ne.s32.totalorder %s152, %s153
      %p162 = scmp.eq.s32.totalorder %s23, 0
      %p163 = por %p161, %p162
      %p164 = scmp.ne.s32.totalorder %s152, %s153
      %p165 = scmp.eq.s32.totalorder %s24, 1
      %p166 = por %p164, %p165
      %p168 = scmp.ne.s32.totalorder %s153, %s167
      %p169 = scmp.eq.s32.totalorder %s24, 0
      %p170 = por %p168, %p169
      %s172 = sadd.s32 %s171, 1
      %p175 = scmp.eq.s32.totalorder %s18, 1
      %p176 = scmp.ne.s32.totalorder %s171, %s173
      %p177 = scmp.eq.s32.totalorder %s18, 0
      %p178 = por %p176, %p177
      %p179 = scmp.ne.s32.totalorder %s171, %s173
      %p180 = scmp.eq.s32.totalorder %s23, 1
      %p181 = por %p179, %p180
      %p182 = scmp.ne.s32.totalorder %s173, %s174
      %p183 = scmp.eq.s32.totalorder %s23, 0
      %p184 = por %p182, %p183
      %p185 = scmp.ne.s32.totalorder %s173, %s174
      %p186 = scmp.eq.s32.totalorder %s24, 1
      %p187 = por %p185, %p186
      %p189 = scmp.ne.s32.totalorder %s174, %s188
      %p190 = scmp.eq.s32.totalorder %s24, 0
      %p191 = por %p189, %p190
      %s192 = ssub.s32 %s25, %s37
      %s193 = ssub.s32 %s26, %s33
      %s194 = sor.u32 %s192, %s193
      %p195 = scmp.eq.s32.totalorder %s194, 0
      %s197 = sadd.s32 %s196, 1
      %s198 = scalar_select %p195, %s196, %s197
      %p201 = pneg %p195
      %p202 = scmp.eq.s32.totalorder %s18, 1
      %p203 = por %p201, %p202
      %p204 = scmp.ne.s32.totalorder %s196, %s199
      %p205 = scmp.eq.s32.totalorder %s18, 0
      %p206 = por %p204, %p205
      %p207 = scmp.ne.s32.totalorder %s196, %s199
      %p208 = scmp.eq.s32.totalorder %s23, 1
      %p209 = por %p207, %p208
      %p210 = scmp.ne.s32.totalorder %s199, %s200
      %p211 = scmp.eq.s32.totalorder %s23, 0
      %p212 = por %p210, %p211
      %p213 = scmp.ne.s32.totalorder %s199, %s200
      %p214 = scmp.eq.s32.totalorder %s24, 1
      %p215 = por %p213, %p214
      %p217 = scmp.ne.s32.totalorder %s200, %s216
      %p218 = scmp.eq.s32.totalorder %s24, 0
      %p219 = por %p217, %p218
      %p220 = scmp.le.s32.totalorder 1, %s18
      %p221 = scmp.lt.s32.totalorder %s18, 3
      %p222 = pnand %p220, %p221
      %p223 = pneg %p222
      // Predicated region
      $region9: #{tpu_custom_call.1} parent=5 // pred_check
        _
      $region10: #{tpu_custom_call.1} parent=5 // pred_check_branch
        %225 = sbr.rel (%p222) target = $region12
      $region11: #{tpu_custom_call.1} parent=5 // pred_region
        %s226 = ssub.s32 %s18, 1
        // Predicated region
        $region13: #{tpu_custom_call.1} parent=11 // pred_check
          %p227 = pneg %p79
        $region14: #{tpu_custom_call.1} parent=11 // pred_check_branch
          %229 = sbr.rel (%p227) target = $region16
        $region15: #{tpu_custom_call.1} parent=11 // pred_region
          _
        $region16: #{tpu_custom_call.1} parent=11 // pred_fallthru
          _
        // Predicated region
        $region17: #{tpu_custom_call.1} parent=11 // pred_check
          %p230 = pneg %p100
        $region18: #{tpu_custom_call.1} parent=11 // pred_check_branch
          %232 = sbr.rel (%p230) target = $region20
        $region19: #{tpu_custom_call.1} parent=11 // pred_region
          _
        $region20: #{tpu_custom_call.1} parent=11 // pred_fallthru
          _
        // Predicated region
        $region21: #{tpu_custom_call.1} parent=11 // pred_check
          %p233 = pneg %p121
        $region22: #{tpu_custom_call.1} parent=11 // pred_check_branch
          %235 = sbr.rel (%p233) target = $region24
        $region23: #{tpu_custom_call.1} parent=11 // pred_region
          _
        $region24: #{tpu_custom_call.1} parent=11 // pred_fallthru
          _
        // Predicated region
        $region25: #{tpu_custom_call.1} parent=11 // pred_check
          %p236 = pneg %p142
        $region26: #{tpu_custom_call.1} parent=11 // pred_check_branch
          %238 = sbr.rel (%p236) target = $region28
        $region27: #{tpu_custom_call.1} parent=11 // pred_region
          _
        $region28: #{tpu_custom_call.1} parent=11 // pred_fallthru
          _
        // Predicated region
        $region29: #{tpu_custom_call.1} parent=11 // pred_check
          %p239 = pneg %p163
        $region30: #{tpu_custom_call.1} parent=11 // pred_check_branch
          %241 = sbr.rel (%p239) target = $region32
        $region31: #{tpu_custom_call.1} parent=11 // pred_region
          _
        $region32: #{tpu_custom_call.1} parent=11 // pred_fallthru
          _
        // Predicated region
        $region33: #{tpu_custom_call.1} parent=11 // pred_check
          %p242 = pneg %p184
        $region34: #{tpu_custom_call.1} parent=11 // pred_check_branch
          %244 = sbr.rel (%p242) target = $region36
        $region35: #{tpu_custom_call.1} parent=11 // pred_region
          _
        $region36: #{tpu_custom_call.1} parent=11 // pred_fallthru
          _
      $region12: #{tpu_custom_call.1} parent=5 // pred_fallthru
        _
      %p245 = scmp.lt.s32.totalorder %s18, 2
      // Predicated region
      $region37: #{tpu_custom_call.1} parent=5 // pred_check
        %p246 = pneg %p245
      $region38: #{tpu_custom_call.1} parent=5 // pred_check_branch
        %248 = sbr.rel (%p246) target = $region40
      $region39: #{tpu_custom_call.1} parent=5 // pred_region
        // Predicated region
        $region41: #{tpu_custom_call.1} parent=39 // pred_check
          %p249 = pneg %p52
        $region42: #{tpu_custom_call.1} parent=39 // pred_check_branch
          %251 = sbr.rel (%p249) target = $region44
        $region43: #{tpu_custom_call.1} parent=39 // pred_region
          %s252 = smul.u32 2, %s26
          %p253 = scmp.lt.s32.totalorder %s25, 1
          %s254 = scalar_select %p253, %s25, 1
          %p255 = scmp.lt.s32.totalorder %s252, 1
          %s256 = scalar_select %p255, %s252, 1
          %s257 = smul.addr %s254, 2
          %s258 = sadd.s32 %s256, %s257
          %s259 = smul.addr %s258, 4
          %s260 = scalar_lea.vmem %s0, %s259
          %s261 = smul.u32 2, %s26
        $region44: #{tpu_custom_call.1} parent=39 // pred_fallthru
          _
      $region40: #{tpu_custom_call.1} parent=5 // pred_fallthru
        _
      %p262 = scmp.le.s32.totalorder 1, %s18
      %p263 = scmp.lt.s32.totalorder %s18, 3
      %p264 = pnand %p262, %p263
      %p265 = pneg %p264
      // Predicated region
      $region45: #{tpu_custom_call.1} parent=5 // pred_check
        _
      $region46: #{tpu_custom_call.1} parent=5 // pred_check_branch
        %267 = sbr.rel (%p264) target = $region48
      $region47: #{tpu_custom_call.1} parent=5 // pred_region
        %s268 = ssub.s32 %s18, 1
        %s269 = smul.u32 2, %s28
        %p270 = scmp.lt.s32.totalorder %s27, 1
        %s271 = scalar_select %p270, %s27, 1
        %p272 = scmp.lt.s32.totalorder %s269, 1
        %s273 = scalar_select %p272, %s269, 1
        %s274 = smul.addr %s271, 2
        %s275 = sadd.s32 %s273, %s274
        %s276 = smul.addr %s275, 4
        %s277 = scalar_lea.vmem %s0, %s276
        %p278 = pneg %p58
        %p279 = pneg %p55
        %p280 = pneg %p79
        %p281 = pneg %p76
        %p282 = pneg %p100
        %p283 = pneg %p97
        %p284 = pneg %p121
        %p285 = pneg %p118
        %p286 = pneg %p142
        %p287 = pneg %p139
        %p288 = pneg %p163
        %p289 = pneg %p160
        %p290 = pneg %p184
        %p291 = pneg %p181
        %p292 = pneg %p212
        %p293 = pneg %p209
        %s294 = sand.u32 %s199, 1
        %s295 = scalar_lea.sflag [#allocation4], %s294
        %s296 = sand.u32 %s199, 1
        %s297 = smul.addr %s296, 2
        %s298 = scalar_lea.vmem [#allocation3], %s297
        %s299 = smul.u32 2, %s28
        %p300 = scmp.lt.s32.totalorder %s27, 1
        %s301 = scalar_select %p300, %s27, 1
        %p302 = scmp.lt.s32.totalorder %s299, 1
        %s303 = scalar_select %p302, %s299, 1
        %s304 = smul.addr %s301, 2
        %s305 = sadd.s32 %s303, %s304
        %s306 = smul.addr %s305, 4
        %s307 = scalar_lea.vmem %s0, %s306
        %s308 = smul.u32 2, %s28
        %s309 = smul.u32 2, %s28
        %v311 = vld [vmem:[%s1] sm:$0xf]
        %v312 = vld [vmem:[%s1 + $0x4] sm:$0xf]
        %v313 = vld [vmem:[%s1 + $0x8] sm:$0xf]
        %v314 = vld [vmem:[%s1 + $0xc] sm:$0xf]
        %v315 = vld [vmem:[%s1 + $0x10] sm:$0xf]
        %v316 = vld [vmem:[%s1 + $0x14] sm:$0xf]
        %v317 = vld [vmem:[%s1 + $0x18] sm:$0xf]
        %v318 = vld [vmem:[%s1 + $0x1c] sm:$0xf]
        %v319 = vld [vmem:[%s1 + $0x20] sm:$0xf]
        %v320 = vld [vmem:[%s1 + $0x24] sm:$0xf]
        %v321 = vld [vmem:[%s1 + $0x28] sm:$0xf]
        %v322 = vld [vmem:[%s1 + $0x2c] sm:$0xf]
        %v323 = vld [vmem:[%s1 + $0x30] sm:$0xf]
        %v324 = vld [vmem:[%s1 + $0x34] sm:$0xf]
        %v325 = vld [vmem:[%s1 + $0x38] sm:$0xf]
        %v326 = vld [vmem:[%s1 + $0x3c] sm:$0xf]
        %v327 = vld [vmem:[%s1 + $0x40] sm:$0xf]
        %v328 = vld [vmem:[%s1 + $0x44] sm:$0xf]
        %v329 = vld [vmem:[%s1 + $0x48] sm:$0xf]
        %v330 = vld [vmem:[%s1 + $0x4c] sm:$0xf]
        %v331 = vld [vmem:[%s1 + $0x50] sm:$0xf]
        %v332 = vld [vmem:[%s1 + $0x54] sm:$0xf]
        %v333 = vld [vmem:[%s1 + $0x58] sm:$0xf]
        %v334 = vld [vmem:[%s1 + $0x5c] sm:$0xf]
        %v335 = vld [vmem:[%s1 + $0x60] sm:$0xf]
        %v336 = vld [vmem:[%s1 + $0x64] sm:$0xf]
        %v337 = vld [vmem:[%s1 + $0x68] sm:$0xf]
        %v338 = vld [vmem:[%s1 + $0x6c] sm:$0xf]
        %v339 = vld [vmem:[%s1 + $0x70] sm:$0xf]
        %v340 = vld [vmem:[%s1 + $0x74] sm:$0xf]
        %v341 = vld [vmem:[%s1 + $0x78] sm:$0xf]
        %v342 = vld [vmem:[%s1 + $0x7c] sm:$0xf]
        %v343 = vld [vmem:[%s1 + $0x80] sm:$0xf]
        %v344 = vld [vmem:[%s1 + $0x84] sm:$0xf]
        %v345 = vld [vmem:[%s1 + $0x88] sm:$0xf]
        %v346 = vld [vmem:[%s1 + $0x8c] sm:$0xf]
        %v347 = vld [vmem:[%s1 + $0x90] sm:$0xf]
        %v348 = vld [vmem:[%s1 + $0x94] sm:$0xf]
        %v349 = vld [vmem:[%s1 + $0x98] sm:$0xf]
        %v350 = vld [vmem:[%s1 + $0x9c] sm:$0xf]
        %v351 = vld [vmem:[%s1 + $0xa0] sm:$0xf]
        %v352 = vld [vmem:[%s1 + $0xa4] sm:$0xf]
        %v353 = vld [vmem:[%s1 + $0xa8] sm:$0xf]
        %v354 = vld [vmem:[%s1 + $0xac] sm:$0xf]
        %v355 = vld [vmem:[%s1 + $0xb0] sm:$0xf]
        %v356 = vld [vmem:[%s1 + $0xb4] sm:$0xf]
        %v357 = vld [vmem:[%s1 + $0xb8] sm:$0xf]
        %v358 = vld [vmem:[%s1 + $0xbc] sm:$0xf]
        %v359 = vld [vmem:[%s1 + $0xc0] sm:$0xf]
        %v360 = vld [vmem:[%s1 + $0xc4] sm:$0xf]
        %v361 = vld [vmem:[%s1 + $0xc8] sm:$0xf]
        %v362 = vld [vmem:[%s1 + $0xcc] sm:$0xf]
        %v363 = vld [vmem:[%s1 + $0xd0] sm:$0xf]
        %v364 = vld [vmem:[%s1 + $0xd4] sm:$0xf]
        %v365 = vld [vmem:[%s1 + $0xd8] sm:$0xf]
        %v366 = vld [vmem:[%s1 + $0xdc] sm:$0xf]
        %v367 = vld [vmem:[%s1 + $0xe0] sm:$0xf]
        %v368 = vld [vmem:[%s1 + $0xe4] sm:$0xf]
        %v369 = vld [vmem:[%s1 + $0xe8] sm:$0xf]
        %v370 = vld [vmem:[%s1 + $0xec] sm:$0xf]
        %v371 = vld [vmem:[%s1 + $0xf0] sm:$0xf]
        %v372 = vld [vmem:[%s1 + $0xf4] sm:$0xf]
        %v373 = vld [vmem:[%s1 + $0xf8] sm:$0xf]
        %v374 = vld [vmem:[%s1 + $0xfc] sm:$0xf]
        %v375 = vld [vmem:[%s2] sm:$0xff]
        %v376 = vld [vmem:[%s2 + $0x8] sm:$0xff]
        %v377 = vld [vmem:[%s2 + $0x10] sm:$0xff]
        %v378 = vld [vmem:[%s2 + $0x18] sm:$0xff]
        %v379 = vld [vmem:[%s2 + $0x20] sm:$0xff]
        %v380 = vld [vmem:[%s2 + $0x28] sm:$0xff]
        %v381 = vld [vmem:[%s2 + $0x30] sm:$0xff]
        %v382 = vld [vmem:[%s2 + $0x38] sm:$0xff]
        %v383 = vld [vmem:[%s2 + $0x40] sm:$0xff]
        %v384 = vld [vmem:[%s2 + $0x48] sm:$0xff]
        %v385 = vld [vmem:[%s2 + $0x50] sm:$0xff]
        %v386 = vld [vmem:[%s2 + $0x58] sm:$0xff]
        %v387 = vld [vmem:[%s2 + $0x60] sm:$0xff]
        %v388 = vld [vmem:[%s2 + $0x68] sm:$0xff]
        %v389 = vld [vmem:[%s2 + $0x70] sm:$0xff]
        %v390 = vld [vmem:[%s2 + $0x78] sm:$0xff]
        %v391 = vld [vmem:[%s2 + $0x80] sm:$0xff]
        %v392 = vld [vmem:[%s2 + $0x88] sm:$0xff]
        %v393 = vld [vmem:[%s2 + $0x90] sm:$0xff]
        %v394 = vld [vmem:[%s2 + $0x98] sm:$0xff]
        %v395 = vld [vmem:[%s2 + $0xa0] sm:$0xff]
        %v396 = vld [vmem:[%s2 + $0xa8] sm:$0xff]
        %v397 = vld [vmem:[%s2 + $0xb0] sm:$0xff]
        %v398 = vld [vmem:[%s2 + $0xb8] sm:$0xff]
        %v399 = vld [vmem:[%s2 + $0xc0] sm:$0xff]
        %v400 = vld [vmem:[%s2 + $0xc8] sm:$0xff]
        %v401 = vld [vmem:[%s2 + $0xd0] sm:$0xff]
        %v402 = vld [vmem:[%s2 + $0xd8] sm:$0xff]
        %v403 = vld [vmem:[%s2 + $0xe0] sm:$0xff]
        %v404 = vld [vmem:[%s2 + $0xe8] sm:$0xff]
        %v405 = vld [vmem:[%s2 + $0xf0] sm:$0xff]
        %v406 = vld [vmem:[%s2 + $0xf8] sm:$0xff]
        %v407 = vld [vmem:[%s2 + $0x100] sm:$0xff]
        %v408 = vld [vmem:[%s2 + $0x108] sm:$0xff]
        %v409 = vld [vmem:[%s2 + $0x110] sm:$0xff]
        %v410 = vld [vmem:[%s2 + $0x118] sm:$0xff]
        %v411 = vld [vmem:[%s2 + $0x120] sm:$0xff]
        %v412 = vld [vmem:[%s2 + $0x128] sm:$0xff]
        %v413 = vld [vmem:[%s2 + $0x130] sm:$0xff]
        %v414 = vld [vmem:[%s2 + $0x138] sm:$0xff]
        %v415 = vld [vmem:[%s2 + $0x140] sm:$0xff]
        %v416 = vld [vmem:[%s2 + $0x148] sm:$0xff]
        %v417 = vld [vmem:[%s2 + $0x150] sm:$0xff]
        %v418 = vld [vmem:[%s2 + $0x158] sm:$0xff]
        %v419 = vld [vmem:[%s2 + $0x160] sm:$0xff]
        %v420 = vld [vmem:[%s2 + $0x168] sm:$0xff]
        %v421 = vld [vmem:[%s2 + $0x170] sm:$0xff]
        %v422 = vld [vmem:[%s2 + $0x178] sm:$0xff]
        %v423 = vld [vmem:[%s2 + $0x180] sm:$0xff]
        %v424 = vld [vmem:[%s2 + $0x188] sm:$0xff]
        %v425 = vld [vmem:[%s2 + $0x190] sm:$0xff]
        %v426 = vld [vmem:[%s2 + $0x198] sm:$0xff]
        %v427 = vld [vmem:[%s2 + $0x1a0] sm:$0xff]
        %v428 = vld [vmem:[%s2 + $0x1a8] sm:$0xff]
        %v429 = vld [vmem:[%s2 + $0x1b0] sm:$0xff]
        %v430 = vld [vmem:[%s2 + $0x1b8] sm:$0xff]
        %v431 = vld [vmem:[%s2 + $0x1c0] sm:$0xff]
        %v432 = vld [vmem:[%s2 + $0x1c8] sm:$0xff]
        %v433 = vld [vmem:[%s2 + $0x1d0] sm:$0xff]
        %v434 = vld [vmem:[%s2 + $0x1d8] sm:$0xff]
        %v435 = vld [vmem:[%s2 + $0x1e0] sm:$0xff]
        %v436 = vld [vmem:[%s2 + $0x1e8] sm:$0xff]
        %v437 = vld [vmem:[%s2 + $0x1f0] sm:$0xff]
        %v438 = vld [vmem:[%s2 + $0x1f8] sm:$0xff]
        %v439 = vld [vmem:[%s3] sm:$0xff]
        %v440 = vld [vmem:[%s3 + $0x8] sm:$0xff]
        %v441 = vld [vmem:[%s3 + $0x10] sm:$0xff]
        %v442 = vld [vmem:[%s3 + $0x18] sm:$0xff]
        %v443 = vld [vmem:[%s3 + $0x20] sm:$0xff]
        %v444 = vld [vmem:[%s3 + $0x28] sm:$0xff]
        %v445 = vld [vmem:[%s3 + $0x30] sm:$0xff]
        %v446 = vld [vmem:[%s3 + $0x38] sm:$0xff]
        %v447 = vld [vmem:[%s3 + $0x40] sm:$0xff]
        %v448 = vld [vmem:[%s3 + $0x48] sm:$0xff]
        %v449 = vld [vmem:[%s3 + $0x50] sm:$0xff]
        %v450 = vld [vmem:[%s3 + $0x58] sm:$0xff]
        %v451 = vld [vmem:[%s3 + $0x60] sm:$0xff]
        %v452 = vld [vmem:[%s3 + $0x68] sm:$0xff]
        %v453 = vld [vmem:[%s3 + $0x70] sm:$0xff]
        %v454 = vld [vmem:[%s3 + $0x78] sm:$0xff]
        %v455 = vld [vmem:[%s3 + $0x80] sm:$0xff]
        %v456 = vld [vmem:[%s3 + $0x88] sm:$0xff]
        %v457 = vld [vmem:[%s3 + $0x90] sm:$0xff]
        %v458 = vld [vmem:[%s3 + $0x98] sm:$0xff]
        %v459 = vld [vmem:[%s3 + $0xa0] sm:$0xff]
        %v460 = vld [vmem:[%s3 + $0xa8] sm:$0xff]
        %v461 = vld [vmem:[%s3 + $0xb0] sm:$0xff]
        %v462 = vld [vmem:[%s3 + $0xb8] sm:$0xff]
        %v463 = vld [vmem:[%s3 + $0xc0] sm:$0xff]
        %v464 = vld [vmem:[%s3 + $0xc8] sm:$0xff]
        %v465 = vld [vmem:[%s3 + $0xd0] sm:$0xff]
        %v466 = vld [vmem:[%s3 + $0xd8] sm:$0xff]
        %v467 = vld [vmem:[%s3 + $0xe0] sm:$0xff]
        %v468 = vld [vmem:[%s3 + $0xe8] sm:$0xff]
        %v469 = vld [vmem:[%s3 + $0xf0] sm:$0xff]
        %v470 = vld [vmem:[%s3 + $0xf8] sm:$0xff]
        %v471 = vld [vmem:[%s3 + $0x100] sm:$0xff]
        %v472 = vld [vmem:[%s3 + $0x108] sm:$0xff]
        %v473 = vld [vmem:[%s3 + $0x110] sm:$0xff]
        %v474 = vld [vmem:[%s3 + $0x118] sm:$0xff]
        %v475 = vld [vmem:[%s3 + $0x120] sm:$0xff]
        %v476 = vld [vmem:[%s3 + $0x128] sm:$0xff]
        %v477 = vld [vmem:[%s3 + $0x130] sm:$0xff]
        %v478 = vld [vmem:[%s3 + $0x138] sm:$0xff]
        %v479 = vld [vmem:[%s3 + $0x140] sm:$0xff]
        %v480 = vld [vmem:[%s3 + $0x148] sm:$0xff]
        %v481 = vld [vmem:[%s3 + $0x150] sm:$0xff]
        %v482 = vld [vmem:[%s3 + $0x158] sm:$0xff]
        %v483 = vld [vmem:[%s3 + $0x160] sm:$0xff]
        %v484 = vld [vmem:[%s3 + $0x168] sm:$0xff]
        %v485 = vld [vmem:[%s3 + $0x170] sm:$0xff]
        %v486 = vld [vmem:[%s3 + $0x178] sm:$0xff]
        %v487 = vld [vmem:[%s3 + $0x180] sm:$0xff]
        %v488 = vld [vmem:[%s3 + $0x188] sm:$0xff]
        %v489 = vld [vmem:[%s3 + $0x190] sm:$0xff]
        %v490 = vld [vmem:[%s3 + $0x198] sm:$0xff]
        %v491 = vld [vmem:[%s3 + $0x1a0] sm:$0xff]
        %v492 = vld [vmem:[%s3 + $0x1a8] sm:$0xff]
        %v493 = vld [vmem:[%s3 + $0x1b0] sm:$0xff]
        %v494 = vld [vmem:[%s3 + $0x1b8] sm:$0xff]
        %v495 = vld [vmem:[%s3 + $0x1c0] sm:$0xff]
        %v496 = vld [vmem:[%s3 + $0x1c8] sm:$0xff]
        %v497 = vld [vmem:[%s3 + $0x1d0] sm:$0xff]
        %v498 = vld [vmem:[%s3 + $0x1d8] sm:$0xff]
        %v499 = vld [vmem:[%s3 + $0x1e0] sm:$0xff]
        %v500 = vld [vmem:[%s3 + $0x1e8] sm:$0xff]
        %v501 = vld [vmem:[%s3 + $0x1f0] sm:$0xff]
        %v502 = vld [vmem:[%s3 + $0x1f8] sm:$0xff]
        %v503 = vld [vmem:[%s3 + $0x200] sm:$0xff]
        %v504 = vld [vmem:[%s3 + $0x208] sm:$0xff]
        %v505 = vld [vmem:[%s3 + $0x210] sm:$0xff]
        %v506 = vld [vmem:[%s3 + $0x218] sm:$0xff]
        %v507 = vld [vmem:[%s3 + $0x220] sm:$0xff]
        %v508 = vld [vmem:[%s3 + $0x228] sm:$0xff]
        %v509 = vld [vmem:[%s3 + $0x230] sm:$0xff]
        %v510 = vld [vmem:[%s3 + $0x238] sm:$0xff]
        %v511 = vld [vmem:[%s3 + $0x240] sm:$0xff]
        %v512 = vld [vmem:[%s3 + $0x248] sm:$0xff]
        %v513 = vld [vmem:[%s3 + $0x250] sm:$0xff]
        %v514 = vld [vmem:[%s3 + $0x258] sm:$0xff]
        %v515 = vld [vmem:[%s3 + $0x260] sm:$0xff]
        %v516 = vld [vmem:[%s3 + $0x268] sm:$0xff]
        %v517 = vld [vmem:[%s3 + $0x270] sm:$0xff]
        %v518 = vld [vmem:[%s3 + $0x278] sm:$0xff]
        %v519 = vld [vmem:[%s3 + $0x280] sm:$0xff]
        %v520 = vld [vmem:[%s3 + $0x288] sm:$0xff]
        %v521 = vld [vmem:[%s3 + $0x290] sm:$0xff]
        %v522 = vld [vmem:[%s3 + $0x298] sm:$0xff]
        %v523 = vld [vmem:[%s3 + $0x2a0] sm:$0xff]
        %v524 = vld [vmem:[%s3 + $0x2a8] sm:$0xff]
        %v525 = vld [vmem:[%s3 + $0x2b0] sm:$0xff]
        %v526 = vld [vmem:[%s3 + $0x2b8] sm:$0xff]
        %v527 = vld [vmem:[%s3 + $0x2c0] sm:$0xff]
        %v528 = vld [vmem:[%s3 + $0x2c8] sm:$0xff]
        %v529 = vld [vmem:[%s3 + $0x2d0] sm:$0xff]
        %v530 = vld [vmem:[%s3 + $0x2d8] sm:$0xff]
        %v531 = vld [vmem:[%s3 + $0x2e0] sm:$0xff]
        %v532 = vld [vmem:[%s3 + $0x2e8] sm:$0xff]
        %v533 = vld [vmem:[%s3 + $0x2f0] sm:$0xff]
        %v534 = vld [vmem:[%s3 + $0x2f8] sm:$0xff]
        %v535 = vld [vmem:[%s3 + $0x300] sm:$0xff]
        %v536 = vld [vmem:[%s3 + $0x308] sm:$0xff]
        %v537 = vld [vmem:[%s3 + $0x310] sm:$0xff]
        %v538 = vld [vmem:[%s3 + $0x318] sm:$0xff]
        %v539 = vld [vmem:[%s3 + $0x320] sm:$0xff]
        %v540 = vld [vmem:[%s3 + $0x328] sm:$0xff]
        %v541 = vld [vmem:[%s3 + $0x330] sm:$0xff]
        %v542 = vld [vmem:[%s3 + $0x338] sm:$0xff]
        %v543 = vld [vmem:[%s3 + $0x340] sm:$0xff]
        %v544 = vld [vmem:[%s3 + $0x348] sm:$0xff]
        %v545 = vld [vmem:[%s3 + $0x350] sm:$0xff]
        %v546 = vld [vmem:[%s3 + $0x358] sm:$0xff]
        %v547 = vld [vmem:[%s3 + $0x360] sm:$0xff]
        %v548 = vld [vmem:[%s3 + $0x368] sm:$0xff]
        %v549 = vld [vmem:[%s3 + $0x370] sm:$0xff]
        %v550 = vld [vmem:[%s3 + $0x378] sm:$0xff]
        %v551 = vld [vmem:[%s3 + $0x380] sm:$0xff]
        %v552 = vld [vmem:[%s3 + $0x388] sm:$0xff]
        %v553 = vld [vmem:[%s3 + $0x390] sm:$0xff]
        %v554 = vld [vmem:[%s3 + $0x398] sm:$0xff]
        %v555 = vld [vmem:[%s3 + $0x3a0] sm:$0xff]
        %v556 = vld [vmem:[%s3 + $0x3a8] sm:$0xff]
        %v557 = vld [vmem:[%s3 + $0x3b0] sm:$0xff]
        %v558 = vld [vmem:[%s3 + $0x3b8] sm:$0xff]
        %v559 = vld [vmem:[%s3 + $0x3c0] sm:$0xff]
        %v560 = vld [vmem:[%s3 + $0x3c8] sm:$0xff]
        %v561 = vld [vmem:[%s3 + $0x3d0] sm:$0xff]
        %v562 = vld [vmem:[%s3 + $0x3d8] sm:$0xff]
        %v563 = vld [vmem:[%s3 + $0x3e0] sm:$0xff]
        %v564 = vld [vmem:[%s3 + $0x3e8] sm:$0xff]
        %v565 = vld [vmem:[%s3 + $0x3f0] sm:$0xff]
        %v566 = vld [vmem:[%s3 + $0x3f8] sm:$0xff]
        %v567 = vld [vmem:[%s4] sm:$0xff]
        %v568 = vld [vmem:[%s4 + $0x8] sm:$0xff]
        %v569 = vld [vmem:[%s4 + $0x10] sm:$0xff]
        %v570 = vld [vmem:[%s4 + $0x18] sm:$0xff]
        %v571 = vld [vmem:[%s4 + $0x20] sm:$0xff]
        %v572 = vld [vmem:[%s4 + $0x28] sm:$0xff]
        %v573 = vld [vmem:[%s4 + $0x30] sm:$0xff]
        %v574 = vld [vmem:[%s4 + $0x38] sm:$0xff]
        %v575 = vld [vmem:[%s4 + $0x40] sm:$0xff]
        %v576 = vld [vmem:[%s4 + $0x48] sm:$0xff]
        %v577 = vld [vmem:[%s4 + $0x50] sm:$0xff]
        %v578 = vld [vmem:[%s4 + $0x58] sm:$0xff]
        %v579 = vld [vmem:[%s4 + $0x60] sm:$0xff]
        %v580 = vld [vmem:[%s4 + $0x68] sm:$0xff]
        %v581 = vld [vmem:[%s4 + $0x70] sm:$0xff]
        %v582 = vld [vmem:[%s4 + $0x78] sm:$0xff]
        %v583 = vld [vmem:[%s4 + $0x80] sm:$0xff]
        %v584 = vld [vmem:[%s4 + $0x88] sm:$0xff]
        %v585 = vld [vmem:[%s4 + $0x90] sm:$0xff]
        %v586 = vld [vmem:[%s4 + $0x98] sm:$0xff]
        %v587 = vld [vmem:[%s4 + $0xa0] sm:$0xff]
        %v588 = vld [vmem:[%s4 + $0xa8] sm:$0xff]
        %v589 = vld [vmem:[%s4 + $0xb0] sm:$0xff]
        %v590 = vld [vmem:[%s4 + $0xb8] sm:$0xff]
        %v591 = vld [vmem:[%s4 + $0xc0] sm:$0xff]
        %v592 = vld [vmem:[%s4 + $0xc8] sm:$0xff]
        %v593 = vld [vmem:[%s4 + $0xd0] sm:$0xff]
        %v594 = vld [vmem:[%s4 + $0xd8] sm:$0xff]
        %v595 = vld [vmem:[%s4 + $0xe0] sm:$0xff]
        %v596 = vld [vmem:[%s4 + $0xe8] sm:$0xff]
        %v597 = vld [vmem:[%s4 + $0xf0] sm:$0xff]
        %v598 = vld [vmem:[%s4 + $0xf8] sm:$0xff]
        %v599 = vld [vmem:[%s4 + $0x100] sm:$0xff]
        %v600 = vld [vmem:[%s4 + $0x108] sm:$0xff]
        %v601 = vld [vmem:[%s4 + $0x110] sm:$0xff]
        %v602 = vld [vmem:[%s4 + $0x118] sm:$0xff]
        %v603 = vld [vmem:[%s4 + $0x120] sm:$0xff]
        %v604 = vld [vmem:[%s4 + $0x128] sm:$0xff]
        %v605 = vld [vmem:[%s4 + $0x130] sm:$0xff]
        %v606 = vld [vmem:[%s4 + $0x138] sm:$0xff]
        %v607 = vld [vmem:[%s4 + $0x140] sm:$0xff]
        %v608 = vld [vmem:[%s4 + $0x148] sm:$0xff]
        %v609 = vld [vmem:[%s4 + $0x150] sm:$0xff]
        %v610 = vld [vmem:[%s4 + $0x158] sm:$0xff]
        %v611 = vld [vmem:[%s4 + $0x160] sm:$0xff]
        %v612 = vld [vmem:[%s4 + $0x168] sm:$0xff]
        %v613 = vld [vmem:[%s4 + $0x170] sm:$0xff]
        %v614 = vld [vmem:[%s4 + $0x178] sm:$0xff]
        %v615 = vld [vmem:[%s4 + $0x180] sm:$0xff]
        %v616 = vld [vmem:[%s4 + $0x188] sm:$0xff]
        %v617 = vld [vmem:[%s4 + $0x190] sm:$0xff]
        %v618 = vld [vmem:[%s4 + $0x198] sm:$0xff]
        %v619 = vld [vmem:[%s4 + $0x1a0] sm:$0xff]
        %v620 = vld [vmem:[%s4 + $0x1a8] sm:$0xff]
        %v621 = vld [vmem:[%s4 + $0x1b0] sm:$0xff]
        %v622 = vld [vmem:[%s4 + $0x1b8] sm:$0xff]
        %v623 = vld [vmem:[%s4 + $0x1c0] sm:$0xff]
        %v624 = vld [vmem:[%s4 + $0x1c8] sm:$0xff]
        %v625 = vld [vmem:[%s4 + $0x1d0] sm:$0xff]
        %v626 = vld [vmem:[%s4 + $0x1d8] sm:$0xff]
        %v627 = vld [vmem:[%s4 + $0x1e0] sm:$0xff]
        %v628 = vld [vmem:[%s4 + $0x1e8] sm:$0xff]
        %v629 = vld [vmem:[%s4 + $0x1f0] sm:$0xff]
        %v630 = vld [vmem:[%s4 + $0x1f8] sm:$0xff]
        %v631 = vld [vmem:[%s5] sm:$0xf]
        %v632 = vld [vmem:[#allocation2] sm:$0x1]
        %v633 = vld [vmem:[%s307] sm:$0xff]
        %v635 = vcombine.high %v633, %v633
        %v637 = vpack.c.bf16 %v633, %v633
        %v638 = vpack.c.bf16 %v635, %v635
        %640 = vset.pattern.permute.xlu0 0
        %641 = vperm.xlu0 %640, %v375
        %v642 = vpop.permute.xlu0 %641
        %645 = vset.pattern.permute.xlu0 0
        %646 = vperm.xlu0 %645, %v376
        %v647 = vpop.permute.xlu0 %646
        %650 = vset.pattern.permute.xlu0 0
        %651 = vperm.xlu0 %650, %v377
        %v652 = vpop.permute.xlu0 %651
        %655 = vset.pattern.permute.xlu0 0
        %656 = vperm.xlu0 %655, %v378
        %v657 = vpop.permute.xlu0 %656
        %660 = vset.pattern.permute.xlu0 0
        %661 = vperm.xlu0 %660, %v379
        %v662 = vpop.permute.xlu0 %661
        %665 = vset.pattern.permute.xlu0 0
        %666 = vperm.xlu0 %665, %v380
        %v667 = vpop.permute.xlu0 %666
        %670 = vset.pattern.permute.xlu0 0
        %671 = vperm.xlu0 %670, %v381
        %v672 = vpop.permute.xlu0 %671
        %675 = vset.pattern.permute.xlu0 0
        %676 = vperm.xlu0 %675, %v382
        %v677 = vpop.permute.xlu0 %676
        %680 = vset.pattern.permute.xlu0 0
        %681 = vperm.xlu0 %680, %v383
        %v682 = vpop.permute.xlu0 %681
        %685 = vset.pattern.permute.xlu0 0
        %686 = vperm.xlu0 %685, %v384
        %v687 = vpop.permute.xlu0 %686
        %690 = vset.pattern.permute.xlu0 0
        %691 = vperm.xlu0 %690, %v385
        %v692 = vpop.permute.xlu0 %691
        %695 = vset.pattern.permute.xlu0 0
        %696 = vperm.xlu0 %695, %v386
        %v697 = vpop.permute.xlu0 %696
        %700 = vset.pattern.permute.xlu0 0
        %701 = vperm.xlu0 %700, %v387
        %v702 = vpop.permute.xlu0 %701
        %705 = vset.pattern.permute.xlu0 0
        %706 = vperm.xlu0 %705, %v388
        %v707 = vpop.permute.xlu0 %706
        %710 = vset.pattern.permute.xlu0 0
        %711 = vperm.xlu0 %710, %v389
        %v712 = vpop.permute.xlu0 %711
        %715 = vset.pattern.permute.xlu0 0
        %716 = vperm.xlu0 %715, %v390
        %v717 = vpop.permute.xlu0 %716
        %720 = vset.pattern.permute.xlu0 0
        %721 = vperm.xlu0 %720, %v391
        %v722 = vpop.permute.xlu0 %721
        %725 = vset.pattern.permute.xlu0 0
        %726 = vperm.xlu0 %725, %v392
        %v727 = vpop.permute.xlu0 %726
        %730 = vset.pattern.permute.xlu0 0
        %731 = vperm.xlu0 %730, %v393
        %v732 = vpop.permute.xlu0 %731
        %735 = vset.pattern.permute.xlu0 0
        %736 = vperm.xlu0 %735, %v394
        %v737 = vpop.permute.xlu0 %736
        %740 = vset.pattern.permute.xlu0 0
        %741 = vperm.xlu0 %740, %v395
        %v742 = vpop.permute.xlu0 %741
        %745 = vset.pattern.permute.xlu0 0
        %746 = vperm.xlu0 %745, %v396
        %v747 = vpop.permute.xlu0 %746
        %750 = vset.pattern.permute.xlu0 0
        %751 = vperm.xlu0 %750, %v397
        %v752 = vpop.permute.xlu0 %751
        %755 = vset.pattern.permute.xlu0 0
        %756 = vperm.xlu0 %755, %v398
        %v757 = vpop.permute.xlu0 %756
        %760 = vset.pattern.permute.xlu0 0
        %761 = vperm.xlu0 %760, %v399
        %v762 = vpop.permute.xlu0 %761
        %765 = vset.pattern.permute.xlu0 0
        %766 = vperm.xlu0 %765, %v400
        %v767 = vpop.permute.xlu0 %766
        %770 = vset.pattern.permute.xlu0 0
        %771 = vperm.xlu0 %770, %v401
        %v772 = vpop.permute.xlu0 %771
        %775 = vset.pattern.permute.xlu0 0
        %776 = vperm.xlu0 %775, %v402
        %v777 = vpop.permute.xlu0 %776
        %780 = vset.pattern.permute.xlu0 0
        %781 = vperm.xlu0 %780, %v403
        %v782 = vpop.permute.xlu0 %781
        %785 = vset.pattern.permute.xlu0 0
        %786 = vperm.xlu0 %785, %v404
        %v787 = vpop.permute.xlu0 %786
        %790 = vset.pattern.permute.xlu0 0
        %791 = vperm.xlu0 %790, %v405
        %v792 = vpop.permute.xlu0 %791
        %795 = vset.pattern.permute.xlu0 0
        %796 = vperm.xlu0 %795, %v406
        %v797 = vpop.permute.xlu0 %796
        %800 = vset.pattern.permute.xlu0 0
        %801 = vperm.xlu0 %800, %v407
        %v802 = vpop.permute.xlu0 %801
        %805 = vset.pattern.permute.xlu0 0
        %806 = vperm.xlu0 %805, %v408
        %v807 = vpop.permute.xlu0 %806
        %810 = vset.pattern.permute.xlu0 0
        %811 = vperm.xlu0 %810, %v409
        %v812 = vpop.permute.xlu0 %811
        %815 = vset.pattern.permute.xlu0 0
        %816 = vperm.xlu0 %815, %v410
        %v817 = vpop.permute.xlu0 %816
        %820 = vset.pattern.permute.xlu0 0
        %821 = vperm.xlu0 %820, %v411
        %v822 = vpop.permute.xlu0 %821
        %825 = vset.pattern.permute.xlu0 0
        %826 = vperm.xlu0 %825, %v412
        %v827 = vpop.permute.xlu0 %826
        %830 = vset.pattern.permute.xlu0 0
        %831 = vperm.xlu0 %830, %v413
        %v832 = vpop.permute.xlu0 %831
        %835 = vset.pattern.permute.xlu0 0
        %836 = vperm.xlu0 %835, %v414
        %v837 = vpop.permute.xlu0 %836
        %840 = vset.pattern.permute.xlu0 0
        %841 = vperm.xlu0 %840, %v415
        %v842 = vpop.permute.xlu0 %841
        %845 = vset.pattern.permute.xlu0 0
        %846 = vperm.xlu0 %845, %v416
        %v847 = vpop.permute.xlu0 %846
        %850 = vset.pattern.permute.xlu0 0
        %851 = vperm.xlu0 %850, %v417
        %v852 = vpop.permute.xlu0 %851
        %855 = vset.pattern.permute.xlu0 0
        %856 = vperm.xlu0 %855, %v418
        %v857 = vpop.permute.xlu0 %856
        %860 = vset.pattern.permute.xlu0 0
        %861 = vperm.xlu0 %860, %v419
        %v862 = vpop.permute.xlu0 %861
        %865 = vset.pattern.permute.xlu0 0
        %866 = vperm.xlu0 %865, %v420
        %v867 = vpop.permute.xlu0 %866
        %870 = vset.pattern.permute.xlu0 0
        %871 = vperm.xlu0 %870, %v421
        %v872 = vpop.permute.xlu0 %871
        %875 = vset.pattern.permute.xlu0 0
        %876 = vperm.xlu0 %875, %v422
        %v877 = vpop.permute.xlu0 %876
        %880 = vset.pattern.permute.xlu0 0
        %881 = vperm.xlu0 %880, %v423
        %v882 = vpop.permute.xlu0 %881
        %885 = vset.pattern.permute.xlu0 0
        %886 = vperm.xlu0 %885, %v424
        %v887 = vpop.permute.xlu0 %886
        %890 = vset.pattern.permute.xlu0 0
        %891 = vperm.xlu0 %890, %v425
        %v892 = vpop.permute.xlu0 %891
        %895 = vset.pattern.permute.xlu0 0
        %896 = vperm.xlu0 %895, %v426
        %v897 = vpop.permute.xlu0 %896
        %900 = vset.pattern.permute.xlu0 0
        %901 = vperm.xlu0 %900, %v427
        %v902 = vpop.permute.xlu0 %901
        %905 = vset.pattern.permute.xlu0 0
        %906 = vperm.xlu0 %905, %v428
        %v907 = vpop.permute.xlu0 %906
        %910 = vset.pattern.permute.xlu0 0
        %911 = vperm.xlu0 %910, %v429
        %v912 = vpop.permute.xlu0 %911
        %915 = vset.pattern.permute.xlu0 0
        %916 = vperm.xlu0 %915, %v430
        %v917 = vpop.permute.xlu0 %916
        %920 = vset.pattern.permute.xlu0 0
        %921 = vperm.xlu0 %920, %v431
        %v922 = vpop.permute.xlu0 %921
        %925 = vset.pattern.permute.xlu0 0
        %926 = vperm.xlu0 %925, %v432
        %v927 = vpop.permute.xlu0 %926
        %930 = vset.pattern.permute.xlu0 0
        %931 = vperm.xlu0 %930, %v433
        %v932 = vpop.permute.xlu0 %931
        %935 = vset.pattern.permute.xlu0 0
        %936 = vperm.xlu0 %935, %v434
        %v937 = vpop.permute.xlu0 %936
        %940 = vset.pattern.permute.xlu0 0
        %941 = vperm.xlu0 %940, %v435
        %v942 = vpop.permute.xlu0 %941
        %945 = vset.pattern.permute.xlu0 0
        %946 = vperm.xlu0 %945, %v436
        %v947 = vpop.permute.xlu0 %946
        %950 = vset.pattern.permute.xlu0 0
        %951 = vperm.xlu0 %950, %v437
        %v952 = vpop.permute.xlu0 %951
        %955 = vset.pattern.permute.xlu0 0
        %956 = vperm.xlu0 %955, %v438
        %v957 = vpop.permute.xlu0 %956
        %v1023 = vunpack.c.l.b16 %v311
        %v1024 = vunpack.c.l.b16 %v312
        %v1025 = vunpack.c.l.b16 %v313
        %v1026 = vunpack.c.l.b16 %v314
        %v1027 = vunpack.c.l.b16 %v315
        %v1028 = vunpack.c.l.b16 %v316
        %v1029 = vunpack.c.l.b16 %v317
        %v1030 = vunpack.c.l.b16 %v318
        %v1031 = vunpack.c.l.b16 %v319
        %v1032 = vunpack.c.l.b16 %v320
        %v1033 = vunpack.c.l.b16 %v321
        %v1034 = vunpack.c.l.b16 %v322
        %v1035 = vunpack.c.l.b16 %v323
        %v1036 = vunpack.c.l.b16 %v324
        %v1037 = vunpack.c.l.b16 %v325
        %v1038 = vunpack.c.l.b16 %v326
        %v1039 = vunpack.c.l.b16 %v327
        %v1040 = vunpack.c.l.b16 %v328
        %v1041 = vunpack.c.l.b16 %v329
        %v1042 = vunpack.c.l.b16 %v330
        %v1043 = vunpack.c.l.b16 %v331
        %v1044 = vunpack.c.l.b16 %v332
        %v1045 = vunpack.c.l.b16 %v333
        %v1046 = vunpack.c.l.b16 %v334
        %v1047 = vunpack.c.l.b16 %v335
        %v1048 = vunpack.c.l.b16 %v336
        %v1049 = vunpack.c.l.b16 %v337
        %v1050 = vunpack.c.l.b16 %v338
        %v1051 = vunpack.c.l.b16 %v339
        %v1052 = vunpack.c.l.b16 %v340
        %v1053 = vunpack.c.l.b16 %v341
        %v1054 = vunpack.c.l.b16 %v342
        %v1055 = vunpack.c.l.b16 %v343
        %v1056 = vunpack.c.l.b16 %v344
        %v1057 = vunpack.c.l.b16 %v345
        %v1058 = vunpack.c.l.b16 %v346
        %v1059 = vunpack.c.l.b16 %v347
        %v1060 = vunpack.c.l.b16 %v348
        %v1061 = vunpack.c.l.b16 %v349
        %v1062 = vunpack.c.l.b16 %v350
        %v1063 = vunpack.c.l.b16 %v351
        %v1064 = vunpack.c.l.b16 %v352
        %v1065 = vunpack.c.l.b16 %v353
        %v1066 = vunpack.c.l.b16 %v354
        %v1067 = vunpack.c.l.b16 %v355
        %v1068 = vunpack.c.l.b16 %v356
        %v1069 = vunpack.c.l.b16 %v357
        %v1070 = vunpack.c.l.b16 %v358
        %v1071 = vunpack.c.l.b16 %v359
        %v1072 = vunpack.c.l.b16 %v360
        %v1073 = vunpack.c.l.b16 %v361
        %v1074 = vunpack.c.l.b16 %v362
        %v1075 = vunpack.c.l.b16 %v363
        %v1076 = vunpack.c.l.b16 %v364
        %v1077 = vunpack.c.l.b16 %v365
        %v1078 = vunpack.c.l.b16 %v366
        %v1079 = vunpack.c.l.b16 %v367
        %v1080 = vunpack.c.l.b16 %v368
        %v1081 = vunpack.c.l.b16 %v369
        %v1082 = vunpack.c.l.b16 %v370
        %v1083 = vunpack.c.l.b16 %v371
        %v1084 = vunpack.c.l.b16 %v372
        %v1085 = vunpack.c.l.b16 %v373
        %v1086 = vunpack.c.l.b16 %v374
        %v1087 = vpack.c.b16 %v1024, %v1023
        %v1088 = vpack.c.b16 %v1026, %v1025
        %v1089 = vpack.c.b16 %v1028, %v1027
        %v1090 = vpack.c.b16 %v1030, %v1029
        %v1091 = vpack.c.b16 %v1032, %v1031
        %v1092 = vpack.c.b16 %v1034, %v1033
        %v1093 = vpack.c.b16 %v1036, %v1035
        %v1094 = vpack.c.b16 %v1038, %v1037
        %v1095 = vpack.c.b16 %v1040, %v1039
        %v1096 = vpack.c.b16 %v1042, %v1041
        %v1097 = vpack.c.b16 %v1044, %v1043
        %v1098 = vpack.c.b16 %v1046, %v1045
        %v1099 = vpack.c.b16 %v1048, %v1047
        %v1100 = vpack.c.b16 %v1050, %v1049
        %v1101 = vpack.c.b16 %v1052, %v1051
        %v1102 = vpack.c.b16 %v1054, %v1053
        %v1103 = vpack.c.b16 %v1056, %v1055
        %v1104 = vpack.c.b16 %v1058, %v1057
        %v1105 = vpack.c.b16 %v1060, %v1059
        %v1106 = vpack.c.b16 %v1062, %v1061
        %v1107 = vpack.c.b16 %v1064, %v1063
        %v1108 = vpack.c.b16 %v1066, %v1065
        %v1109 = vpack.c.b16 %v1068, %v1067
        %v1110 = vpack.c.b16 %v1070, %v1069
        %v1111 = vpack.c.b16 %v1072, %v1071
        %v1112 = vpack.c.b16 %v1074, %v1073
        %v1113 = vpack.c.b16 %v1076, %v1075
        %v1114 = vpack.c.b16 %v1078, %v1077
        %v1115 = vpack.c.b16 %v1080, %v1079
        %v1116 = vpack.c.b16 %v1082, %v1081
        %v1117 = vpack.c.b16 %v1084, %v1083
        %v1118 = vpack.c.b16 %v1086, %v1085
        %vm1119 = vcmask 31744
        %v1121 = vsel %vm1119, %v1087, 0
        %v1124 = vsel %vm1119, %v1088, 0
        %v1127 = vsel %vm1119, %v1089, 0
        %v1130 = vsel %vm1119, %v1090, 0
        %v1133 = vsel %vm1119, %v1091, 0
        %v1136 = vsel %vm1119, %v1092, 0
        %v1139 = vsel %vm1119, %v1093, 0
        %v1142 = vsel %vm1119, %v1094, 0
        %v1145 = vsel %vm1119, %v1095, 0
        %v1148 = vsel %vm1119, %v1096, 0
        %v1151 = vsel %vm1119, %v1097, 0
        %v1154 = vsel %vm1119, %v1098, 0
        %v1157 = vsel %vm1119, %v1099, 0
        %v1160 = vsel %vm1119, %v1100, 0
        %v1163 = vsel %vm1119, %v1101, 0
        %v1166 = vsel %vm1119, %v1102, 0
        %v1169 = vsel %vm1119, %v1103, 0
        %v1172 = vsel %vm1119, %v1104, 0
        %v1175 = vsel %vm1119, %v1105, 0
        %v1178 = vsel %vm1119, %v1106, 0
        %v1181 = vsel %vm1119, %v1107, 0
        %v1184 = vsel %vm1119, %v1108, 0
        %v1187 = vsel %vm1119, %v1109, 0
        %v1190 = vsel %vm1119, %v1110, 0
        %v1193 = vsel %vm1119, %v1111, 0
        %v1196 = vsel %vm1119, %v1112, 0
        %v1199 = vsel %vm1119, %v1113, 0
        %v1202 = vsel %vm1119, %v1114, 0
        %v1205 = vsel %vm1119, %v1115, 0
        %v1208 = vsel %vm1119, %v1116, 0
        %v1211 = vsel %vm1119, %v1117, 0
        %v1214 = vsel %vm1119, %v1118, 0
        %vm1216 = vcmask 1041408
        %v1218 = vsel %vm1216, %v637, 0
        %v1221 = vsel %vm1216, %v638, 0
        %1223 = vmatprep.subr.bf16.mxu0 %v1221
        %1224 = vmatpush1.bf16.msra.mxu0 %v1218
        %1225 = vmatprep.subr.bf16.mxu0 0
        %1226 = vmatpush1.bf16.msra.mxu0 0
        %1227 = vmatprep.subr.bf16.mxu0 0
        %1228 = vmatpush1.bf16.msra.mxu0 0
        %1229 = vmatprep.subr.bf16.mxu0 0
        %1230 = vmatpush1.bf16.msra.mxu0 0
        %1231 = vmatprep.subr.bf16.mxu0 0
        %1232 = vmatpush1.bf16.msra.mxu0 0
        %1233 = vmatprep.subr.bf16.mxu0 0
        %1234 = vmatpush1.bf16.msra.mxu0 0
        %1235 = vmatprep.subr.bf16.mxu0 0
        %1236 = vmatpush1.bf16.msra.mxu0 0
        %1237 = vmatprep.subr.bf16.mxu0 0
        %1238 = vmatpush1.bf16.msra.mxu0 0
        %1239 = vmatprep.subr.bf16.mxu0 0
        %1240 = vmatpush1.bf16.msra.mxu0 0
        %1241 = vmatprep.subr.bf16.mxu0 0
        %1242 = vmatpush1.bf16.msra.mxu0 0
        %1243 = vmatprep.subr.bf16.mxu0 0
        %1244 = vmatpush1.bf16.msra.mxu0 0
        %1245 = vmatprep.subr.bf16.mxu0 0
        %1246 = vmatpush1.bf16.msra.mxu0 0
        %1247 = vmatprep.subr.bf16.mxu0 0
        %1248 = vmatpush1.bf16.msra.mxu0 0
        %1249 = vmatprep.subr.bf16.mxu0 0
        %1250 = vmatpush1.bf16.msra.mxu0 0
        %1251 = vmatprep.subr.bf16.mxu0 0
        %1252 = vmatpush1.bf16.msra.mxu0 0
        %1253 = vmatprep.subr.bf16.mxu0 0
        %1254 = vmatpush1.bf16.msra.mxu0 0
        %1255 = vmatprep.mubr.bf16.mxu0 0
        %1256 = vmatmul.mubr.bf16.gmra.mrb[0].mxu0 %v1121
        %v1257 = vpop.f32.mrb[0].mxu0
        %v1258 = vadd.f32 %v642, %v1257
        %v1259 = vpop.f32.mrb[0].mxu0
        %v1260 = vadd.f32 %v642, %v1259
        %v1261 = vpop.f32.mrb[0].mxu0
        %v1262 = vadd.f32 %v647, %v1261
        %v1263 = vpop.f32.mrb[0].mxu0
        %v1264 = vadd.f32 %v647, %v1263
        %1265 = vmatprep.mubr.bf16.mxu0 0
        %1266 = vmatmul.mubr.bf16.gmra.mrb[0].mxu0 %v1124
        %v1267 = vpop.f32.mrb[0].mxu0
        %v1268 = vadd.f32 %v652, %v1267
        %v1269 = vpop.f32.mrb[0].mxu0
        %v1270 = vadd.f32 %v652, %v1269
        %v1271 = vpop.f32.mrb[0].mxu0
        %v1272 = vadd.f32 %v657, %v1271
        %v1273 = vpop.f32.mrb[0].mxu0
        %v1274 = vadd.f32 %v657, %v1273
        %1275 = vmatprep.mubr.bf16.mxu0 0
        %1276 = vmatmul.mubr.bf16.gmra.mrb[0].mxu0 %v1127
        %v1277 = vpop.f32.mrb[0].mxu0
        %v1278 = vadd.f32 %v662, %v1277
        %v1279 = vpop.f32.mrb[0].mxu0
        %v1280 = vadd.f32 %v662, %v1279
        %v1281 = vpop.f32.mrb[0].mxu0
        %v1282 = vadd.f32 %v667, %v1281
        %v1283 = vpop.f32.mrb[0].mxu0
        %v1284 = vadd.f32 %v667, %v1283
        %1285 = vmatprep.mubr.bf16.mxu0 0
        %1286 = vmatmul.mubr.bf16.gmra.mrb[0].mxu0 %v1130
        %v1287 = vpop.f32.mrb[0].mxu0
        %v1288 = vadd.f32 %v672, %v1287
        %v1289 = vpop.f32.mrb[0].mxu0
        %v1290 = vadd.f32 %v672, %v1289
        %v1291 = vpop.f32.mrb[0].mxu0
        %v1292 = vadd.f32 %v677, %v1291
        %v1293 = vpop.f32.mrb[0].mxu0
        %v1294 = vadd.f32 %v677, %v1293
        %1295 = vmatprep.mubr.bf16.mxu0 0
        %1296 = vmatmul.mubr.bf16.gmra.mrb[0].mxu0 %v1133
        %v1297 = vpop.f32.mrb[0].mxu0
        %v1298 = vadd.f32 %v682, %v1297
        %v1299 = vpop.f32.mrb[0].mxu0
        %v1300 = vadd.f32 %v682, %v1299
        %v1301 = vpop.f32.mrb[0].mxu0
        %v1302 = vadd.f32 %v687, %v1301
        %v1303 = vpop.f32.mrb[0].mxu0
        %v1304 = vadd.f32 %v687, %v1303
        %1305 = vmatprep.mubr.bf16.mxu0 0
        %1306 = vmatmul.mubr.bf16.gmra.mrb[0].mxu0 %v1136
        %v1307 = vpop.f32.mrb[0].mxu0
        %v1308 = vadd.f32 %v692, %v1307
        %v1309 = vpop.f32.mrb[0].mxu0
        %v1310 = vadd.f32 %v692, %v1309
        %v1311 = vpop.f32.mrb[0].mxu0
        %v1312 = vadd.f32 %v697, %v1311
        %v1313 = vpop.f32.mrb[0].mxu0
        %v1314 = vadd.f32 %v697, %v1313
        %1315 = vmatprep.mubr.bf16.mxu0 0
        %1316 = vmatmul.mubr.bf16.gmra.mrb[0].mxu0 %v1139
        %v1317 = vpop.f32.mrb[0].mxu0
        %v1318 = vadd.f32 %v702, %v1317
        %v1319 = vpop.f32.mrb[0].mxu0
        %v1320 = vadd.f32 %v702, %v1319
        %v1321 = vpop.f32.mrb[0].mxu0
        %v1322 = vadd.f32 %v707, %v1321
        %v1323 = vpop.f32.mrb[0].mxu0
        %v1324 = vadd.f32 %v707, %v1323
        %1325 = vmatprep.mubr.bf16.mxu0 0
        %1326 = vmatmul.mubr.bf16.gmra.mrb[0].mxu0 %v1142
        %v1327 = vpop.f32.mrb[0].mxu0
        %v1328 = vadd.f32 %v712, %v1327
        %v1329 = vpop.f32.mrb[0].mxu0
        %v1330 = vadd.f32 %v712, %v1329
        %v1331 = vpop.f32.mrb[0].mxu0
        %v1332 = vadd.f32 %v717, %v1331
        %v1333 = vpop.f32.mrb[0].mxu0
        %v1334 = vadd.f32 %v717, %v1333
        %1335 = vmatprep.mubr.bf16.mxu0 0
        %1336 = vmatmul.mubr.bf16.gmra.mrb[0].mxu0 %v1145
        %v1337 = vpop.f32.mrb[0].mxu0
        %v1338 = vadd.f32 %v722, %v1337
        %v1339 = vpop.f32.mrb[0].mxu0
        %v1340 = vadd.f32 %v722, %v1339
        %v1341 = vpop.f32.mrb[0].mxu0
        %v1342 = vadd.f32 %v727, %v1341
        %v1343 = vpop.f32.mrb[0].mxu0
        %v1344 = vadd.f32 %v727, %v1343
        %1345 = vmatprep.mubr.bf16.mxu0 0
        %1346 = vmatmul.mubr.bf16.gmra.mrb[0].mxu0 %v1148
        %v1347 = vpop.f32.mrb[0].mxu0
        %v1348 = vadd.f32 %v732, %v1347
        %v1349 = vpop.f32.mrb[0].mxu0
        %v1350 = vadd.f32 %v732, %v1349
        %v1351 = vpop.f32.mrb[0].mxu0
        %v1352 = vadd.f32 %v737, %v1351
        %v1353 = vpop.f32.mrb[0].mxu0
        %v1354 = vadd.f32 %v737, %v1353
        %1355 = vmatprep.mubr.bf16.mxu0 0
        %1356 = vmatmul.mubr.bf16.gmra.mrb[0].mxu0 %v1151
        %v1357 = vpop.f32.mrb[0].mxu0
        %v1358 = vadd.f32 %v742, %v1357
        %v1359 = vpop.f32.mrb[0].mxu0
        %v1360 = vadd.f32 %v742, %v1359
        %v1361 = vpop.f32.mrb[0].mxu0
        %v1362 = vadd.f32 %v747, %v1361
        %v1363 = vpop.f32.mrb[0].mxu0
        %v1364 = vadd.f32 %v747, %v1363
        %1365 = vmatprep.mubr.bf16.mxu0 0
        %1366 = vmatmul.mubr.bf16.gmra.mrb[0].mxu0 %v1154
        %v1367 = vpop.f32.mrb[0].mxu0
        %v1368 = vadd.f32 %v752, %v1367
        %v1369 = vpop.f32.mrb[0].mxu0
        %v1370 = vadd.f32 %v752, %v1369
        %v1371 = vpop.f32.mrb[0].mxu0
        %v1372 = vadd.f32 %v757, %v1371
        %v1373 = vpop.f32.mrb[0].mxu0
        %v1374 = vadd.f32 %v757, %v1373
        %1375 = vmatprep.mubr.bf16.mxu0 0
        %1376 = vmatmul.mubr.bf16.gmra.mrb[0].mxu0 %v1157
        %v1377 = vpop.f32.mrb[0].mxu0
        %v1378 = vadd.f32 %v762, %v1377
        %v1379 = vpop.f32.mrb[0].mxu0
        %v1380 = vadd.f32 %v762, %v1379
        %v1381 = vpop.f32.mrb[0].mxu0
        %v1382 = vadd.f32 %v767, %v1381
        %v1383 = vpop.f32.mrb[0].mxu0
        %v1384 = vadd.f32 %v767, %v1383
        %1385 = vmatprep.mubr.bf16.mxu0 0
        %1386 = vmatmul.mubr.bf16.gmra.mrb[0].mxu0 %v1160
        %v1387 = vpop.f32.mrb[0].mxu0
        %v1388 = vadd.f32 %v772, %v1387
        %v1389 = vpop.f32.mrb[0].mxu0
        %v1390 = vadd.f32 %v772, %v1389
        %v1391 = vpop.f32.mrb[0].mxu0
        %v1392 = vadd.f32 %v777, %v1391
        %v1393 = vpop.f32.mrb[0].mxu0
        %v1394 = vadd.f32 %v777, %v1393
        %1395 = vmatprep.mubr.bf16.mxu0 0
        %1396 = vmatmul.mubr.bf16.gmra.mrb[0].mxu0 %v1163
        %v1397 = vpop.f32.mrb[0].mxu0
        %v1398 = vadd.f32 %v782, %v1397
        %v1399 = vpop.f32.mrb[0].mxu0
        %v1400 = vadd.f32 %v782, %v1399
        %v1401 = vpop.f32.mrb[0].mxu0
        %v1402 = vadd.f32 %v787, %v1401
        %v1403 = vpop.f32.mrb[0].mxu0
        %v1404 = vadd.f32 %v787, %v1403
        %1405 = vmatprep.mubr.bf16.mxu0 0
        %1406 = vmatmul.mubr.bf16.gmra.mrb[0].mxu0 %v1166
        %v1407 = vpop.f32.mrb[0].mxu0
        %v1408 = vadd.f32 %v792, %v1407
        %v1409 = vpop.f32.mrb[0].mxu0
        %v1410 = vadd.f32 %v792, %v1409
        %v1411 = vpop.f32.mrb[0].mxu0
        %v1412 = vadd.f32 %v797, %v1411
        %v1413 = vpop.f32.mrb[0].mxu0
        %v1414 = vadd.f32 %v797, %v1413
        %1415 = vmatprep.mubr.bf16.mxu0 0
        %1416 = vmatmul.mubr.bf16.gmra.mrb[0].mxu0 %v1169
        %v1417 = vpop.f32.mrb[0].mxu0
        %v1418 = vadd.f32 %v802, %v1417
        %v1419 = vpop.f32.mrb[0].mxu0
        %v1420 = vadd.f32 %v802, %v1419
        %v1421 = vpop.f32.mrb[0].mxu0
        %v1422 = vadd.f32 %v807, %v1421
        %v1423 = vpop.f32.mrb[0].mxu0
        %v1424 = vadd.f32 %v807, %v1423
        %1425 = vmatprep.mubr.bf16.mxu0 0
        %1426 = vmatmul.mubr.bf16.gmra.mrb[0].mxu0 %v1172
        %v1427 = vpop.f32.mrb[0].mxu0
        %v1428 = vadd.f32 %v812, %v1427
        %v1429 = vpop.f32.mrb[0].mxu0
        %v1430 = vadd.f32 %v812, %v1429
        %v1431 = vpop.f32.mrb[0].mxu0
        %v1432 = vadd.f32 %v817, %v1431
        %v1433 = vpop.f32.mrb[0].mxu0
        %v1434 = vadd.f32 %v817, %v1433
        %1435 = vmatprep.mubr.bf16.mxu0 0
        %1436 = vmatmul.mubr.bf16.gmra.mrb[0].mxu0 %v1175
        %v1437 = vpop.f32.mrb[0].mxu0
        %v1438 = vadd.f32 %v822, %v1437
        %v1439 = vpop.f32.mrb[0].mxu0
        %v1440 = vadd.f32 %v822, %v1439
        %v1441 = vpop.f32.mrb[0].mxu0
        %v1442 = vadd.f32 %v827, %v1441
        %v1443 = vpop.f32.mrb[0].mxu0
        %v1444 = vadd.f32 %v827, %v1443
        %1445 = vmatprep.mubr.bf16.mxu0 0
        %1446 = vmatmul.mubr.bf16.gmra.mrb[0].mxu0 %v1178
        %v1447 = vpop.f32.mrb[0].mxu0
        %v1448 = vadd.f32 %v832, %v1447
        %v1449 = vpop.f32.mrb[0].mxu0
        %v1450 = vadd.f32 %v832, %v1449
        %v1451 = vpop.f32.mrb[0].mxu0
        %v1452 = vadd.f32 %v837, %v1451
        %v1453 = vpop.f32.mrb[0].mxu0
        %v1454 = vadd.f32 %v837, %v1453
        %1455 = vmatprep.mubr.bf16.mxu0 0
        %1456 = vmatmul.mubr.bf16.gmra.mrb[0].mxu0 %v1181
        %v1457 = vpop.f32.mrb[0].mxu0
        %v1458 = vadd.f32 %v842, %v1457
        %v1459 = vpop.f32.mrb[0].mxu0
        %v1460 = vadd.f32 %v842, %v1459
        %v1461 = vpop.f32.mrb[0].mxu0
        %v1462 = vadd.f32 %v847, %v1461
        %v1463 = vpop.f32.mrb[0].mxu0
        %v1464 = vadd.f32 %v847, %v1463
        %1465 = vmatprep.mubr.bf16.mxu0 0
        %1466 = vmatmul.mubr.bf16.gmra.mrb[0].mxu0 %v1184
        %v1467 = vpop.f32.mrb[0].mxu0
        %v1468 = vadd.f32 %v852, %v1467
        %v1469 = vpop.f32.mrb[0].mxu0
        %v1470 = vadd.f32 %v852, %v1469
        %v1471 = vpop.f32.mrb[0].mxu0
        %v1472 = vadd.f32 %v857, %v1471
        %v1473 = vpop.f32.mrb[0].mxu0
        %v1474 = vadd.f32 %v857, %v1473
        %1475 = vmatprep.mubr.bf16.mxu0 0
        %1476 = vmatmul.mubr.bf16.gmra.mrb[0].mxu0 %v1187
        %v1477 = vpop.f32.mrb[0].mxu0
        %v1478 = vadd.f32 %v862, %v1477
        %v1479 = vpop.f32.mrb[0].mxu0
        %v1480 = vadd.f32 %v862, %v1479
        %v1481 = vpop.f32.mrb[0].mxu0
        %v1482 = vadd.f32 %v867, %v1481
        %v1483 = vpop.f32.mrb[0].mxu0
        %v1484 = vadd.f32 %v867, %v1483
        %1485 = vmatprep.mubr.bf16.mxu0 0
        %1486 = vmatmul.mubr.bf16.gmra.mrb[0].mxu0 %v1190
        %v1487 = vpop.f32.mrb[0].mxu0
        %v1488 = vadd.f32 %v872, %v1487
        %v1489 = vpop.f32.mrb[0].mxu0
        %v1490 = vadd.f32 %v872, %v1489
        %v1491 = vpop.f32.mrb[0].mxu0
        %v1492 = vadd.f32 %v877, %v1491
        %v1493 = vpop.f32.mrb[0].mxu0
        %v1494 = vadd.f32 %v877, %v1493
        %1495 = vmatprep.mubr.bf16.mxu0 0
        %1496 = vmatmul.mubr.bf16.gmra.mrb[0].mxu0 %v1193
        %v1497 = vpop.f32.mrb[0].mxu0
        %v1498 = vadd.f32 %v882, %v1497
        %v1499 = vpop.f32.mrb[0].mxu0
        %v1500 = vadd.f32 %v882, %v1499
        %v1501 = vpop.f32.mrb[0].mxu0
        %v1502 = vadd.f32 %v887, %v1501
        %v1503 = vpop.f32.mrb[0].mxu0
        %v1504 = vadd.f32 %v887, %v1503
        %1505 = vmatprep.mubr.bf16.mxu0 0
        %1506 = vmatmul.mubr.bf16.gmra.mrb[0].mxu0 %v1196
        %v1507 = vpop.f32.mrb[0].mxu0
        %v1508 = vadd.f32 %v892, %v1507
        %v1509 = vpop.f32.mrb[0].mxu0
        %v1510 = vadd.f32 %v892, %v1509
        %v1511 = vpop.f32.mrb[0].mxu0
        %v1512 = vadd.f32 %v897, %v1511
        %v1513 = vpop.f32.mrb[0].mxu0
        %v1514 = vadd.f32 %v897, %v1513
        %1515 = vmatprep.mubr.bf16.mxu0 0
        %1516 = vmatmul.mubr.bf16.gmra.mrb[0].mxu0 %v1199
        %v1517 = vpop.f32.mrb[0].mxu0
        %v1518 = vadd.f32 %v902, %v1517
        %v1519 = vpop.f32.mrb[0].mxu0
        %v1520 = vadd.f32 %v902, %v1519
        %v1521 = vpop.f32.mrb[0].mxu0
        %v1522 = vadd.f32 %v907, %v1521
        %v1523 = vpop.f32.mrb[0].mxu0
        %v1524 = vadd.f32 %v907, %v1523
        %1525 = vmatprep.mubr.bf16.mxu0 0
        %1526 = vmatmul.mubr.bf16.gmra.mrb[0].mxu0 %v1202
        %v1527 = vpop.f32.mrb[0].mxu0
        %v1528 = vadd.f32 %v912, %v1527
        %v1529 = vpop.f32.mrb[0].mxu0
        %v1530 = vadd.f32 %v912, %v1529
        %v1531 = vpop.f32.mrb[0].mxu0
        %v1532 = vadd.f32 %v917, %v1531
        %v1533 = vpop.f32.mrb[0].mxu0
        %v1534 = vadd.f32 %v917, %v1533
        %1535 = vmatprep.mubr.bf16.mxu0 0
        %1536 = vmatmul.mubr.bf16.gmra.mrb[0].mxu0 %v1205
        %v1537 = vpop.f32.mrb[0].mxu0
        %v1538 = vadd.f32 %v922, %v1537
        %v1539 = vpop.f32.mrb[0].mxu0
        %v1540 = vadd.f32 %v922, %v1539
        %v1541 = vpop.f32.mrb[0].mxu0
        %v1542 = vadd.f32 %v927, %v1541
        %v1543 = vpop.f32.mrb[0].mxu0
        %v1544 = vadd.f32 %v927, %v1543
        %1545 = vmatprep.mubr.bf16.mxu0 0
        %1546 = vmatmul.mubr.bf16.gmra.mrb[0].mxu0 %v1208
        %v1547 = vpop.f32.mrb[0].mxu0
        %v1548 = vadd.f32 %v932, %v1547
        %v1549 = vpop.f32.mrb[0].mxu0
        %v1550 = vadd.f32 %v932, %v1549
        %v1551 = vpop.f32.mrb[0].mxu0
        %v1552 = vadd.f32 %v937, %v1551
        %v1553 = vpop.f32.mrb[0].mxu0
        %v1554 = vadd.f32 %v937, %v1553
        %1555 = vmatprep.mubr.bf16.mxu0 0
        %1556 = vmatmul.mubr.bf16.gmra.mrb[0].mxu0 %v1211
        %v1557 = vpop.f32.mrb[0].mxu0
        %v1558 = vadd.f32 %v942, %v1557
        %v1559 = vpop.f32.mrb[0].mxu0
        %v1560 = vadd.f32 %v942, %v1559
        %v1561 = vpop.f32.mrb[0].mxu0
        %v1562 = vadd.f32 %v947, %v1561
        %v1563 = vpop.f32.mrb[0].mxu0
        %v1564 = vadd.f32 %v947, %v1563
        %1565 = vmatprep.mubr.bf16.mxu0 0
        %1566 = vmatmul.mubr.bf16.gmra.mrb[0].mxu0 %v1214
        %v1567 = vpop.f32.mrb[0].mxu0
        %v1568 = vadd.f32 %v952, %v1567
        %v1569 = vpop.f32.mrb[0].mxu0
        %v1570 = vadd.f32 %v952, %v1569
        %v1571 = vpop.f32.mrb[0].mxu0
        %v1572 = vadd.f32 %v957, %v1571
        %v1573 = vpop.f32.mrb[0].mxu0
        %v1574 = vadd.f32 %v957, %v1573
        %1575 = vdwg.mxu0
        %v1576 = vmax.f32 %v1258, 0.0
        %v1577 = vmax.f32 %v1260, 0.0
        %v1578 = vmax.f32 %v1262, 0.0
        %v1579 = vmax.f32 %v1264, 0.0
        %v1580 = vmax.f32 %v1268, 0.0
        %v1581 = vmax.f32 %v1270, 0.0
        %v1582 = vmax.f32 %v1272, 0.0
        %v1583 = vmax.f32 %v1274, 0.0
        %v1584 = vmax.f32 %v1278, 0.0
        %v1585 = vmax.f32 %v1280, 0.0
        %v1586 = vmax.f32 %v1282, 0.0
        %v1587 = vmax.f32 %v1284, 0.0
        %v1588 = vmax.f32 %v1288, 0.0
        %v1589 = vmax.f32 %v1290, 0.0
        %v1590 = vmax.f32 %v1292, 0.0
        %v1591 = vmax.f32 %v1294, 0.0
        %v1592 = vmax.f32 %v1298, 0.0
        %v1593 = vmax.f32 %v1300, 0.0
        %v1594 = vmax.f32 %v1302, 0.0
        %v1595 = vmax.f32 %v1304, 0.0
        %v1596 = vmax.f32 %v1308, 0.0
        %v1597 = vmax.f32 %v1310, 0.0
        %v1598 = vmax.f32 %v1312, 0.0
        %v1599 = vmax.f32 %v1314, 0.0
        %v1600 = vmax.f32 %v1318, 0.0
        %v1601 = vmax.f32 %v1320, 0.0
        %v1602 = vmax.f32 %v1322, 0.0
        %v1603 = vmax.f32 %v1324, 0.0
        %v1604 = vmax.f32 %v1328, 0.0
        %v1605 = vmax.f32 %v1330, 0.0
        %v1606 = vmax.f32 %v1332, 0.0
        %v1607 = vmax.f32 %v1334, 0.0
        %v1608 = vmax.f32 %v1338, 0.0
        %v1609 = vmax.f32 %v1340, 0.0
        %v1610 = vmax.f32 %v1342, 0.0
        %v1611 = vmax.f32 %v1344, 0.0
        %v1612 = vmax.f32 %v1348, 0.0
        %v1613 = vmax.f32 %v1350, 0.0
        %v1614 = vmax.f32 %v1352, 0.0
        %v1615 = vmax.f32 %v1354, 0.0
        %v1616 = vmax.f32 %v1358, 0.0
        %v1617 = vmax.f32 %v1360, 0.0
        %v1618 = vmax.f32 %v1362, 0.0
        %v1619 = vmax.f32 %v1364, 0.0
        %v1620 = vmax.f32 %v1368, 0.0
        %v1621 = vmax.f32 %v1370, 0.0
        %v1622 = vmax.f32 %v1372, 0.0
        %v1623 = vmax.f32 %v1374, 0.0
        %v1624 = vmax.f32 %v1378, 0.0
        %v1625 = vmax.f32 %v1380, 0.0
        %v1626 = vmax.f32 %v1382, 0.0
        %v1627 = vmax.f32 %v1384, 0.0
        %v1628 = vmax.f32 %v1388, 0.0
        %v1629 = vmax.f32 %v1390, 0.0
        %v1630 = vmax.f32 %v1392, 0.0
        %v1631 = vmax.f32 %v1394, 0.0
        %v1632 = vmax.f32 %v1398, 0.0
        %v1633 = vmax.f32 %v1400, 0.0
        %v1634 = vmax.f32 %v1402, 0.0
        %v1635 = vmax.f32 %v1404, 0.0
        %v1636 = vmax.f32 %v1408, 0.0
        %v1637 = vmax.f32 %v1410, 0.0
        %v1638 = vmax.f32 %v1412, 0.0
        %v1639 = vmax.f32 %v1414, 0.0
        %v1640 = vmax.f32 %v1418, 0.0
        %v1641 = vmax.f32 %v1420, 0.0
        %v1642 = vmax.f32 %v1422, 0.0
        %v1643 = vmax.f32 %v1424, 0.0
        %v1644 = vmax.f32 %v1428, 0.0
        %v1645 = vmax.f32 %v1430, 0.0
        %v1646 = vmax.f32 %v1432, 0.0
        %v1647 = vmax.f32 %v1434, 0.0
        %v1648 = vmax.f32 %v1438, 0.0
        %v1649 = vmax.f32 %v1440, 0.0
        %v1650 = vmax.f32 %v1442, 0.0
        %v1651 = vmax.f32 %v1444, 0.0
        %v1652 = vmax.f32 %v1448, 0.0
        %v1653 = vmax.f32 %v1450, 0.0
        %v1654 = vmax.f32 %v1452, 0.0
        %v1655 = vmax.f32 %v1454, 0.0
        %v1656 = vmax.f32 %v1458, 0.0
        %v1657 = vmax.f32 %v1460, 0.0
        %v1658 = vmax.f32 %v1462, 0.0
        %v1659 = vmax.f32 %v1464, 0.0
        %v1660 = vmax.f32 %v1468, 0.0
        %v1661 = vmax.f32 %v1470, 0.0
        %v1662 = vmax.f32 %v1472, 0.0
        %v1663 = vmax.f32 %v1474, 0.0
        %v1664 = vmax.f32 %v1478, 0.0
        %v1665 = vmax.f32 %v1480, 0.0
        %v1666 = vmax.f32 %v1482, 0.0
        %v1667 = vmax.f32 %v1484, 0.0
        %v1668 = vmax.f32 %v1488, 0.0
        %v1669 = vmax.f32 %v1490, 0.0
        %v1670 = vmax.f32 %v1492, 0.0
        %v1671 = vmax.f32 %v1494, 0.0
        %v1672 = vmax.f32 %v1498, 0.0
        %v1673 = vmax.f32 %v1500, 0.0
        %v1674 = vmax.f32 %v1502, 0.0
        %v1675 = vmax.f32 %v1504, 0.0
        %v1676 = vmax.f32 %v1508, 0.0
        %v1677 = vmax.f32 %v1510, 0.0
        %v1678 = vmax.f32 %v1512, 0.0
        %v1679 = vmax.f32 %v1514, 0.0
        %v1680 = vmax.f32 %v1518, 0.0
        %v1681 = vmax.f32 %v1520, 0.0
        %v1682 = vmax.f32 %v1522, 0.0
        %v1683 = vmax.f32 %v1524, 0.0
        %v1684 = vmax.f32 %v1528, 0.0
        %v1685 = vmax.f32 %v1530, 0.0
        %v1686 = vmax.f32 %v1532, 0.0
        %v1687 = vmax.f32 %v1534, 0.0
        %v1688 = vmax.f32 %v1538, 0.0
        %v1689 = vmax.f32 %v1540, 0.0
        %v1690 = vmax.f32 %v1542, 0.0
        %v1691 = vmax.f32 %v1544, 0.0
        %v1692 = vmax.f32 %v1548, 0.0
        %v1693 = vmax.f32 %v1550, 0.0
        %v1694 = vmax.f32 %v1552, 0.0
        %v1695 = vmax.f32 %v1554, 0.0
        %v1696 = vmax.f32 %v1558, 0.0
        %v1697 = vmax.f32 %v1560, 0.0
        %v1698 = vmax.f32 %v1562, 0.0
        %v1699 = vmax.f32 %v1564, 0.0
        %v1700 = vmax.f32 %v1568, 0.0
        %v1701 = vmax.f32 %v1570, 0.0
        %v1702 = vmax.f32 %v1572, 0.0
        %v1703 = vmax.f32 %v1574, 0.0
        %v1704 = vpack.c.bf16 %v1578, %v1576
        %v1705 = vpack.c.bf16 %v1579, %v1577
        %v1706 = vpack.c.bf16 %v1582, %v1580
        %v1707 = vpack.c.bf16 %v1583, %v1581
        %v1708 = vpack.c.bf16 %v1586, %v1584
        %v1709 = vpack.c.bf16 %v1587, %v1585
        %v1710 = vpack.c.bf16 %v1590, %v1588
        %v1711 = vpack.c.bf16 %v1591, %v1589
        %v1712 = vpack.c.bf16 %v1594, %v1592
        %v1713 = vpack.c.bf16 %v1595, %v1593
        %v1714 = vpack.c.bf16 %v1598, %v1596
        %v1715 = vpack.c.bf16 %v1599, %v1597
        %v1716 = vpack.c.bf16 %v1602, %v1600
        %v1717 = vpack.c.bf16 %v1603, %v1601
        %v1718 = vpack.c.bf16 %v1606, %v1604
        %v1719 = vpack.c.bf16 %v1607, %v1605
        %v1720 = vpack.c.bf16 %v1610, %v1608
        %v1721 = vpack.c.bf16 %v1611, %v1609
        %v1722 = vpack.c.bf16 %v1614, %v1612
        %v1723 = vpack.c.bf16 %v1615, %v1613
        %v1724 = vpack.c.bf16 %v1618, %v1616
        %v1725 = vpack.c.bf16 %v1619, %v1617
        %v1726 = vpack.c.bf16 %v1622, %v1620
        %v1727 = vpack.c.bf16 %v1623, %v1621
        %v1728 = vpack.c.bf16 %v1626, %v1624
        %v1729 = vpack.c.bf16 %v1627, %v1625
        %v1730 = vpack.c.bf16 %v1630, %v1628
        %v1731 = vpack.c.bf16 %v1631, %v1629
        %v1732 = vpack.c.bf16 %v1634, %v1632
        %v1733 = vpack.c.bf16 %v1635, %v1633
        %v1734 = vpack.c.bf16 %v1638, %v1636
        %v1735 = vpack.c.bf16 %v1639, %v1637
        %v1736 = vpack.c.bf16 %v1642, %v1640
        %v1737 = vpack.c.bf16 %v1643, %v1641
        %v1738 = vpack.c.bf16 %v1646, %v1644
        %v1739 = vpack.c.bf16 %v1647, %v1645
        %v1740 = vpack.c.bf16 %v1650, %v1648
        %v1741 = vpack.c.bf16 %v1651, %v1649
        %v1742 = vpack.c.bf16 %v1654, %v1652
        %v1743 = vpack.c.bf16 %v1655, %v1653
        %v1744 = vpack.c.bf16 %v1658, %v1656
        %v1745 = vpack.c.bf16 %v1659, %v1657
        %v1746 = vpack.c.bf16 %v1662, %v1660
        %v1747 = vpack.c.bf16 %v1663, %v1661
        %v1748 = vpack.c.bf16 %v1666, %v1664
        %v1749 = vpack.c.bf16 %v1667, %v1665
        %v1750 = vpack.c.bf16 %v1670, %v1668
        %v1751 = vpack.c.bf16 %v1671, %v1669
        %v1752 = vpack.c.bf16 %v1674, %v1672
        %v1753 = vpack.c.bf16 %v1675, %v1673
        %v1754 = vpack.c.bf16 %v1678, %v1676
        %v1755 = vpack.c.bf16 %v1679, %v1677
        %v1756 = vpack.c.bf16 %v1682, %v1680
        %v1757 = vpack.c.bf16 %v1683, %v1681
        %v1758 = vpack.c.bf16 %v1686, %v1684
        %v1759 = vpack.c.bf16 %v1687, %v1685
        %v1760 = vpack.c.bf16 %v1690, %v1688
        %v1761 = vpack.c.bf16 %v1691, %v1689
        %v1762 = vpack.c.bf16 %v1694, %v1692
        %v1763 = vpack.c.bf16 %v1695, %v1693
        %v1764 = vpack.c.bf16 %v1698, %v1696
        %v1765 = vpack.c.bf16 %v1699, %v1697
        %v1766 = vpack.c.bf16 %v1702, %v1700
        %v1767 = vpack.c.bf16 %v1703, %v1701
        %1769 = vset.pattern.permute.xlu0 0
        %1770 = vperm.xlu0 %1769, %v567
        %v1771 = vpop.permute.xlu0 %1770
        %1774 = vset.pattern.permute.xlu0 0
        %1775 = vperm.xlu0 %1774, %v568
        %v1776 = vpop.permute.xlu0 %1775
        %1779 = vset.pattern.permute.xlu0 0
        %1780 = vperm.xlu0 %1779, %v569
        %v1781 = vpop.permute.xlu0 %1780
        %1784 = vset.pattern.permute.xlu0 0
        %1785 = vperm.xlu0 %1784, %v570
        %v1786 = vpop.permute.xlu0 %1785
        %1789 = vset.pattern.permute.xlu0 0
        %1790 = vperm.xlu0 %1789, %v571
        %v1791 = vpop.permute.xlu0 %1790
        %1794 = vset.pattern.permute.xlu0 0
        %1795 = vperm.xlu0 %1794, %v572
        %v1796 = vpop.permute.xlu0 %1795
        %1799 = vset.pattern.permute.xlu0 0
        %1800 = vperm.xlu0 %1799, %v573
        %v1801 = vpop.permute.xlu0 %1800
        %1804 = vset.pattern.permute.xlu0 0
        %1805 = vperm.xlu0 %1804, %v574
        %v1806 = vpop.permute.xlu0 %1805
        %1809 = vset.pattern.permute.xlu0 0
        %1810 = vperm.xlu0 %1809, %v575
        %v1811 = vpop.permute.xlu0 %1810
        %1814 = vset.pattern.permute.xlu0 0
        %1815 = vperm.xlu0 %1814, %v576
        %v1816 = vpop.permute.xlu0 %1815
        %1819 = vset.pattern.permute.xlu0 0
        %1820 = vperm.xlu0 %1819, %v577
        %v1821 = vpop.permute.xlu0 %1820
        %1824 = vset.pattern.permute.xlu0 0
        %1825 = vperm.xlu0 %1824, %v578
        %v1826 = vpop.permute.xlu0 %1825
        %1829 = vset.pattern.permute.xlu0 0
        %1830 = vperm.xlu0 %1829, %v579
        %v1831 = vpop.permute.xlu0 %1830
        %1834 = vset.pattern.permute.xlu0 0
        %1835 = vperm.xlu0 %1834, %v580
        %v1836 = vpop.permute.xlu0 %1835
        %1839 = vset.pattern.permute.xlu0 0
        %1840 = vperm.xlu0 %1839, %v581
        %v1841 = vpop.permute.xlu0 %1840
        %1844 = vset.pattern.permute.xlu0 0
        %1845 = vperm.xlu0 %1844, %v582
        %v1846 = vpop.permute.xlu0 %1845
        %1849 = vset.pattern.permute.xlu0 0
        %1850 = vperm.xlu0 %1849, %v583
        %v1851 = vpop.permute.xlu0 %1850
        %1854 = vset.pattern.permute.xlu0 0
        %1855 = vperm.xlu0 %1854, %v584
        %v1856 = vpop.permute.xlu0 %1855
        %1859 = vset.pattern.permute.xlu0 0
        %1860 = vperm.xlu0 %1859, %v585
        %v1861 = vpop.permute.xlu0 %1860
        %1864 = vset.pattern.permute.xlu0 0
        %1865 = vperm.xlu0 %1864, %v586
        %v1866 = vpop.permute.xlu0 %1865
        %1869 = vset.pattern.permute.xlu0 0
        %1870 = vperm.xlu0 %1869, %v587
        %v1871 = vpop.permute.xlu0 %1870
        %1874 = vset.pattern.permute.xlu0 0
        %1875 = vperm.xlu0 %1874, %v588
        %v1876 = vpop.permute.xlu0 %1875
        %1879 = vset.pattern.permute.xlu0 0
        %1880 = vperm.xlu0 %1879, %v589
        %v1881 = vpop.permute.xlu0 %1880
        %1884 = vset.pattern.permute.xlu0 0
        %1885 = vperm.xlu0 %1884, %v590
        %v1886 = vpop.permute.xlu0 %1885
        %1889 = vset.pattern.permute.xlu0 0
        %1890 = vperm.xlu0 %1889, %v591
        %v1891 = vpop.permute.xlu0 %1890
        %1894 = vset.pattern.permute.xlu0 0
        %1895 = vperm.xlu0 %1894, %v592
        %v1896 = vpop.permute.xlu0 %1895
        %1899 = vset.pattern.permute.xlu0 0
        %1900 = vperm.xlu0 %1899, %v593
        %v1901 = vpop.permute.xlu0 %1900
        %1904 = vset.pattern.permute.xlu0 0
        %1905 = vperm.xlu0 %1904, %v594
        %v1906 = vpop.permute.xlu0 %1905
        %1909 = vset.pattern.permute.xlu0 0
        %1910 = vperm.xlu0 %1909, %v595
        %v1911 = vpop.permute.xlu0 %1910
        %1914 = vset.pattern.permute.xlu0 0
        %1915 = vperm.xlu0 %1914, %v596
        %v1916 = vpop.permute.xlu0 %1915
        %1919 = vset.pattern.permute.xlu0 0
        %1920 = vperm.xlu0 %1919, %v597
        %v1921 = vpop.permute.xlu0 %1920
        %1924 = vset.pattern.permute.xlu0 0
        %1925 = vperm.xlu0 %1924, %v598
        %v1926 = vpop.permute.xlu0 %1925
        %1929 = vset.pattern.permute.xlu0 0
        %1930 = vperm.xlu0 %1929, %v599
        %v1931 = vpop.permute.xlu0 %1930
        %1934 = vset.pattern.permute.xlu0 0
        %1935 = vperm.xlu0 %1934, %v600
        %v1936 = vpop.permute.xlu0 %1935
        %1939 = vset.pattern.permute.xlu0 0
        %1940 = vperm.xlu0 %1939, %v601
        %v1941 = vpop.permute.xlu0 %1940
        %1944 = vset.pattern.permute.xlu0 0
        %1945 = vperm.xlu0 %1944, %v602
        %v1946 = vpop.permute.xlu0 %1945
        %1949 = vset.pattern.permute.xlu0 0
        %1950 = vperm.xlu0 %1949, %v603
        %v1951 = vpop.permute.xlu0 %1950
        %1954 = vset.pattern.permute.xlu0 0
        %1955 = vperm.xlu0 %1954, %v604
        %v1956 = vpop.permute.xlu0 %1955
        %1959 = vset.pattern.permute.xlu0 0
        %1960 = vperm.xlu0 %1959, %v605
        %v1961 = vpop.permute.xlu0 %1960
        %1964 = vset.pattern.permute.xlu0 0
        %1965 = vperm.xlu0 %1964, %v606
        %v1966 = vpop.permute.xlu0 %1965
        %1969 = vset.pattern.permute.xlu0 0
        %1970 = vperm.xlu0 %1969, %v607
        %v1971 = vpop.permute.xlu0 %1970
        %1974 = vset.pattern.permute.xlu0 0
        %1975 = vperm.xlu0 %1974, %v608
        %v1976 = vpop.permute.xlu0 %1975
        %1979 = vset.pattern.permute.xlu0 0
        %1980 = vperm.xlu0 %1979, %v609
        %v1981 = vpop.permute.xlu0 %1980
        %1984 = vset.pattern.permute.xlu0 0
        %1985 = vperm.xlu0 %1984, %v610
        %v1986 = vpop.permute.xlu0 %1985
        %1989 = vset.pattern.permute.xlu0 0
        %1990 = vperm.xlu0 %1989, %v611
        %v1991 = vpop.permute.xlu0 %1990
        %1994 = vset.pattern.permute.xlu0 0
        %1995 = vperm.xlu0 %1994, %v612
        %v1996 = vpop.permute.xlu0 %1995
        %1999 = vset.pattern.permute.xlu0 0
        %2000 = vperm.xlu0 %1999, %v613
        %v2001 = vpop.permute.xlu0 %2000
        %2004 = vset.pattern.permute.xlu0 0
        %2005 = vperm.xlu0 %2004, %v614
        %v2006 = vpop.permute.xlu0 %2005
        %2009 = vset.pattern.permute.xlu0 0
        %2010 = vperm.xlu0 %2009, %v615
        %v2011 = vpop.permute.xlu0 %2010
        %2014 = vset.pattern.permute.xlu0 0
        %2015 = vperm.xlu0 %2014, %v616
        %v2016 = vpop.permute.xlu0 %2015
        %2019 = vset.pattern.permute.xlu0 0
        %2020 = vperm.xlu0 %2019, %v617
        %v2021 = vpop.permute.xlu0 %2020
        %2024 = vset.pattern.permute.xlu0 0
        %2025 = vperm.xlu0 %2024, %v618
        %v2026 = vpop.permute.xlu0 %2025
        %2029 = vset.pattern.permute.xlu0 0
        %2030 = vperm.xlu0 %2029, %v619
        %v2031 = vpop.permute.xlu0 %2030
        %2034 = vset.pattern.permute.xlu0 0
        %2035 = vperm.xlu0 %2034, %v620
        %v2036 = vpop.permute.xlu0 %2035
        %2039 = vset.pattern.permute.xlu0 0
        %2040 = vperm.xlu0 %2039, %v621
        %v2041 = vpop.permute.xlu0 %2040
        %2044 = vset.pattern.permute.xlu0 0
        %2045 = vperm.xlu0 %2044, %v622
        %v2046 = vpop.permute.xlu0 %2045
        %2049 = vset.pattern.permute.xlu0 0
        %2050 = vperm.xlu0 %2049, %v623
        %v2051 = vpop.permute.xlu0 %2050
        %2054 = vset.pattern.permute.xlu0 0
        %2055 = vperm.xlu0 %2054, %v624
        %v2056 = vpop.permute.xlu0 %2055
        %2059 = vset.pattern.permute.xlu0 0
        %2060 = vperm.xlu0 %2059, %v625
        %v2061 = vpop.permute.xlu0 %2060
        %2064 = vset.pattern.permute.xlu0 0
        %2065 = vperm.xlu0 %2064, %v626
        %v2066 = vpop.permute.xlu0 %2065
        %2069 = vset.pattern.permute.xlu0 0
        %2070 = vperm.xlu0 %2069, %v627
        %v2071 = vpop.permute.xlu0 %2070
        %2074 = vset.pattern.permute.xlu0 0
        %2075 = vperm.xlu0 %2074, %v628
        %v2076 = vpop.permute.xlu0 %2075
        %2079 = vset.pattern.permute.xlu0 0
        %2080 = vperm.xlu0 %2079, %v629
        %v2081 = vpop.permute.xlu0 %2080
        %2084 = vset.pattern.permute.xlu0 0
        %2085 = vperm.xlu0 %2084, %v630
        %v2086 = vpop.permute.xlu0 %2085
        %v2216 = vunpack.c.l.b16 %v439
        %v2217 = vunpack.c.h.b16 %v439
        %v2218 = vunpack.c.l.b16 %v440
        %v2219 = vunpack.c.h.b16 %v440
        %v2220 = vunpack.c.l.b16 %v441
        %v2221 = vunpack.c.h.b16 %v441
        %v2222 = vunpack.c.l.b16 %v442
        %v2223 = vunpack.c.h.b16 %v442
        %v2224 = vunpack.c.l.b16 %v443
        %v2225 = vunpack.c.h.b16 %v443
        %v2226 = vunpack.c.l.b16 %v444
        %v2227 = vunpack.c.h.b16 %v444
        %v2228 = vunpack.c.l.b16 %v445
        %v2229 = vunpack.c.h.b16 %v445
        %v2230 = vunpack.c.l.b16 %v446
        %v2231 = vunpack.c.h.b16 %v446
        %v2232 = vunpack.c.l.b16 %v447
        %v2233 = vunpack.c.h.b16 %v447
        %v2234 = vunpack.c.l.b16 %v448
        %v2235 = vunpack.c.h.b16 %v448
        %v2236 = vunpack.c.l.b16 %v449
        %v2237 = vunpack.c.h.b16 %v449
        %v2238 = vunpack.c.l.b16 %v450
        %v2239 = vunpack.c.h.b16 %v450
        %v2240 = vunpack.c.l.b16 %v451
        %v2241 = vunpack.c.h.b16 %v451
        %v2242 = vunpack.c.l.b16 %v452
        %v2243 = vunpack.c.h.b16 %v452
        %v2244 = vunpack.c.l.b16 %v453
        %v2245 = vunpack.c.h.b16 %v453
        %v2246 = vunpack.c.l.b16 %v454
        %v2247 = vunpack.c.h.b16 %v454
        %v2248 = vunpack.c.l.b16 %v455
        %v2249 = vunpack.c.h.b16 %v455
        %v2250 = vunpack.c.l.b16 %v456
        %v2251 = vunpack.c.h.b16 %v456
        %v2252 = vunpack.c.l.b16 %v457
        %v2253 = vunpack.c.h.b16 %v457
        %v2254 = vunpack.c.l.b16 %v458
        %v2255 = vunpack.c.h.b16 %v458
        %v2256 = vunpack.c.l.b16 %v459
        %v2257 = vunpack.c.h.b16 %v459
        %v2258 = vunpack.c.l.b16 %v460
        %v2259 = vunpack.c.h.b16 %v460
        %v2260 = vunpack.c.l.b16 %v461
        %v2261 = vunpack.c.h.b16 %v461
        %v2262 = vunpack.c.l.b16 %v462
        %v2263 = vunpack.c.h.b16 %v462
        %v2264 = vunpack.c.l.b16 %v463
        %v2265 = vunpack.c.h.b16 %v463
        %v2266 = vunpack.c.l.b16 %v464
        %v2267 = vunpack.c.h.b16 %v464
        %v2268 = vunpack.c.l.b16 %v465
        %v2269 = vunpack.c.h.b16 %v465
        %v2270 = vunpack.c.l.b16 %v466
        %v2271 = vunpack.c.h.b16 %v466
        %v2272 = vunpack.c.l.b16 %v467
        %v2273 = vunpack.c.h.b16 %v467
        %v2274 = vunpack.c.l.b16 %v468
        %v2275 = vunpack.c.h.b16 %v468
        %v2276 = vunpack.c.l.b16 %v469
        %v2277 = vunpack.c.h.b16 %v469
        %v2278 = vunpack.c.l.b16 %v470
        %v2279 = vunpack.c.h.b16 %v470
        %v2280 = vunpack.c.l.b16 %v471
        %v2281 = vunpack.c.h.b16 %v471
        %v2282 = vunpack.c.l.b16 %v472
        %v2283 = vunpack.c.h.b16 %v472
        %v2284 = vunpack.c.l.b16 %v473
        %v2285 = vunpack.c.h.b16 %v473
        %v2286 = vunpack.c.l.b16 %v474
        %v2287 = vunpack.c.h.b16 %v474
        %v2288 = vunpack.c.l.b16 %v475
        %v2289 = vunpack.c.h.b16 %v475
        %v2290 = vunpack.c.l.b16 %v476
        %v2291 = vunpack.c.h.b16 %v476
        %v2292 = vunpack.c.l.b16 %v477
        %v2293 = vunpack.c.h.b16 %v477
        %v2294 = vunpack.c.l.b16 %v478
        %v2295 = vunpack.c.h.b16 %v478
        %v2296 = vunpack.c.l.b16 %v479
        %v2297 = vunpack.c.h.b16 %v479
        %v2298 = vunpack.c.l.b16 %v480
        %v2299 = vunpack.c.h.b16 %v480
        %v2300 = vunpack.c.l.b16 %v481
        %v2301 = vunpack.c.h.b16 %v481
        %v2302 = vunpack.c.l.b16 %v482
        %v2303 = vunpack.c.h.b16 %v482
        %v2304 = vunpack.c.l.b16 %v483
        %v2305 = vunpack.c.h.b16 %v483
        %v2306 = vunpack.c.l.b16 %v484
        %v2307 = vunpack.c.h.b16 %v484
        %v2308 = vunpack.c.l.b16 %v485
        %v2309 = vunpack.c.h.b16 %v485
        %v2310 = vunpack.c.l.b16 %v486
        %v2311 = vunpack.c.h.b16 %v486
        %v2312 = vunpack.c.l.b16 %v487
        %v2313 = vunpack.c.h.b16 %v487
        %v2314 = vunpack.c.l.b16 %v488
        %v2315 = vunpack.c.h.b16 %v488
        %v2316 = vunpack.c.l.b16 %v489
        %v2317 = vunpack.c.h.b16 %v489
        %v2318 = vunpack.c.l.b16 %v490
        %v2319 = vunpack.c.h.b16 %v490
        %v2320 = vunpack.c.l.b16 %v491
        %v2321 = vunpack.c.h.b16 %v491
        %v2322 = vunpack.c.l.b16 %v492
        %v2323 = vunpack.c.h.b16 %v492
        %v2324 = vunpack.c.l.b16 %v493
        %v2325 = vunpack.c.h.b16 %v493
        %v2326 = vunpack.c.l.b16 %v494
        %v2327 = vunpack.c.h.b16 %v494
        %v2328 = vunpack.c.l.b16 %v495
        %v2329 = vunpack.c.h.b16 %v495
        %v2330 = vunpack.c.l.b16 %v496
        %v2331 = vunpack.c.h.b16 %v496
        %v2332 = vunpack.c.l.b16 %v497
        %v2333 = vunpack.c.h.b16 %v497
        %v2334 = vunpack.c.l.b16 %v498
        %v2335 = vunpack.c.h.b16 %v498
        %v2336 = vunpack.c.l.b16 %v499
        %v2337 = vunpack.c.h.b16 %v499
        %v2338 = vunpack.c.l.b16 %v500
        %v2339 = vunpack.c.h.b16 %v500
        %v2340 = vunpack.c.l.b16 %v501
        %v2341 = vunpack.c.h.b16 %v501
        %v2342 = vunpack.c.l.b16 %v502
        %v2343 = vunpack.c.h.b16 %v502
        %v2344 = vunpack.c.l.b16 %v503
        %v2345 = vunpack.c.h.b16 %v503
        %v2346 = vunpack.c.l.b16 %v504
        %v2347 = vunpack.c.h.b16 %v504
        %v2348 = vunpack.c.l.b16 %v505
        %v2349 = vunpack.c.h.b16 %v505
        %v2350 = vunpack.c.l.b16 %v506
        %v2351 = vunpack.c.h.b16 %v506
        %v2352 = vunpack.c.l.b16 %v507
        %v2353 = vunpack.c.h.b16 %v507
        %v2354 = vunpack.c.l.b16 %v508
        %v2355 = vunpack.c.h.b16 %v508
        %v2356 = vunpack.c.l.b16 %v509
        %v2357 = vunpack.c.h.b16 %v509
        %v2358 = vunpack.c.l.b16 %v510
        %v2359 = vunpack.c.h.b16 %v510
        %v2360 = vunpack.c.l.b16 %v511
        %v2361 = vunpack.c.h.b16 %v511
        %v2362 = vunpack.c.l.b16 %v512
        %v2363 = vunpack.c.h.b16 %v512
        %v2364 = vunpack.c.l.b16 %v513
        %v2365 = vunpack.c.h.b16 %v513
        %v2366 = vunpack.c.l.b16 %v514
        %v2367 = vunpack.c.h.b16 %v514
        %v2368 = vunpack.c.l.b16 %v515
        %v2369 = vunpack.c.h.b16 %v515
        %v2370 = vunpack.c.l.b16 %v516
        %v2371 = vunpack.c.h.b16 %v516
        %v2372 = vunpack.c.l.b16 %v517
        %v2373 = vunpack.c.h.b16 %v517
        %v2374 = vunpack.c.l.b16 %v518
        %v2375 = vunpack.c.h.b16 %v518
        %v2376 = vunpack.c.l.b16 %v519
        %v2377 = vunpack.c.h.b16 %v519
        %v2378 = vunpack.c.l.b16 %v520
        %v2379 = vunpack.c.h.b16 %v520
        %v2380 = vunpack.c.l.b16 %v521
        %v2381 = vunpack.c.h.b16 %v521
        %v2382 = vunpack.c.l.b16 %v522
        %v2383 = vunpack.c.h.b16 %v522
        %v2384 = vunpack.c.l.b16 %v523
        %v2385 = vunpack.c.h.b16 %v523
        %v2386 = vunpack.c.l.b16 %v524
        %v2387 = vunpack.c.h.b16 %v524
        %v2388 = vunpack.c.l.b16 %v525
        %v2389 = vunpack.c.h.b16 %v525
        %v2390 = vunpack.c.l.b16 %v526
        %v2391 = vunpack.c.h.b16 %v526
        %v2392 = vunpack.c.l.b16 %v527
        %v2393 = vunpack.c.h.b16 %v527
        %v2394 = vunpack.c.l.b16 %v528
        %v2395 = vunpack.c.h.b16 %v528
        %v2396 = vunpack.c.l.b16 %v529
        %v2397 = vunpack.c.h.b16 %v529
        %v2398 = vunpack.c.l.b16 %v530
        %v2399 = vunpack.c.h.b16 %v530
        %v2400 = vunpack.c.l.b16 %v531
        %v2401 = vunpack.c.h.b16 %v531
        %v2402 = vunpack.c.l.b16 %v532
        %v2403 = vunpack.c.h.b16 %v532
        %v2404 = vunpack.c.l.b16 %v533
        %v2405 = vunpack.c.h.b16 %v533
        %v2406 = vunpack.c.l.b16 %v534
        %v2407 = vunpack.c.h.b16 %v534
        %v2408 = vunpack.c.l.b16 %v535
        %v2409 = vunpack.c.h.b16 %v535
        %v2410 = vunpack.c.l.b16 %v536
        %v2411 = vunpack.c.h.b16 %v536
        %v2412 = vunpack.c.l.b16 %v537
        %v2413 = vunpack.c.h.b16 %v537
        %v2414 = vunpack.c.l.b16 %v538
        %v2415 = vunpack.c.h.b16 %v538
        %v2416 = vunpack.c.l.b16 %v539
        %v2417 = vunpack.c.h.b16 %v539
        %v2418 = vunpack.c.l.b16 %v540
        %v2419 = vunpack.c.h.b16 %v540
        %v2420 = vunpack.c.l.b16 %v541
        %v2421 = vunpack.c.h.b16 %v541
        %v2422 = vunpack.c.l.b16 %v542
        %v2423 = vunpack.c.h.b16 %v542
        %v2424 = vunpack.c.l.b16 %v543
        %v2425 = vunpack.c.h.b16 %v543
        %v2426 = vunpack.c.l.b16 %v544
        %v2427 = vunpack.c.h.b16 %v544
        %v2428 = vunpack.c.l.b16 %v545
        %v2429 = vunpack.c.h.b16 %v545
        %v2430 = vunpack.c.l.b16 %v546
        %v2431 = vunpack.c.h.b16 %v546
        %v2432 = vunpack.c.l.b16 %v547
        %v2433 = vunpack.c.h.b16 %v547
        %v2434 = vunpack.c.l.b16 %v548
        %v2435 = vunpack.c.h.b16 %v548
        %v2436 = vunpack.c.l.b16 %v549
        %v2437 = vunpack.c.h.b16 %v549
        %v2438 = vunpack.c.l.b16 %v550
        %v2439 = vunpack.c.h.b16 %v550
        %v2440 = vunpack.c.l.b16 %v551
        %v2441 = vunpack.c.h.b16 %v551
        %v2442 = vunpack.c.l.b16 %v552
        %v2443 = vunpack.c.h.b16 %v552
        %v2444 = vunpack.c.l.b16 %v553
        %v2445 = vunpack.c.h.b16 %v553
        %v2446 = vunpack.c.l.b16 %v554
        %v2447 = vunpack.c.h.b16 %v554
        %v2448 = vunpack.c.l.b16 %v555
        %v2449 = vunpack.c.h.b16 %v555
        %v2450 = vunpack.c.l.b16 %v556
        %v2451 = vunpack.c.h.b16 %v556
        %v2452 = vunpack.c.l.b16 %v557
        %v2453 = vunpack.c.h.b16 %v557
        %v2454 = vunpack.c.l.b16 %v558
        %v2455 = vunpack.c.h.b16 %v558
        %v2456 = vunpack.c.l.b16 %v559
        %v2457 = vunpack.c.h.b16 %v559
        %v2458 = vunpack.c.l.b16 %v560
        %v2459 = vunpack.c.h.b16 %v560
        %v2460 = vunpack.c.l.b16 %v561
        %v2461 = vunpack.c.h.b16 %v561
        %v2462 = vunpack.c.l.b16 %v562
        %v2463 = vunpack.c.h.b16 %v562
        %v2464 = vunpack.c.l.b16 %v563
        %v2465 = vunpack.c.h.b16 %v563
        %v2466 = vunpack.c.l.b16 %v564
        %v2467 = vunpack.c.h.b16 %v564
        %v2468 = vunpack.c.l.b16 %v565
        %v2469 = vunpack.c.h.b16 %v565
        %v2470 = vunpack.c.l.b16 %v566
        %v2471 = vunpack.c.h.b16 %v566
        %v2472 = vpack.c.b16 %v2220, %v2216
        %v2473 = vpack.c.b16 %v2221, %v2217
        %v2474 = vpack.c.b16 %v2222, %v2218
        %v2475 = vpack.c.b16 %v2223, %v2219
        %v2476 = vpack.c.b16 %v2228, %v2224
        %v2477 = vpack.c.b16 %v2229, %v2225
        %v2478 = vpack.c.b16 %v2230, %v2226
        %v2479 = vpack.c.b16 %v2231, %v2227
        %v2480 = vpack.c.b16 %v2236, %v2232
        %v2481 = vpack.c.b16 %v2237, %v2233
        %v2482 = vpack.c.b16 %v2238, %v2234
        %v2483 = vpack.c.b16 %v2239, %v2235
        %v2484 = vpack.c.b16 %v2244, %v2240
        %v2485 = vpack.c.b16 %v2245, %v2241
        %v2486 = vpack.c.b16 %v2246, %v2242
        %v2487 = vpack.c.b16 %v2247, %v2243
        %v2488 = vpack.c.b16 %v2252, %v2248
        %v2489 = vpack.c.b16 %v2253, %v2249
        %v2490 = vpack.c.b16 %v2254, %v2250
        %v2491 = vpack.c.b16 %v2255, %v2251
        %v2492 = vpack.c.b16 %v2260, %v2256
        %v2493 = vpack.c.b16 %v2261, %v2257
        %v2494 = vpack.c.b16 %v2262, %v2258
        %v2495 = vpack.c.b16 %v2263, %v2259
        %v2496 = vpack.c.b16 %v2268, %v2264
        %v2497 = vpack.c.b16 %v2269, %v2265
        %v2498 = vpack.c.b16 %v2270, %v2266
        %v2499 = vpack.c.b16 %v2271, %v2267
        %v2500 = vpack.c.b16 %v2276, %v2272
        %v2501 = vpack.c.b16 %v2277, %v2273
        %v2502 = vpack.c.b16 %v2278, %v2274
        %v2503 = vpack.c.b16 %v2279, %v2275
        %v2504 = vpack.c.b16 %v2284, %v2280
        %v2505 = vpack.c.b16 %v2285, %v2281
        %v2506 = vpack.c.b16 %v2286, %v2282
        %v2507 = vpack.c.b16 %v2287, %v2283
        %v2508 = vpack.c.b16 %v2292, %v2288
        %v2509 = vpack.c.b16 %v2293, %v2289
        %v2510 = vpack.c.b16 %v2294, %v2290
        %v2511 = vpack.c.b16 %v2295, %v2291
        %v2512 = vpack.c.b16 %v2300, %v2296
        %v2513 = vpack.c.b16 %v2301, %v2297
        %v2514 = vpack.c.b16 %v2302, %v2298
        %v2515 = vpack.c.b16 %v2303, %v2299
        %v2516 = vpack.c.b16 %v2308, %v2304
        %v2517 = vpack.c.b16 %v2309, %v2305
        %v2518 = vpack.c.b16 %v2310, %v2306
        %v2519 = vpack.c.b16 %v2311, %v2307
        %v2520 = vpack.c.b16 %v2316, %v2312
        %v2521 = vpack.c.b16 %v2317, %v2313
        %v2522 = vpack.c.b16 %v2318, %v2314
        %v2523 = vpack.c.b16 %v2319, %v2315
        %v2524 = vpack.c.b16 %v2324, %v2320
        %v2525 = vpack.c.b16 %v2325, %v2321
        %v2526 = vpack.c.b16 %v2326, %v2322
        %v2527 = vpack.c.b16 %v2327, %v2323
        %v2528 = vpack.c.b16 %v2332, %v2328
        %v2529 = vpack.c.b16 %v2333, %v2329
        %v2530 = vpack.c.b16 %v2334, %v2330
        %v2531 = vpack.c.b16 %v2335, %v2331
        %v2532 = vpack.c.b16 %v2340, %v2336
        %v2533 = vpack.c.b16 %v2341, %v2337
        %v2534 = vpack.c.b16 %v2342, %v2338
        %v2535 = vpack.c.b16 %v2343, %v2339
        %v2536 = vpack.c.b16 %v2348, %v2344
        %v2537 = vpack.c.b16 %v2349, %v2345
        %v2538 = vpack.c.b16 %v2350, %v2346
        %v2539 = vpack.c.b16 %v2351, %v2347
        %v2540 = vpack.c.b16 %v2356, %v2352
        %v2541 = vpack.c.b16 %v2357, %v2353
        %v2542 = vpack.c.b16 %v2358, %v2354
        %v2543 = vpack.c.b16 %v2359, %v2355
        %v2544 = vpack.c.b16 %v2364, %v2360
        %v2545 = vpack.c.b16 %v2365, %v2361
        %v2546 = vpack.c.b16 %v2366, %v2362
        %v2547 = vpack.c.b16 %v2367, %v2363
        %v2548 = vpack.c.b16 %v2372, %v2368
        %v2549 = vpack.c.b16 %v2373, %v2369
        %v2550 = vpack.c.b16 %v2374, %v2370
        %v2551 = vpack.c.b16 %v2375, %v2371
        %v2552 = vpack.c.b16 %v2380, %v2376
        %v2553 = vpack.c.b16 %v2381, %v2377
        %v2554 = vpack.c.b16 %v2382, %v2378
        %v2555 = vpack.c.b16 %v2383, %v2379
        %v2556 = vpack.c.b16 %v2388, %v2384
        %v2557 = vpack.c.b16 %v2389, %v2385
        %v2558 = vpack.c.b16 %v2390, %v2386
        %v2559 = vpack.c.b16 %v2391, %v2387
        %v2560 = vpack.c.b16 %v2396, %v2392
        %v2561 = vpack.c.b16 %v2397, %v2393
        %v2562 = vpack.c.b16 %v2398, %v2394
        %v2563 = vpack.c.b16 %v2399, %v2395
        %v2564 = vpack.c.b16 %v2404, %v2400
        %v2565 = vpack.c.b16 %v2405, %v2401
        %v2566 = vpack.c.b16 %v2406, %v2402
        %v2567 = vpack.c.b16 %v2407, %v2403
        %v2568 = vpack.c.b16 %v2412, %v2408
        %v2569 = vpack.c.b16 %v2413, %v2409
        %v2570 = vpack.c.b16 %v2414, %v2410
        %v2571 = vpack.c.b16 %v2415, %v2411
        %v2572 = vpack.c.b16 %v2420, %v2416
        %v2573 = vpack.c.b16 %v2421, %v2417
        %v2574 = vpack.c.b16 %v2422, %v2418
        %v2575 = vpack.c.b16 %v2423, %v2419
        %v2576 = vpack.c.b16 %v2428, %v2424
        %v2577 = vpack.c.b16 %v2429, %v2425
        %v2578 = vpack.c.b16 %v2430, %v2426
        %v2579 = vpack.c.b16 %v2431, %v2427
        %v2580 = vpack.c.b16 %v2436, %v2432
        %v2581 = vpack.c.b16 %v2437, %v2433
        %v2582 = vpack.c.b16 %v2438, %v2434
        %v2583 = vpack.c.b16 %v2439, %v2435
        %v2584 = vpack.c.b16 %v2444, %v2440
        %v2585 = vpack.c.b16 %v2445, %v2441
        %v2586 = vpack.c.b16 %v2446, %v2442
        %v2587 = vpack.c.b16 %v2447, %v2443
        %v2588 = vpack.c.b16 %v2452, %v2448
        %v2589 = vpack.c.b16 %v2453, %v2449
        %v2590 = vpack.c.b16 %v2454, %v2450
        %v2591 = vpack.c.b16 %v2455, %v2451
        %v2592 = vpack.c.b16 %v2460, %v2456
        %v2593 = vpack.c.b16 %v2461, %v2457
        %v2594 = vpack.c.b16 %v2462, %v2458
        %v2595 = vpack.c.b16 %v2463, %v2459
        %v2596 = vpack.c.b16 %v2468, %v2464
        %v2597 = vpack.c.b16 %v2469, %v2465
        %v2598 = vpack.c.b16 %v2470, %v2466
        %v2599 = vpack.c.b16 %v2471, %v2467
        %2728 = vmatprep.subr.bf16.mxu0 %v1705
        %2729 = vmatpush1.bf16.msra.mxu0 %v1704
        %2730 = vmatprep.subr.bf16.mxu0 %v1707
        %2731 = vmatpush1.bf16.msra.mxu0 %v1706
        %2732 = vmatprep.subr.bf16.mxu0 %v1709
        %2733 = vmatpush1.bf16.msra.mxu0 %v1708
        %2734 = vmatprep.subr.bf16.mxu0 %v1711
        %2735 = vmatpush1.bf16.msra.mxu0 %v1710
        %2736 = vmatprep.subr.bf16.mxu0 %v1713
        %2737 = vmatpush1.bf16.msra.mxu0 %v1712
        %2738 = vmatprep.subr.bf16.mxu0 %v1715
        %2739 = vmatpush1.bf16.msra.mxu0 %v1714
        %2740 = vmatprep.subr.bf16.mxu0 %v1717
        %2741 = vmatpush1.bf16.msra.mxu0 %v1716
        %2742 = vmatprep.subr.bf16.mxu0 %v1719
        %2743 = vmatpush1.bf16.msra.mxu0 %v1718
        %2744 = vmatprep.subr.bf16.mxu0 %v1721
        %2745 = vmatpush1.bf16.msra.mxu0 %v1720
        %2746 = vmatprep.subr.bf16.mxu0 %v1723
        %2747 = vmatpush1.bf16.msra.mxu0 %v1722
        %2748 = vmatprep.subr.bf16.mxu0 %v1725
        %2749 = vmatpush1.bf16.msra.mxu0 %v1724
        %2750 = vmatprep.subr.bf16.mxu0 %v1727
        %2751 = vmatpush1.bf16.msra.mxu0 %v1726
        %2752 = vmatprep.subr.bf16.mxu0 %v1729
        %2753 = vmatpush1.bf16.msra.mxu0 %v1728
        %2754 = vmatprep.subr.bf16.mxu0 %v1731
        %2755 = vmatpush1.bf16.msra.mxu0 %v1730
        %2756 = vmatprep.subr.bf16.mxu0 %v1733
        %2757 = vmatpush1.bf16.msra.mxu0 %v1732
        %2758 = vmatprep.subr.bf16.mxu0 %v1735
        %2759 = vmatpush1.bf16.msra.mxu0 %v1734
        %2760 = vmatprep.mubr.bf16.mxu0 %v2473
        %2761 = vmatmul.mubr.bf16.gmra.mrb[0].mxu0 %v2472
        %v2762 = vpop.f32.mrb[0].mxu0
        %v2763 = vadd.f32 %v1771, %v2762
        %v2764 = vpop.f32.mrb[0].mxu0
        %v2765 = vadd.f32 %v1771, %v2764
        %v2766 = vpop.f32.mrb[0].mxu0
        %v2767 = vadd.f32 %v1776, %v2766
        %v2768 = vpop.f32.mrb[0].mxu0
        %v2769 = vadd.f32 %v1776, %v2768
        %2770 = vmatprep.mubr.bf16.mxu0 %v2477
        %2771 = vmatmul.mubr.bf16.gmra.mrb[0].mxu0 %v2476
        %v2772 = vpop.f32.mrb[0].mxu0
        %v2773 = vadd.f32 %v1781, %v2772
        %v2774 = vpop.f32.mrb[0].mxu0
        %v2775 = vadd.f32 %v1781, %v2774
        %v2776 = vpop.f32.mrb[0].mxu0
        %v2777 = vadd.f32 %v1786, %v2776
        %v2778 = vpop.f32.mrb[0].mxu0
        %v2779 = vadd.f32 %v1786, %v2778
        %2780 = vmatprep.mubr.bf16.mxu0 %v2481
        %2781 = vmatmul.mubr.bf16.gmra.mrb[0].mxu0 %v2480
        %v2782 = vpop.f32.mrb[0].mxu0
        %v2783 = vadd.f32 %v1791, %v2782
        %v2784 = vpop.f32.mrb[0].mxu0
        %v2785 = vadd.f32 %v1791, %v2784
        %v2786 = vpop.f32.mrb[0].mxu0
        %v2787 = vadd.f32 %v1796, %v2786
        %v2788 = vpop.f32.mrb[0].mxu0
        %v2789 = vadd.f32 %v1796, %v2788
        %2790 = vmatprep.mubr.bf16.mxu0 %v2485
        %2791 = vmatmul.mubr.bf16.gmra.mrb[0].mxu0 %v2484
        %v2792 = vpop.f32.mrb[0].mxu0
        %v2793 = vadd.f32 %v1801, %v2792
        %v2794 = vpop.f32.mrb[0].mxu0
        %v2795 = vadd.f32 %v1801, %v2794
        %v2796 = vpop.f32.mrb[0].mxu0
        %v2797 = vadd.f32 %v1806, %v2796
        %v2798 = vpop.f32.mrb[0].mxu0
        %v2799 = vadd.f32 %v1806, %v2798
        %2800 = vmatprep.mubr.bf16.mxu0 %v2489
        %2801 = vmatmul.mubr.bf16.gmra.mrb[0].mxu0 %v2488
        %v2802 = vpop.f32.mrb[0].mxu0
        %v2803 = vadd.f32 %v1811, %v2802
        %v2804 = vpop.f32.mrb[0].mxu0
        %v2805 = vadd.f32 %v1811, %v2804
        %v2806 = vpop.f32.mrb[0].mxu0
        %v2807 = vadd.f32 %v1816, %v2806
        %v2808 = vpop.f32.mrb[0].mxu0
        %v2809 = vadd.f32 %v1816, %v2808
        %2810 = vmatprep.mubr.bf16.mxu0 %v2493
        %2811 = vmatmul.mubr.bf16.gmra.mrb[0].mxu0 %v2492
        %v2812 = vpop.f32.mrb[0].mxu0
        %v2813 = vadd.f32 %v1821, %v2812
        %v2814 = vpop.f32.mrb[0].mxu0
        %v2815 = vadd.f32 %v1821, %v2814
        %v2816 = vpop.f32.mrb[0].mxu0
        %v2817 = vadd.f32 %v1826, %v2816
        %v2818 = vpop.f32.mrb[0].mxu0
        %v2819 = vadd.f32 %v1826, %v2818
        %2820 = vmatprep.mubr.bf16.mxu0 %v2497
        %2821 = vmatmul.mubr.bf16.gmra.mrb[0].mxu0 %v2496
        %v2822 = vpop.f32.mrb[0].mxu0
        %v2823 = vadd.f32 %v1831, %v2822
        %v2824 = vpop.f32.mrb[0].mxu0
        %v2825 = vadd.f32 %v1831, %v2824
        %v2826 = vpop.f32.mrb[0].mxu0
        %v2827 = vadd.f32 %v1836, %v2826
        %v2828 = vpop.f32.mrb[0].mxu0
        %v2829 = vadd.f32 %v1836, %v2828
        %2830 = vmatprep.mubr.bf16.mxu0 %v2501
        %2831 = vmatmul.mubr.bf16.gmra.mrb[0].mxu0 %v2500
        %v2832 = vpop.f32.mrb[0].mxu0
        %v2833 = vadd.f32 %v1841, %v2832
        %v2834 = vpop.f32.mrb[0].mxu0
        %v2835 = vadd.f32 %v1841, %v2834
        %v2836 = vpop.f32.mrb[0].mxu0
        %v2837 = vadd.f32 %v1846, %v2836
        %v2838 = vpop.f32.mrb[0].mxu0
        %v2839 = vadd.f32 %v1846, %v2838
        %2840 = vmatprep.mubr.bf16.mxu0 %v2505
        %2841 = vmatmul.mubr.bf16.gmra.mrb[0].mxu0 %v2504
        %v2842 = vpop.f32.mrb[0].mxu0
        %v2843 = vadd.f32 %v1851, %v2842
        %v2844 = vpop.f32.mrb[0].mxu0
        %v2845 = vadd.f32 %v1851, %v2844
        %v2846 = vpop.f32.mrb[0].mxu0
        %v2847 = vadd.f32 %v1856, %v2846
        %v2848 = vpop.f32.mrb[0].mxu0
        %v2849 = vadd.f32 %v1856, %v2848
        %2850 = vmatprep.mubr.bf16.mxu0 %v2509
        %2851 = vmatmul.mubr.bf16.gmra.mrb[0].mxu0 %v2508
        %v2852 = vpop.f32.mrb[0].mxu0
        %v2853 = vadd.f32 %v1861, %v2852
        %v2854 = vpop.f32.mrb[0].mxu0
        %v2855 = vadd.f32 %v1861, %v2854
        %v2856 = vpop.f32.mrb[0].mxu0
        %v2857 = vadd.f32 %v1866, %v2856
        %v2858 = vpop.f32.mrb[0].mxu0
        %v2859 = vadd.f32 %v1866, %v2858
        %2860 = vmatprep.mubr.bf16.mxu0 %v2513
        %2861 = vmatmul.mubr.bf16.gmra.mrb[0].mxu0 %v2512
        %v2862 = vpop.f32.mrb[0].mxu0
        %v2863 = vadd.f32 %v1871, %v2862
        %v2864 = vpop.f32.mrb[0].mxu0
        %v2865 = vadd.f32 %v1871, %v2864
        %v2866 = vpop.f32.mrb[0].mxu0
        %v2867 = vadd.f32 %v1876, %v2866
        %v2868 = vpop.f32.mrb[0].mxu0
        %v2869 = vadd.f32 %v1876, %v2868
        %2870 = vmatprep.mubr.bf16.mxu0 %v2517
        %2871 = vmatmul.mubr.bf16.gmra.mrb[0].mxu0 %v2516
        %v2872 = vpop.f32.mrb[0].mxu0
        %v2873 = vadd.f32 %v1881, %v2872
        %v2874 = vpop.f32.mrb[0].mxu0
        %v2875 = vadd.f32 %v1881, %v2874
        %v2876 = vpop.f32.mrb[0].mxu0
        %v2877 = vadd.f32 %v1886, %v2876
        %v2878 = vpop.f32.mrb[0].mxu0
        %v2879 = vadd.f32 %v1886, %v2878
        %2880 = vmatprep.mubr.bf16.mxu0 %v2521
        %2881 = vmatmul.mubr.bf16.gmra.mrb[0].mxu0 %v2520
        %v2882 = vpop.f32.mrb[0].mxu0
        %v2883 = vadd.f32 %v1891, %v2882
        %v2884 = vpop.f32.mrb[0].mxu0
        %v2885 = vadd.f32 %v1891, %v2884
        %v2886 = vpop.f32.mrb[0].mxu0
        %v2887 = vadd.f32 %v1896, %v2886
        %v2888 = vpop.f32.mrb[0].mxu0
        %v2889 = vadd.f32 %v1896, %v2888
        %2890 = vmatprep.mubr.bf16.mxu0 %v2525
        %2891 = vmatmul.mubr.bf16.gmra.mrb[0].mxu0 %v2524
        %v2892 = vpop.f32.mrb[0].mxu0
        %v2893 = vadd.f32 %v1901, %v2892
        %v2894 = vpop.f32.mrb[0].mxu0
        %v2895 = vadd.f32 %v1901, %v2894
        %v2896 = vpop.f32.mrb[0].mxu0
        %v2897 = vadd.f32 %v1906, %v2896
        %v2898 = vpop.f32.mrb[0].mxu0
        %v2899 = vadd.f32 %v1906, %v2898
        %2900 = vmatprep.mubr.bf16.mxu0 %v2529
        %2901 = vmatmul.mubr.bf16.gmra.mrb[0].mxu0 %v2528
        %v2902 = vpop.f32.mrb[0].mxu0
        %v2903 = vadd.f32 %v1911, %v2902
        %v2904 = vpop.f32.mrb[0].mxu0
        %v2905 = vadd.f32 %v1911, %v2904
        %v2906 = vpop.f32.mrb[0].mxu0
        %v2907 = vadd.f32 %v1916, %v2906
        %v2908 = vpop.f32.mrb[0].mxu0
        %v2909 = vadd.f32 %v1916, %v2908
        %2910 = vmatprep.mubr.bf16.mxu0 %v2533
        %2911 = vmatmul.mubr.bf16.gmra.mrb[0].mxu0 %v2532
        %v2912 = vpop.f32.mrb[0].mxu0
        %v2913 = vadd.f32 %v1921, %v2912
        %v2914 = vpop.f32.mrb[0].mxu0
        %v2915 = vadd.f32 %v1921, %v2914
        %v2916 = vpop.f32.mrb[0].mxu0
        %v2917 = vadd.f32 %v1926, %v2916
        %v2918 = vpop.f32.mrb[0].mxu0
        %v2919 = vadd.f32 %v1926, %v2918
        %2920 = vmatprep.mubr.bf16.mxu0 %v2537
        %2921 = vmatmul.mubr.bf16.gmra.mrb[0].mxu0 %v2536
        %v2922 = vpop.f32.mrb[0].mxu0
        %v2923 = vadd.f32 %v1931, %v2922
        %v2924 = vpop.f32.mrb[0].mxu0
        %v2925 = vadd.f32 %v1931, %v2924
        %v2926 = vpop.f32.mrb[0].mxu0
        %v2927 = vadd.f32 %v1936, %v2926
        %v2928 = vpop.f32.mrb[0].mxu0
        %v2929 = vadd.f32 %v1936, %v2928
        %2930 = vmatprep.mubr.bf16.mxu0 %v2541
        %2931 = vmatmul.mubr.bf16.gmra.mrb[0].mxu0 %v2540
        %v2932 = vpop.f32.mrb[0].mxu0
        %v2933 = vadd.f32 %v1941, %v2932
        %v2934 = vpop.f32.mrb[0].mxu0
        %v2935 = vadd.f32 %v1941, %v2934
        %v2936 = vpop.f32.mrb[0].mxu0
        %v2937 = vadd.f32 %v1946, %v2936
        %v2938 = vpop.f32.mrb[0].mxu0
        %v2939 = vadd.f32 %v1946, %v2938
        %2940 = vmatprep.mubr.bf16.mxu0 %v2545
        %2941 = vmatmul.mubr.bf16.gmra.mrb[0].mxu0 %v2544
        %v2942 = vpop.f32.mrb[0].mxu0
        %v2943 = vadd.f32 %v1951, %v2942
        %v2944 = vpop.f32.mrb[0].mxu0
        %v2945 = vadd.f32 %v1951, %v2944
        %v2946 = vpop.f32.mrb[0].mxu0
        %v2947 = vadd.f32 %v1956, %v2946
        %v2948 = vpop.f32.mrb[0].mxu0
        %v2949 = vadd.f32 %v1956, %v2948
        %2950 = vmatprep.mubr.bf16.mxu0 %v2549
        %2951 = vmatmul.mubr.bf16.gmra.mrb[0].mxu0 %v2548
        %v2952 = vpop.f32.mrb[0].mxu0
        %v2953 = vadd.f32 %v1961, %v2952
        %v2954 = vpop.f32.mrb[0].mxu0
        %v2955 = vadd.f32 %v1961, %v2954
        %v2956 = vpop.f32.mrb[0].mxu0
        %v2957 = vadd.f32 %v1966, %v2956
        %v2958 = vpop.f32.mrb[0].mxu0
        %v2959 = vadd.f32 %v1966, %v2958
        %2960 = vmatprep.mubr.bf16.mxu0 %v2553
        %2961 = vmatmul.mubr.bf16.gmra.mrb[0].mxu0 %v2552
        %v2962 = vpop.f32.mrb[0].mxu0
        %v2963 = vadd.f32 %v1971, %v2962
        %v2964 = vpop.f32.mrb[0].mxu0
        %v2965 = vadd.f32 %v1971, %v2964
        %v2966 = vpop.f32.mrb[0].mxu0
        %v2967 = vadd.f32 %v1976, %v2966
        %v2968 = vpop.f32.mrb[0].mxu0
        %v2969 = vadd.f32 %v1976, %v2968
        %2970 = vmatprep.mubr.bf16.mxu0 %v2557
        %2971 = vmatmul.mubr.bf16.gmra.mrb[0].mxu0 %v2556
        %v2972 = vpop.f32.mrb[0].mxu0
        %v2973 = vadd.f32 %v1981, %v2972
        %v2974 = vpop.f32.mrb[0].mxu0
        %v2975 = vadd.f32 %v1981, %v2974
        %v2976 = vpop.f32.mrb[0].mxu0
        %v2977 = vadd.f32 %v1986, %v2976
        %v2978 = vpop.f32.mrb[0].mxu0
        %v2979 = vadd.f32 %v1986, %v2978
        %2980 = vmatprep.mubr.bf16.mxu0 %v2561
        %2981 = vmatmul.mubr.bf16.gmra.mrb[0].mxu0 %v2560
        %v2982 = vpop.f32.mrb[0].mxu0
        %v2983 = vadd.f32 %v1991, %v2982
        %v2984 = vpop.f32.mrb[0].mxu0
        %v2985 = vadd.f32 %v1991, %v2984
        %v2986 = vpop.f32.mrb[0].mxu0
        %v2987 = vadd.f32 %v1996, %v2986
        %v2988 = vpop.f32.mrb[0].mxu0
        %v2989 = vadd.f32 %v1996, %v2988
        %2990 = vmatprep.mubr.bf16.mxu0 %v2565
        %2991 = vmatmul.mubr.bf16.gmra.mrb[0].mxu0 %v2564
        %v2992 = vpop.f32.mrb[0].mxu0
        %v2993 = vadd.f32 %v2001, %v2992
        %v2994 = vpop.f32.mrb[0].mxu0
        %v2995 = vadd.f32 %v2001, %v2994
        %v2996 = vpop.f32.mrb[0].mxu0
        %v2997 = vadd.f32 %v2006, %v2996
        %v2998 = vpop.f32.mrb[0].mxu0
        %v2999 = vadd.f32 %v2006, %v2998
        %3000 = vmatprep.mubr.bf16.mxu0 %v2569
        %3001 = vmatmul.mubr.bf16.gmra.mrb[0].mxu0 %v2568
        %v3002 = vpop.f32.mrb[0].mxu0
        %v3003 = vadd.f32 %v2011, %v3002
        %v3004 = vpop.f32.mrb[0].mxu0
        %v3005 = vadd.f32 %v2011, %v3004
        %v3006 = vpop.f32.mrb[0].mxu0
        %v3007 = vadd.f32 %v2016, %v3006
        %v3008 = vpop.f32.mrb[0].mxu0
        %v3009 = vadd.f32 %v2016, %v3008
        %3010 = vmatprep.mubr.bf16.mxu0 %v2573
        %3011 = vmatmul.mubr.bf16.gmra.mrb[0].mxu0 %v2572
        %v3012 = vpop.f32.mrb[0].mxu0
        %v3013 = vadd.f32 %v2021, %v3012
        %v3014 = vpop.f32.mrb[0].mxu0
        %v3015 = vadd.f32 %v2021, %v3014
        %v3016 = vpop.f32.mrb[0].mxu0
        %v3017 = vadd.f32 %v2026, %v3016
        %v3018 = vpop.f32.mrb[0].mxu0
        %v3019 = vadd.f32 %v2026, %v3018
        %3020 = vmatprep.mubr.bf16.mxu0 %v2577
        %3021 = vmatmul.mubr.bf16.gmra.mrb[0].mxu0 %v2576
        %v3022 = vpop.f32.mrb[0].mxu0
        %v3023 = vadd.f32 %v2031, %v3022
        %v3024 = vpop.f32.mrb[0].mxu0
        %v3025 = vadd.f32 %v2031, %v3024
        %v3026 = vpop.f32.mrb[0].mxu0
        %v3027 = vadd.f32 %v2036, %v3026
        %v3028 = vpop.f32.mrb[0].mxu0
        %v3029 = vadd.f32 %v2036, %v3028
        %3030 = vmatprep.mubr.bf16.mxu0 %v2581
        %3031 = vmatmul.mubr.bf16.gmra.mrb[0].mxu0 %v2580
        %v3032 = vpop.f32.mrb[0].mxu0
        %v3033 = vadd.f32 %v2041, %v3032
        %v3034 = vpop.f32.mrb[0].mxu0
        %v3035 = vadd.f32 %v2041, %v3034
        %v3036 = vpop.f32.mrb[0].mxu0
        %v3037 = vadd.f32 %v2046, %v3036
        %v3038 = vpop.f32.mrb[0].mxu0
        %v3039 = vadd.f32 %v2046, %v3038
        %3040 = vmatprep.mubr.bf16.mxu0 %v2585
        %3041 = vmatmul.mubr.bf16.gmra.mrb[0].mxu0 %v2584
        %v3042 = vpop.f32.mrb[0].mxu0
        %v3043 = vadd.f32 %v2051, %v3042
        %v3044 = vpop.f32.mrb[0].mxu0
        %v3045 = vadd.f32 %v2051, %v3044
        %v3046 = vpop.f32.mrb[0].mxu0
        %v3047 = vadd.f32 %v2056, %v3046
        %v3048 = vpop.f32.mrb[0].mxu0
        %v3049 = vadd.f32 %v2056, %v3048
        %3050 = vmatprep.mubr.bf16.mxu0 %v2589
        %3051 = vmatmul.mubr.bf16.gmra.mrb[0].mxu0 %v2588
        %v3052 = vpop.f32.mrb[0].mxu0
        %v3053 = vadd.f32 %v2061, %v3052
        %v3054 = vpop.f32.mrb[0].mxu0
        %v3055 = vadd.f32 %v2061, %v3054
        %v3056 = vpop.f32.mrb[0].mxu0
        %v3057 = vadd.f32 %v2066, %v3056
        %v3058 = vpop.f32.mrb[0].mxu0
        %v3059 = vadd.f32 %v2066, %v3058
        %3060 = vmatprep.mubr.bf16.mxu0 %v2593
        %3061 = vmatmul.mubr.bf16.gmra.mrb[0].mxu0 %v2592
        %v3062 = vpop.f32.mrb[0].mxu0
        %v3063 = vadd.f32 %v2071, %v3062
        %v3064 = vpop.f32.mrb[0].mxu0
        %v3065 = vadd.f32 %v2071, %v3064
        %v3066 = vpop.f32.mrb[0].mxu0
        %v3067 = vadd.f32 %v2076, %v3066
        %v3068 = vpop.f32.mrb[0].mxu0
        %v3069 = vadd.f32 %v2076, %v3068
        %3070 = vmatprep.mubr.bf16.mxu0 %v2597
        %3071 = vmatmul.mubr.bf16.gmra.mrb[0].mxu0 %v2596
        %v3072 = vpop.f32.mrb[0].mxu0
        %v3073 = vadd.f32 %v2081, %v3072
        %v3074 = vpop.f32.mrb[0].mxu0
        %v3075 = vadd.f32 %v2081, %v3074
        %v3076 = vpop.f32.mrb[0].mxu0
        %v3077 = vadd.f32 %v2086, %v3076
        %v3078 = vpop.f32.mrb[0].mxu0
        %v3079 = vadd.f32 %v2086, %v3078
        %3080 = vdwg.mxu0
        %3081 = vmatprep.subr.bf16.mxu0 %v1737
        %3082 = vmatpush1.bf16.msra.mxu0 %v1736
        %3083 = vmatprep.subr.bf16.mxu0 %v1739
        %3084 = vmatpush1.bf16.msra.mxu0 %v1738
        %3085 = vmatprep.subr.bf16.mxu0 %v1741
        %3086 = vmatpush1.bf16.msra.mxu0 %v1740
        %3087 = vmatprep.subr.bf16.mxu0 %v1743
        %3088 = vmatpush1.bf16.msra.mxu0 %v1742
        %3089 = vmatprep.subr.bf16.mxu0 %v1745
        %3090 = vmatpush1.bf16.msra.mxu0 %v1744
        %3091 = vmatprep.subr.bf16.mxu0 %v1747
        %3092 = vmatpush1.bf16.msra.mxu0 %v1746
        %3093 = vmatprep.subr.bf16.mxu0 %v1749
        %3094 = vmatpush1.bf16.msra.mxu0 %v1748
        %3095 = vmatprep.subr.bf16.mxu0 %v1751
        %3096 = vmatpush1.bf16.msra.mxu0 %v1750
        %3097 = vmatprep.subr.bf16.mxu0 %v1753
        %3098 = vmatpush1.bf16.msra.mxu0 %v1752
        %3099 = vmatprep.subr.bf16.mxu0 %v1755
        %3100 = vmatpush1.bf16.msra.mxu0 %v1754
        %3101 = vmatprep.subr.bf16.mxu0 %v1757
        %3102 = vmatpush1.bf16.msra.mxu0 %v1756
        %3103 = vmatprep.subr.bf16.mxu0 %v1759
        %3104 = vmatpush1.bf16.msra.mxu0 %v1758
        %3105 = vmatprep.subr.bf16.mxu0 %v1761
        %3106 = vmatpush1.bf16.msra.mxu0 %v1760
        %3107 = vmatprep.subr.bf16.mxu0 %v1763
        %3108 = vmatpush1.bf16.msra.mxu0 %v1762
        %3109 = vmatprep.subr.bf16.mxu0 %v1765
        %3110 = vmatpush1.bf16.msra.mxu0 %v1764
        %3111 = vmatprep.subr.bf16.mxu0 %v1767
        %3112 = vmatpush1.bf16.msra.mxu0 %v1766
        %3113 = vmatprep.mubr.bf16.mxu0 %v2475
        %3114 = vmatmul.mubr.bf16.gmra.mrb[0].mxu0 %v2474
        %v3115 = vpop.f32.mrb[0].mxu0
        %v3116 = vadd.f32 %v2763, %v3115
        %v3117 = vpop.f32.mrb[0].mxu0
        %v3118 = vadd.f32 %v2765, %v3117
        %v3119 = vpop.f32.mrb[0].mxu0
        %v3120 = vadd.f32 %v2767, %v3119
        %v3121 = vpop.f32.mrb[0].mxu0
        %v3122 = vadd.f32 %v2769, %v3121
        %3123 = vmatprep.mubr.bf16.mxu0 %v2479
        %3124 = vmatmul.mubr.bf16.gmra.mrb[0].mxu0 %v2478
        %v3125 = vpop.f32.mrb[0].mxu0
        %v3126 = vadd.f32 %v2773, %v3125
        %v3127 = vpop.f32.mrb[0].mxu0
        %v3128 = vadd.f32 %v2775, %v3127
        %v3129 = vpop.f32.mrb[0].mxu0
        %v3130 = vadd.f32 %v2777, %v3129
        %v3131 = vpop.f32.mrb[0].mxu0
        %v3132 = vadd.f32 %v2779, %v3131
        %3133 = vmatprep.mubr.bf16.mxu0 %v2483
        %3134 = vmatmul.mubr.bf16.gmra.mrb[0].mxu0 %v2482
        %v3135 = vpop.f32.mrb[0].mxu0
        %v3136 = vadd.f32 %v2783, %v3135
        %v3137 = vpop.f32.mrb[0].mxu0
        %v3138 = vadd.f32 %v2785, %v3137
        %v3139 = vpop.f32.mrb[0].mxu0
        %v3140 = vadd.f32 %v2787, %v3139
        %v3141 = vpop.f32.mrb[0].mxu0
        %v3142 = vadd.f32 %v2789, %v3141
        %3143 = vmatprep.mubr.bf16.mxu0 %v2487
        %3144 = vmatmul.mubr.bf16.gmra.mrb[0].mxu0 %v2486
        %v3145 = vpop.f32.mrb[0].mxu0
        %v3146 = vadd.f32 %v2793, %v3145
        %v3147 = vpop.f32.mrb[0].mxu0
        %v3148 = vadd.f32 %v2795, %v3147
        %v3149 = vpop.f32.mrb[0].mxu0
        %v3150 = vadd.f32 %v2797, %v3149
        %v3151 = vpop.f32.mrb[0].mxu0
        %v3152 = vadd.f32 %v2799, %v3151
        %3153 = vmatprep.mubr.bf16.mxu0 %v2491
        %3154 = vmatmul.mubr.bf16.gmra.mrb[0].mxu0 %v2490
        %v3155 = vpop.f32.mrb[0].mxu0
        %v3156 = vadd.f32 %v2803, %v3155
        %v3157 = vpop.f32.mrb[0].mxu0
        %v3158 = vadd.f32 %v2805, %v3157
        %v3159 = vpop.f32.mrb[0].mxu0
        %v3160 = vadd.f32 %v2807, %v3159
        %v3161 = vpop.f32.mrb[0].mxu0
        %v3162 = vadd.f32 %v2809, %v3161
        %3163 = vmatprep.mubr.bf16.mxu0 %v2495
        %3164 = vmatmul.mubr.bf16.gmra.mrb[0].mxu0 %v2494
        %v3165 = vpop.f32.mrb[0].mxu0
        %v3166 = vadd.f32 %v2813, %v3165
        %v3167 = vpop.f32.mrb[0].mxu0
        %v3168 = vadd.f32 %v2815, %v3167
        %v3169 = vpop.f32.mrb[0].mxu0
        %v3170 = vadd.f32 %v2817, %v3169
        %v3171 = vpop.f32.mrb[0].mxu0
        %v3172 = vadd.f32 %v2819, %v3171
        %3173 = vmatprep.mubr.bf16.mxu0 %v2499
        %3174 = vmatmul.mubr.bf16.gmra.mrb[0].mxu0 %v2498
        %v3175 = vpop.f32.mrb[0].mxu0
        %v3176 = vadd.f32 %v2823, %v3175
        %v3177 = vpop.f32.mrb[0].mxu0
        %v3178 = vadd.f32 %v2825, %v3177
        %v3179 = vpop.f32.mrb[0].mxu0
        %v3180 = vadd.f32 %v2827, %v3179
        %v3181 = vpop.f32.mrb[0].mxu0
        %v3182 = vadd.f32 %v2829, %v3181
        %3183 = vmatprep.mubr.bf16.mxu0 %v2503
        %3184 = vmatmul.mubr.bf16.gmra.mrb[0].mxu0 %v2502
        %v3185 = vpop.f32.mrb[0].mxu0
        %v3186 = vadd.f32 %v2833, %v3185
        %v3187 = vpop.f32.mrb[0].mxu0
        %v3188 = vadd.f32 %v2835, %v3187
        %v3189 = vpop.f32.mrb[0].mxu0
        %v3190 = vadd.f32 %v2837, %v3189
        %v3191 = vpop.f32.mrb[0].mxu0
        %v3192 = vadd.f32 %v2839, %v3191
        %3193 = vmatprep.mubr.bf16.mxu0 %v2507
        %3194 = vmatmul.mubr.bf16.gmra.mrb[0].mxu0 %v2506
        %v3195 = vpop.f32.mrb[0].mxu0
        %v3196 = vadd.f32 %v2843, %v3195
        %v3197 = vpop.f32.mrb[0].mxu0
        %v3198 = vadd.f32 %v2845, %v3197
        %v3199 = vpop.f32.mrb[0].mxu0
        %v3200 = vadd.f32 %v2847, %v3199
        %v3201 = vpop.f32.mrb[0].mxu0
        %v3202 = vadd.f32 %v2849, %v3201
        %3203 = vmatprep.mubr.bf16.mxu0 %v2511
        %3204 = vmatmul.mubr.bf16.gmra.mrb[0].mxu0 %v2510
        %v3205 = vpop.f32.mrb[0].mxu0
        %v3206 = vadd.f32 %v2853, %v3205
        %v3207 = vpop.f32.mrb[0].mxu0
        %v3208 = vadd.f32 %v2855, %v3207
        %v3209 = vpop.f32.mrb[0].mxu0
        %v3210 = vadd.f32 %v2857, %v3209
        %v3211 = vpop.f32.mrb[0].mxu0
        %v3212 = vadd.f32 %v2859, %v3211
        %3213 = vmatprep.mubr.bf16.mxu0 %v2515
        %3214 = vmatmul.mubr.bf16.gmra.mrb[0].mxu0 %v2514
        %v3215 = vpop.f32.mrb[0].mxu0
        %v3216 = vadd.f32 %v2863, %v3215
        %v3217 = vpop.f32.mrb[0].mxu0
        %v3218 = vadd.f32 %v2865, %v3217
        %v3219 = vpop.f32.mrb[0].mxu0
        %v3220 = vadd.f32 %v2867, %v3219
        %v3221 = vpop.f32.mrb[0].mxu0
        %v3222 = vadd.f32 %v2869, %v3221
        %3223 = vmatprep.mubr.bf16.mxu0 %v2519
        %3224 = vmatmul.mubr.bf16.gmra.mrb[0].mxu0 %v2518
        %v3225 = vpop.f32.mrb[0].mxu0
        %v3226 = vadd.f32 %v2873, %v3225
        %v3227 = vpop.f32.mrb[0].mxu0
        %v3228 = vadd.f32 %v2875, %v3227
        %v3229 = vpop.f32.mrb[0].mxu0
        %v3230 = vadd.f32 %v2877, %v3229
        %v3231 = vpop.f32.mrb[0].mxu0
        %v3232 = vadd.f32 %v2879, %v3231
        %3233 = vmatprep.mubr.bf16.mxu0 %v2523
        %3234 = vmatmul.mubr.bf16.gmra.mrb[0].mxu0 %v2522
        %v3235 = vpop.f32.mrb[0].mxu0
        %v3236 = vadd.f32 %v2883, %v3235
        %v3237 = vpop.f32.mrb[0].mxu0
        %v3238 = vadd.f32 %v2885, %v3237
        %v3239 = vpop.f32.mrb[0].mxu0
        %v3240 = vadd.f32 %v2887, %v3239
        %v3241 = vpop.f32.mrb[0].mxu0
        %v3242 = vadd.f32 %v2889, %v3241
        %3243 = vmatprep.mubr.bf16.mxu0 %v2527
        %3244 = vmatmul.mubr.bf16.gmra.mrb[0].mxu0 %v2526
        %v3245 = vpop.f32.mrb[0].mxu0
        %v3246 = vadd.f32 %v2893, %v3245
        %v3247 = vpop.f32.mrb[0].mxu0
        %v3248 = vadd.f32 %v2895, %v3247
        %v3249 = vpop.f32.mrb[0].mxu0
        %v3250 = vadd.f32 %v2897, %v3249
        %v3251 = vpop.f32.mrb[0].mxu0
        %v3252 = vadd.f32 %v2899, %v3251
        %3253 = vmatprep.mubr.bf16.mxu0 %v2531
        %3254 = vmatmul.mubr.bf16.gmra.mrb[0].mxu0 %v2530
        %v3255 = vpop.f32.mrb[0].mxu0
        %v3256 = vadd.f32 %v2903, %v3255
        %v3257 = vpop.f32.mrb[0].mxu0
        %v3258 = vadd.f32 %v2905, %v3257
        %v3259 = vpop.f32.mrb[0].mxu0
        %v3260 = vadd.f32 %v2907, %v3259
        %v3261 = vpop.f32.mrb[0].mxu0
        %v3262 = vadd.f32 %v2909, %v3261
        %3263 = vmatprep.mubr.bf16.mxu0 %v2535
        %3264 = vmatmul.mubr.bf16.gmra.mrb[0].mxu0 %v2534
        %v3265 = vpop.f32.mrb[0].mxu0
        %v3266 = vadd.f32 %v2913, %v3265
        %v3267 = vpop.f32.mrb[0].mxu0
        %v3268 = vadd.f32 %v2915, %v3267
        %v3269 = vpop.f32.mrb[0].mxu0
        %v3270 = vadd.f32 %v2917, %v3269
        %v3271 = vpop.f32.mrb[0].mxu0
        %v3272 = vadd.f32 %v2919, %v3271
        %3273 = vmatprep.mubr.bf16.mxu0 %v2539
        %3274 = vmatmul.mubr.bf16.gmra.mrb[0].mxu0 %v2538
        %v3275 = vpop.f32.mrb[0].mxu0
        %v3276 = vadd.f32 %v2923, %v3275
        %v3277 = vpop.f32.mrb[0].mxu0
        %v3278 = vadd.f32 %v2925, %v3277
        %v3279 = vpop.f32.mrb[0].mxu0
        %v3280 = vadd.f32 %v2927, %v3279
        %v3281 = vpop.f32.mrb[0].mxu0
        %v3282 = vadd.f32 %v2929, %v3281
        %3283 = vmatprep.mubr.bf16.mxu0 %v2543
        %3284 = vmatmul.mubr.bf16.gmra.mrb[0].mxu0 %v2542
        %v3285 = vpop.f32.mrb[0].mxu0
        %v3286 = vadd.f32 %v2933, %v3285
        %v3287 = vpop.f32.mrb[0].mxu0
        %v3288 = vadd.f32 %v2935, %v3287
        %v3289 = vpop.f32.mrb[0].mxu0
        %v3290 = vadd.f32 %v2937, %v3289
        %v3291 = vpop.f32.mrb[0].mxu0
        %v3292 = vadd.f32 %v2939, %v3291
        %3293 = vmatprep.mubr.bf16.mxu0 %v2547
        %3294 = vmatmul.mubr.bf16.gmra.mrb[0].mxu0 %v2546
        %v3295 = vpop.f32.mrb[0].mxu0
        %v3296 = vadd.f32 %v2943, %v3295
        %v3297 = vpop.f32.mrb[0].mxu0
        %v3298 = vadd.f32 %v2945, %v3297
        %v3299 = vpop.f32.mrb[0].mxu0
        %v3300 = vadd.f32 %v2947, %v3299
        %v3301 = vpop.f32.mrb[0].mxu0
        %v3302 = vadd.f32 %v2949, %v3301
        %3303 = vmatprep.mubr.bf16.mxu0 %v2551
        %3304 = vmatmul.mubr.bf16.gmra.mrb[0].mxu0 %v2550
        %v3305 = vpop.f32.mrb[0].mxu0
        %v3306 = vadd.f32 %v2953, %v3305
        %v3307 = vpop.f32.mrb[0].mxu0
        %v3308 = vadd.f32 %v2955, %v3307
        %v3309 = vpop.f32.mrb[0].mxu0
        %v3310 = vadd.f32 %v2957, %v3309
        %v3311 = vpop.f32.mrb[0].mxu0
        %v3312 = vadd.f32 %v2959, %v3311
        %3313 = vmatprep.mubr.bf16.mxu0 %v2555
        %3314 = vmatmul.mubr.bf16.gmra.mrb[0].mxu0 %v2554
        %v3315 = vpop.f32.mrb[0].mxu0
        %v3316 = vadd.f32 %v2963, %v3315
        %v3317 = vpop.f32.mrb[0].mxu0
        %v3318 = vadd.f32 %v2965, %v3317
        %v3319 = vpop.f32.mrb[0].mxu0
        %v3320 = vadd.f32 %v2967, %v3319
        %v3321 = vpop.f32.mrb[0].mxu0
        %v3322 = vadd.f32 %v2969, %v3321
        %3323 = vmatprep.mubr.bf16.mxu0 %v2559
        %3324 = vmatmul.mubr.bf16.gmra.mrb[0].mxu0 %v2558
        %v3325 = vpop.f32.mrb[0].mxu0
        %v3326 = vadd.f32 %v2973, %v3325
        %v3327 = vpop.f32.mrb[0].mxu0
        %v3328 = vadd.f32 %v2975, %v3327
        %v3329 = vpop.f32.mrb[0].mxu0
        %v3330 = vadd.f32 %v2977, %v3329
        %v3331 = vpop.f32.mrb[0].mxu0
        %v3332 = vadd.f32 %v2979, %v3331
        %3333 = vmatprep.mubr.bf16.mxu0 %v2563
        %3334 = vmatmul.mubr.bf16.gmra.mrb[0].mxu0 %v2562
        %v3335 = vpop.f32.mrb[0].mxu0
        %v3336 = vadd.f32 %v2983, %v3335
        %v3337 = vpop.f32.mrb[0].mxu0
        %v3338 = vadd.f32 %v2985, %v3337
        %v3339 = vpop.f32.mrb[0].mxu0
        %v3340 = vadd.f32 %v2987, %v3339
        %v3341 = vpop.f32.mrb[0].mxu0
        %v3342 = vadd.f32 %v2989, %v3341
        %3343 = vmatprep.mubr.bf16.mxu0 %v2567
        %3344 = vmatmul.mubr.bf16.gmra.mrb[0].mxu0 %v2566
        %v3345 = vpop.f32.mrb[0].mxu0
        %v3346 = vadd.f32 %v2993, %v3345
        %v3347 = vpop.f32.mrb[0].mxu0
        %v3348 = vadd.f32 %v2995, %v3347
        %v3349 = vpop.f32.mrb[0].mxu0
        %v3350 = vadd.f32 %v2997, %v3349
        %v3351 = vpop.f32.mrb[0].mxu0
        %v3352 = vadd.f32 %v2999, %v3351
        %3353 = vmatprep.mubr.bf16.mxu0 %v2571
        %3354 = vmatmul.mubr.bf16.gmra.mrb[0].mxu0 %v2570
        %v3355 = vpop.f32.mrb[0].mxu0
        %v3356 = vadd.f32 %v3003, %v3355
        %v3357 = vpop.f32.mrb[0].mxu0
        %v3358 = vadd.f32 %v3005, %v3357
        %v3359 = vpop.f32.mrb[0].mxu0
        %v3360 = vadd.f32 %v3007, %v3359
        %v3361 = vpop.f32.mrb[0].mxu0
        %v3362 = vadd.f32 %v3009, %v3361
        %3363 = vmatprep.mubr.bf16.mxu0 %v2575
        %3364 = vmatmul.mubr.bf16.gmra.mrb[0].mxu0 %v2574
        %v3365 = vpop.f32.mrb[0].mxu0
        %v3366 = vadd.f32 %v3013, %v3365
        %v3367 = vpop.f32.mrb[0].mxu0
        %v3368 = vadd.f32 %v3015, %v3367
        %v3369 = vpop.f32.mrb[0].mxu0
        %v3370 = vadd.f32 %v3017, %v3369
        %v3371 = vpop.f32.mrb[0].mxu0
        %v3372 = vadd.f32 %v3019, %v3371
        %3373 = vmatprep.mubr.bf16.mxu0 %v2579
        %3374 = vmatmul.mubr.bf16.gmra.mrb[0].mxu0 %v2578
        %v3375 = vpop.f32.mrb[0].mxu0
        %v3376 = vadd.f32 %v3023, %v3375
        %v3377 = vpop.f32.mrb[0].mxu0
        %v3378 = vadd.f32 %v3025, %v3377
        %v3379 = vpop.f32.mrb[0].mxu0
        %v3380 = vadd.f32 %v3027, %v3379
        %v3381 = vpop.f32.mrb[0].mxu0
        %v3382 = vadd.f32 %v3029, %v3381
        %3383 = vmatprep.mubr.bf16.mxu0 %v2583
        %3384 = vmatmul.mubr.bf16.gmra.mrb[0].mxu0 %v2582
        %v3385 = vpop.f32.mrb[0].mxu0
        %v3386 = vadd.f32 %v3033, %v3385
        %v3387 = vpop.f32.mrb[0].mxu0
        %v3388 = vadd.f32 %v3035, %v3387
        %v3389 = vpop.f32.mrb[0].mxu0
        %v3390 = vadd.f32 %v3037, %v3389
        %v3391 = vpop.f32.mrb[0].mxu0
        %v3392 = vadd.f32 %v3039, %v3391
        %3393 = vmatprep.mubr.bf16.mxu0 %v2587
        %3394 = vmatmul.mubr.bf16.gmra.mrb[0].mxu0 %v2586
        %v3395 = vpop.f32.mrb[0].mxu0
        %v3396 = vadd.f32 %v3043, %v3395
        %v3397 = vpop.f32.mrb[0].mxu0
        %v3398 = vadd.f32 %v3045, %v3397
        %v3399 = vpop.f32.mrb[0].mxu0
        %v3400 = vadd.f32 %v3047, %v3399
        %v3401 = vpop.f32.mrb[0].mxu0
        %v3402 = vadd.f32 %v3049, %v3401
        %3403 = vmatprep.mubr.bf16.mxu0 %v2591
        %3404 = vmatmul.mubr.bf16.gmra.mrb[0].mxu0 %v2590
        %v3405 = vpop.f32.mrb[0].mxu0
        %v3406 = vadd.f32 %v3053, %v3405
        %v3407 = vpop.f32.mrb[0].mxu0
        %v3408 = vadd.f32 %v3055, %v3407
        %v3409 = vpop.f32.mrb[0].mxu0
        %v3410 = vadd.f32 %v3057, %v3409
        %v3411 = vpop.f32.mrb[0].mxu0
        %v3412 = vadd.f32 %v3059, %v3411
        %3413 = vmatprep.mubr.bf16.mxu0 %v2595
        %3414 = vmatmul.mubr.bf16.gmra.mrb[0].mxu0 %v2594
        %v3415 = vpop.f32.mrb[0].mxu0
        %v3416 = vadd.f32 %v3063, %v3415
        %v3417 = vpop.f32.mrb[0].mxu0
        %v3418 = vadd.f32 %v3065, %v3417
        %v3419 = vpop.f32.mrb[0].mxu0
        %v3420 = vadd.f32 %v3067, %v3419
        %v3421 = vpop.f32.mrb[0].mxu0
        %v3422 = vadd.f32 %v3069, %v3421
        %3423 = vmatprep.mubr.bf16.mxu0 %v2599
        %3424 = vmatmul.mubr.bf16.gmra.mrb[0].mxu0 %v2598
        %v3425 = vpop.f32.mrb[0].mxu0
        %v3426 = vadd.f32 %v3073, %v3425
        %v3427 = vpop.f32.mrb[0].mxu0
        %v3428 = vadd.f32 %v3075, %v3427
        %v3429 = vpop.f32.mrb[0].mxu0
        %v3430 = vadd.f32 %v3077, %v3429
        %v3431 = vpop.f32.mrb[0].mxu0
        %v3432 = vadd.f32 %v3079, %v3431
        %3433 = vdwg.mxu0
        %v3434 = vmax.f32 %v3116, 0.0
        %v3435 = vmax.f32 %v3118, 0.0
        %v3436 = vmax.f32 %v3120, 0.0
        %v3437 = vmax.f32 %v3122, 0.0
        %v3438 = vmax.f32 %v3126, 0.0
        %v3439 = vmax.f32 %v3128, 0.0
        %v3440 = vmax.f32 %v3130, 0.0
        %v3441 = vmax.f32 %v3132, 0.0
        %v3442 = vmax.f32 %v3136, 0.0
        %v3443 = vmax.f32 %v3138, 0.0
        %v3444 = vmax.f32 %v3140, 0.0
        %v3445 = vmax.f32 %v3142, 0.0
        %v3446 = vmax.f32 %v3146, 0.0
        %v3447 = vmax.f32 %v3148, 0.0
        %v3448 = vmax.f32 %v3150, 0.0
        %v3449 = vmax.f32 %v3152, 0.0
        %v3450 = vmax.f32 %v3156, 0.0
        %v3451 = vmax.f32 %v3158, 0.0
        %v3452 = vmax.f32 %v3160, 0.0
        %v3453 = vmax.f32 %v3162, 0.0
        %v3454 = vmax.f32 %v3166, 0.0
        %v3455 = vmax.f32 %v3168, 0.0
        %v3456 = vmax.f32 %v3170, 0.0
        %v3457 = vmax.f32 %v3172, 0.0
        %v3458 = vmax.f32 %v3176, 0.0
        %v3459 = vmax.f32 %v3178, 0.0
        %v3460 = vmax.f32 %v3180, 0.0
        %v3461 = vmax.f32 %v3182, 0.0
        %v3462 = vmax.f32 %v3186, 0.0
        %v3463 = vmax.f32 %v3188, 0.0
        %v3464 = vmax.f32 %v3190, 0.0
        %v3465 = vmax.f32 %v3192, 0.0
        %v3466 = vmax.f32 %v3196, 0.0
        %v3467 = vmax.f32 %v3198, 0.0
        %v3468 = vmax.f32 %v3200, 0.0
        %v3469 = vmax.f32 %v3202, 0.0
        %v3470 = vmax.f32 %v3206, 0.0
        %v3471 = vmax.f32 %v3208, 0.0
        %v3472 = vmax.f32 %v3210, 0.0
        %v3473 = vmax.f32 %v3212, 0.0
        %v3474 = vmax.f32 %v3216, 0.0
        %v3475 = vmax.f32 %v3218, 0.0
        %v3476 = vmax.f32 %v3220, 0.0
        %v3477 = vmax.f32 %v3222, 0.0
        %v3478 = vmax.f32 %v3226, 0.0
        %v3479 = vmax.f32 %v3228, 0.0
        %v3480 = vmax.f32 %v3230, 0.0
        %v3481 = vmax.f32 %v3232, 0.0
        %v3482 = vmax.f32 %v3236, 0.0
        %v3483 = vmax.f32 %v3238, 0.0
        %v3484 = vmax.f32 %v3240, 0.0
        %v3485 = vmax.f32 %v3242, 0.0
        %v3486 = vmax.f32 %v3246, 0.0
        %v3487 = vmax.f32 %v3248, 0.0
        %v3488 = vmax.f32 %v3250, 0.0
        %v3489 = vmax.f32 %v3252, 0.0
        %v3490 = vmax.f32 %v3256, 0.0
        %v3491 = vmax.f32 %v3258, 0.0
        %v3492 = vmax.f32 %v3260, 0.0
        %v3493 = vmax.f32 %v3262, 0.0
        %v3494 = vmax.f32 %v3266, 0.0
        %v3495 = vmax.f32 %v3268, 0.0
        %v3496 = vmax.f32 %v3270, 0.0
        %v3497 = vmax.f32 %v3272, 0.0
        %v3498 = vmax.f32 %v3276, 0.0
        %v3499 = vmax.f32 %v3278, 0.0
        %v3500 = vmax.f32 %v3280, 0.0
        %v3501 = vmax.f32 %v3282, 0.0
        %v3502 = vmax.f32 %v3286, 0.0
        %v3503 = vmax.f32 %v3288, 0.0
        %v3504 = vmax.f32 %v3290, 0.0
        %v3505 = vmax.f32 %v3292, 0.0
        %v3506 = vmax.f32 %v3296, 0.0
        %v3507 = vmax.f32 %v3298, 0.0
        %v3508 = vmax.f32 %v3300, 0.0
        %v3509 = vmax.f32 %v3302, 0.0
        %v3510 = vmax.f32 %v3306, 0.0
        %v3511 = vmax.f32 %v3308, 0.0
        %v3512 = vmax.f32 %v3310, 0.0
        %v3513 = vmax.f32 %v3312, 0.0
        %v3514 = vmax.f32 %v3316, 0.0
        %v3515 = vmax.f32 %v3318, 0.0
        %v3516 = vmax.f32 %v3320, 0.0
        %v3517 = vmax.f32 %v3322, 0.0
        %v3518 = vmax.f32 %v3326, 0.0
        %v3519 = vmax.f32 %v3328, 0.0
        %v3520 = vmax.f32 %v3330, 0.0
        %v3521 = vmax.f32 %v3332, 0.0
        %v3522 = vmax.f32 %v3336, 0.0
        %v3523 = vmax.f32 %v3338, 0.0
        %v3524 = vmax.f32 %v3340, 0.0
        %v3525 = vmax.f32 %v3342, 0.0
        %v3526 = vmax.f32 %v3346, 0.0
        %v3527 = vmax.f32 %v3348, 0.0
        %v3528 = vmax.f32 %v3350, 0.0
        %v3529 = vmax.f32 %v3352, 0.0
        %v3530 = vmax.f32 %v3356, 0.0
        %v3531 = vmax.f32 %v3358, 0.0
        %v3532 = vmax.f32 %v3360, 0.0
        %v3533 = vmax.f32 %v3362, 0.0
        %v3534 = vmax.f32 %v3366, 0.0
        %v3535 = vmax.f32 %v3368, 0.0
        %v3536 = vmax.f32 %v3370, 0.0
        %v3537 = vmax.f32 %v3372, 0.0
        %v3538 = vmax.f32 %v3376, 0.0
        %v3539 = vmax.f32 %v3378, 0.0
        %v3540 = vmax.f32 %v3380, 0.0
        %v3541 = vmax.f32 %v3382, 0.0
        %v3542 = vmax.f32 %v3386, 0.0
        %v3543 = vmax.f32 %v3388, 0.0
        %v3544 = vmax.f32 %v3390, 0.0
        %v3545 = vmax.f32 %v3392, 0.0
        %v3546 = vmax.f32 %v3396, 0.0
        %v3547 = vmax.f32 %v3398, 0.0
        %v3548 = vmax.f32 %v3400, 0.0
        %v3549 = vmax.f32 %v3402, 0.0
        %v3550 = vmax.f32 %v3406, 0.0
        %v3551 = vmax.f32 %v3408, 0.0
        %v3552 = vmax.f32 %v3410, 0.0
        %v3553 = vmax.f32 %v3412, 0.0
        %v3554 = vmax.f32 %v3416, 0.0
        %v3555 = vmax.f32 %v3418, 0.0
        %v3556 = vmax.f32 %v3420, 0.0
        %v3557 = vmax.f32 %v3422, 0.0
        %v3558 = vmax.f32 %v3426, 0.0
        %v3559 = vmax.f32 %v3428, 0.0
        %v3560 = vmax.f32 %v3430, 0.0
        %v3561 = vmax.f32 %v3432, 0.0
        %v3562 = vpack.c.bf16 %v3436, %v3434
        %v3563 = vpack.c.bf16 %v3437, %v3435
        %v3564 = vpack.c.bf16 %v3440, %v3438
        %v3565 = vpack.c.bf16 %v3441, %v3439
        %v3566 = vpack.c.bf16 %v3444, %v3442
        %v3567 = vpack.c.bf16 %v3445, %v3443
        %v3568 = vpack.c.bf16 %v3448, %v3446
        %v3569 = vpack.c.bf16 %v3449, %v3447
        %v3570 = vpack.c.bf16 %v3452, %v3450
        %v3571 = vpack.c.bf16 %v3453, %v3451
        %v3572 = vpack.c.bf16 %v3456, %v3454
        %v3573 = vpack.c.bf16 %v3457, %v3455
        %v3574 = vpack.c.bf16 %v3460, %v3458
        %v3575 = vpack.c.bf16 %v3461, %v3459
        %v3576 = vpack.c.bf16 %v3464, %v3462
        %v3577 = vpack.c.bf16 %v3465, %v3463
        %v3578 = vpack.c.bf16 %v3468, %v3466
        %v3579 = vpack.c.bf16 %v3469, %v3467
        %v3580 = vpack.c.bf16 %v3472, %v3470
        %v3581 = vpack.c.bf16 %v3473, %v3471
        %v3582 = vpack.c.bf16 %v3476, %v3474
        %v3583 = vpack.c.bf16 %v3477, %v3475
        %v3584 = vpack.c.bf16 %v3480, %v3478
        %v3585 = vpack.c.bf16 %v3481, %v3479
        %v3586 = vpack.c.bf16 %v3484, %v3482
        %v3587 = vpack.c.bf16 %v3485, %v3483
        %v3588 = vpack.c.bf16 %v3488, %v3486
        %v3589 = vpack.c.bf16 %v3489, %v3487
        %v3590 = vpack.c.bf16 %v3492, %v3490
        %v3591 = vpack.c.bf16 %v3493, %v3491
        %v3592 = vpack.c.bf16 %v3496, %v3494
        %v3593 = vpack.c.bf16 %v3497, %v3495
        %v3594 = vpack.c.bf16 %v3500, %v3498
        %v3595 = vpack.c.bf16 %v3501, %v3499
        %v3596 = vpack.c.bf16 %v3504, %v3502
        %v3597 = vpack.c.bf16 %v3505, %v3503
        %v3598 = vpack.c.bf16 %v3508, %v3506
        %v3599 = vpack.c.bf16 %v3509, %v3507
        %v3600 = vpack.c.bf16 %v3512, %v3510
        %v3601 = vpack.c.bf16 %v3513, %v3511
        %v3602 = vpack.c.bf16 %v3516, %v3514
        %v3603 = vpack.c.bf16 %v3517, %v3515
        %v3604 = vpack.c.bf16 %v3520, %v3518
        %v3605 = vpack.c.bf16 %v3521, %v3519
        %v3606 = vpack.c.bf16 %v3524, %v3522
        %v3607 = vpack.c.bf16 %v3525, %v3523
        %v3608 = vpack.c.bf16 %v3528, %v3526
        %v3609 = vpack.c.bf16 %v3529, %v3527
        %v3610 = vpack.c.bf16 %v3532, %v3530
        %v3611 = vpack.c.bf16 %v3533, %v3531
        %v3612 = vpack.c.bf16 %v3536, %v3534
        %v3613 = vpack.c.bf16 %v3537, %v3535
        %v3614 = vpack.c.bf16 %v3540, %v3538
        %v3615 = vpack.c.bf16 %v3541, %v3539
        %v3616 = vpack.c.bf16 %v3544, %v3542
        %v3617 = vpack.c.bf16 %v3545, %v3543
        %v3618 = vpack.c.bf16 %v3548, %v3546
        %v3619 = vpack.c.bf16 %v3549, %v3547
        %v3620 = vpack.c.bf16 %v3552, %v3550
        %v3621 = vpack.c.bf16 %v3553, %v3551
        %v3622 = vpack.c.bf16 %v3556, %v3554
        %v3623 = vpack.c.bf16 %v3557, %v3555
        %v3624 = vpack.c.bf16 %v3560, %v3558
        %v3625 = vpack.c.bf16 %v3561, %v3559
        %3627 = vset.pattern.permute.xlu0 0
        %3628 = vperm.xlu0 %3627, %v632
        %v3629 = vpop.permute.xlu0 %3628
        %v3631 = vlaneseq
        %v3632 = vshrl.u32 %v3631, 7
        %v3633 = vsub.s32 0, %v3632
        %v3634 = vrot.slane %v3629, %v3633
        %v3637 = vunpack.c.l.s4 1966171168
        %v3638 = vunpack.c.0.s8 %v3637
        %v3639 = vlaneseq
        %v3640 = vshrl.u32 %v3639, 7
        %v3641 = vsub.s32 %v3638, %v3640
        %v3642 = vrot.slane %v631, %v3641
        %v3643 = vcombine.high %v3642, %v3642
        %v3645 = vunpack.c.l.s4 1966171168
        %v3646 = vunpack.c.0.s8 %v3645
        %v3647 = vlaneseq
        %v3648 = vshrl.u32 %v3647, 7
        %v3649 = vsub.s32 %v3646, %v3648
        %v3650 = vrot.slane %v3642, %v3649
        %v3652 = vunpack.c.l.s4 1966171168
        %v3653 = vunpack.c.0.s8 %v3652
        %v3654 = vlaneseq
        %v3655 = vshrl.u32 %v3654, 7
        %v3656 = vsub.s32 %v3653, %v3655
        %v3657 = vrot.slane %v3643, %v3656
        %v3658 = vcombine.high %v3650, %v3650
        %v3659 = vcombine.high %v3657, %v3657
        %3664 = vmatprep.subr.bf16.mxu0 %v3563
        %3665 = vmatpush1.bf16.msra.mxu0 %v3562
        %3666 = vmatprep.subr.bf16.mxu0 %v3565
        %3667 = vmatpush1.bf16.msra.mxu0 %v3564
        %3668 = vmatprep.subr.bf16.mxu0 %v3567
        %3669 = vmatpush1.bf16.msra.mxu0 %v3566
        %3670 = vmatprep.subr.bf16.mxu0 %v3569
        %3671 = vmatpush1.bf16.msra.mxu0 %v3568
        %3672 = vmatprep.subr.bf16.mxu0 %v3571
        %3673 = vmatpush1.bf16.msra.mxu0 %v3570
        %3674 = vmatprep.subr.bf16.mxu0 %v3573
        %3675 = vmatpush1.bf16.msra.mxu0 %v3572
        %3676 = vmatprep.subr.bf16.mxu0 %v3575
        %3677 = vmatpush1.bf16.msra.mxu0 %v3574
        %3678 = vmatprep.subr.bf16.mxu0 %v3577
        %3679 = vmatpush1.bf16.msra.mxu0 %v3576
        %3680 = vmatprep.subr.bf16.mxu0 %v3579
        %3681 = vmatpush1.bf16.msra.mxu0 %v3578
        %3682 = vmatprep.subr.bf16.mxu0 %v3581
        %3683 = vmatpush1.bf16.msra.mxu0 %v3580
        %3684 = vmatprep.subr.bf16.mxu0 %v3583
        %3685 = vmatpush1.bf16.msra.mxu0 %v3582
        %3686 = vmatprep.subr.bf16.mxu0 %v3585
        %3687 = vmatpush1.bf16.msra.mxu0 %v3584
        %3688 = vmatprep.subr.bf16.mxu0 %v3587
        %3689 = vmatpush1.bf16.msra.mxu0 %v3586
        %3690 = vmatprep.subr.bf16.mxu0 %v3589
        %3691 = vmatpush1.bf16.msra.mxu0 %v3588
        %3692 = vmatprep.subr.bf16.mxu0 %v3591
        %3693 = vmatpush1.bf16.msra.mxu0 %v3590
        %3694 = vmatprep.subr.bf16.mxu0 %v3593
        %3695 = vmatpush1.bf16.msra.mxu0 %v3592
        %3696 = vmatprep.mubr.bf16.mxu0 %v3657
        %3697 = vmatmul.mubr.bf16.gmra.mrb[0].mxu0 %v3650
        %v3698 = vpop.f32.mrb[0].mxu0
        %v3699 = vadd.f32 %v3634, %v3698
        %v3700 = vpop.f32.mrb[0].mxu0
        %v3701 = vadd.f32 %v3634, %v3700
        %v3702 = vpop.f32.mrb[0].mxu0
        %v3703 = vpop.f32.mrb[0].mxu0
        %3704 = vdwg.mxu0
        %3705 = vmatprep.subr.bf16.mxu0 %v3595
        %3706 = vmatpush1.bf16.msra.mxu0 %v3594
        %3707 = vmatprep.subr.bf16.mxu0 %v3597
        %3708 = vmatpush1.bf16.msra.mxu0 %v3596
        %3709 = vmatprep.subr.bf16.mxu0 %v3599
        %3710 = vmatpush1.bf16.msra.mxu0 %v3598
        %3711 = vmatprep.subr.bf16.mxu0 %v3601
        %3712 = vmatpush1.bf16.msra.mxu0 %v3600
        %3713 = vmatprep.subr.bf16.mxu0 %v3603
        %3714 = vmatpush1.bf16.msra.mxu0 %v3602
        %3715 = vmatprep.subr.bf16.mxu0 %v3605
        %3716 = vmatpush1.bf16.msra.mxu0 %v3604
        %3717 = vmatprep.subr.bf16.mxu0 %v3607
        %3718 = vmatpush1.bf16.msra.mxu0 %v3606
        %3719 = vmatprep.subr.bf16.mxu0 %v3609
        %3720 = vmatpush1.bf16.msra.mxu0 %v3608
        %3721 = vmatprep.subr.bf16.mxu0 %v3611
        %3722 = vmatpush1.bf16.msra.mxu0 %v3610
        %3723 = vmatprep.subr.bf16.mxu0 %v3613
        %3724 = vmatpush1.bf16.msra.mxu0 %v3612
        %3725 = vmatprep.subr.bf16.mxu0 %v3615
        %3726 = vmatpush1.bf16.msra.mxu0 %v3614
        %3727 = vmatprep.subr.bf16.mxu0 %v3617
        %3728 = vmatpush1.bf16.msra.mxu0 %v3616
        %3729 = vmatprep.subr.bf16.mxu0 %v3619
        %3730 = vmatpush1.bf16.msra.mxu0 %v3618
        %3731 = vmatprep.subr.bf16.mxu0 %v3621
        %3732 = vmatpush1.bf16.msra.mxu0 %v3620
        %3733 = vmatprep.subr.bf16.mxu0 %v3623
        %3734 = vmatpush1.bf16.msra.mxu0 %v3622
        %3735 = vmatprep.subr.bf16.mxu0 %v3625
        %3736 = vmatpush1.bf16.msra.mxu0 %v3624
        %3737 = vmatprep.mubr.bf16.mxu0 %v3659
        %3738 = vmatmul.mubr.bf16.gmra.mrb[0].mxu0 %v3658
        %v3739 = vpop.f32.mrb[0].mxu0
        %v3740 = vadd.f32 %v3699, %v3739
        %v3741 = vpop.f32.mrb[0].mxu0
        %v3742 = vadd.f32 %v3701, %v3741
        %v3743 = vpop.f32.mrb[0].mxu0
        %v3744 = vpop.f32.mrb[0].mxu0
        %3745 = vdwg.mxu0
        %v3748 = vcombine.low %v3740, %v3742
        %v3750 = vunpack.c.l.s4 1966171168
        %v3751 = vunpack.c.0.s8 %v3750
        %v3752 = vlaneseq
        %v3753 = vshrl.u32 %v3752, 7
        %v3754 = vsub.s32 %v3751, %v3753
        %v3755 = vrot.slane %v3748, %v3754
        %v3757 = vunpack.c.l.s4 1966171168
        %v3758 = vunpack.c.0.s8 %v3757
        %v3759 = vlaneseq
        %v3760 = vshrl.u32 %v3759, 7
        %v3761 = vsub.s32 %v3758, %v3760
        %v3762 = vrot.slane %v3755, %v3761
        %v3764 = vlaneseq
        %vm3765 = vcmp.ge.s32.totalorder %v3764, 0
        %vm3766 = vcmp.lt.s32.totalorder %v3764, 256
        %vm3767 = vmand %vm3765, %vm3766
        %3768 = vst.msk [vmem:[%s298] sm:$0x3] %vm3767, %v3762
        %s3769 = sand.u32 %s199, 1
        %s3770 = scalar_lea.sflag [#allocation4], %s3769
        %s3771 = sand.u32 %s199, 1
        %s3772 = smul.addr %s3771, 2
        %s3773 = scalar_lea.vmem [#allocation3], %s3772
        // Predicated region
        $region49: #{tpu_custom_call.1} parent=47 // pred_check
          %p3774 = pneg %p209
        $region50: #{tpu_custom_call.1} parent=47 // pred_check_branch
          %3776 = sbr.rel (%p3774) target = $region52
        $region51: #{tpu_custom_call.1} parent=47 // pred_region
          %s3777 = smul.u32 2, %s28
          %s3779 = ssub.s32 32, 32
          %3780 = vsyncadd %s3770, %s3779
          %s3781 = smul.addr %s27, 2
          %s3782 = sadd.s32 %s3777, %s3781
          %s3783 = smul.addr %s3782, 16
          %s3784 = scalar_lea.hbm %s7, %s3783
          %s3786 = sshll.u32 %s3773, 4
          %s3787 = int_to_ptr.vmem [resolvable:$true] %s3786
          %3789 = dma.vmem_to_hbm [thread:$0]  %s3787, 32, %s3784, %s3770
        $region52: #{tpu_custom_call.1} parent=47 // pred_fallthru
          _
      $region48: #{tpu_custom_call.1} parent=5 // pred_fallthru
        _
      %p3790 = scmp.le.s32.totalorder 2, %s18
      // Predicated region
      $region53: #{tpu_custom_call.1} parent=5 // pred_check
        %p3791 = pneg %p3790
      $region54: #{tpu_custom_call.1} parent=5 // pred_check_branch
        %3793 = sbr.rel (%p3791) target = $region56
      $region55: #{tpu_custom_call.1} parent=5 // pred_region
        %s3794 = ssub.s32 %s18, 2
        // Predicated region
        $region57: #{tpu_custom_call.1} parent=55 // pred_check
          %p3795 = pneg %p215
        $region58: #{tpu_custom_call.1} parent=55 // pred_check_branch
          %3797 = sbr.rel (%p3795) target = $region60
        $region59: #{tpu_custom_call.1} parent=55 // pred_region
          %s3798 = sand.u32 %s200, 1
          %s3799 = scalar_lea.sflag [#allocation4], %s3798
          %s3800 = sand.u32 %s200, 1
          %s3801 = smul.addr %s3800, 2
          %s3802 = scalar_lea.vmem [#allocation3], %s3801
          %3803 = dma.done %s3799, 32
        $region60: #{tpu_custom_call.1} parent=55 // pred_fallthru
          _
      $region56: #{tpu_custom_call.1} parent=5 // pred_fallthru
        _
    $region6: #{tpu_custom_call.1} parent=1 // loop_footer
      %s22 = sadd.s32 1, %s18
    $region7: #{tpu_custom_call.1} parent=1 // loop_footer_branch
      %17 = sbr.rel target = $region3
    $region8: #{tpu_custom_call.1} parent=1 // loop_exit
      _
    %3804 = vsyncpa [#allocation4], 1
    %s3805 = scalar_lea.sflag [#allocation4], 1
    %3806 = vsyncpa %s3805, 1

</llo_original>
